<compile_context>
chip_gen: v7x
topology: tpu7x:2x2x1
jax: 0.10.0
libtpu: 0.0.40
codegen_flags: <defaults>
</compile_context>

<pallas_src>
import jax
import jax.numpy as jnp
import numpy as np
from jax.experimental import pallas as pl
from jax.experimental.pallas import tpu as pltpu


def _choose_lane_tile(S, N, max_tile=8192):
    """Largest divisor of S that is a multiple of 128 and <= max_tile.

    Falls back to the full spatial extent (exempt from the (8,128) rule) when
    no such divisor exists.  If N == 1, cap the tile so the spatial grid axis
    has >= 2 steps (keeps v7x's second TensorCore busy)."""
    best = None
    if S % 128 == 0:
        hi = min(max_tile, S)
        hi -= hi % 128
        for t in range(hi, 127, -128):
            if S % t == 0:
                best = t
                break
    if best is None:
        return S                       # full-spatial block, grid axis = 1
    if N == 1 and best == S and S >= 256:
        half = (S // 2) // 128 * 128
        for t in range(min(max_tile, half), 127, -128):
            if S % t == 0:
                return t
    return best


def _ffn_kernel(x_ref, w1_ref, b1_ref, w2_ref, b2_ref, o_ref):
    # x_ref: (1, C, T) f32   w*_ref: (C, C) f32   b*_ref: (C, 1) f32
    x = x_ref[0]                                             # (C, T)
    h = jnp.dot(w1_ref[...], x,
                preferred_element_type=jnp.float32,
                precision=jax.lax.Precision.HIGHEST)
    h = jnp.tanh(h + b1_ref[...])                            # f32 bias + tanh (EUP)
    y = jnp.dot(w2_ref[...], h,
                preferred_element_type=jnp.float32,
                precision=jax.lax.Precision.HIGHEST)
    o_ref[0] = y + b2_ref[...]                               # lane-dense store


def positionwise_feed_forward(x, w1, b1, w2, b2, *, max_lane_tile=8192):
    """x: (N, C, D, H, W) f32 (PyTorch NCDHW).  w*: (C, C), b*: (C,).

    Returns (N, C, D, H, W) f32 equal to  w2 @ tanh(w1 @ x + b1) + b2 applied
    pointwise over (D, H, W), i.e. Conv3d(k=1) -> tanh -> Conv3d(k=1).
    """
    N, C, D, H, W = x.shape
    S = D * H * W
    x2 = x.reshape(N, C, S)                                  # free reshape, NCDHW kept

    T = _choose_lane_tile(S, N, max_lane_tile)               # no pad, no slice
    grid = (N, S // T)

    b1c = b1.reshape(C, 1).astype(jnp.float32)
    b2c = b2.reshape(C, 1).astype(jnp.float32)

    itemsize = 4
    cost = pl.CostEstimate(
        flops=2 * 2 * C * C * N * S,                         # two (C,C)@(C,S) matmuls
        transcendentals=C * N * S,                           # tanh
        bytes_accessed=(2 * N * C * S + 2 * C * C + 2 * C) * itemsize,
    )

    out = pl.pallas_call(
        _ffn_kernel,
        out_shape=jax.ShapeDtypeStruct((N, C, S), jnp.float32),
        grid_spec=pltpu.PrefetchScalarGridSpec(
            num_scalar_prefetch=0,
            grid=grid,
            in_specs=[
                pl.BlockSpec((1, C, T), lambda n, s: (n, 0, s)),   # activation tile
                pl.BlockSpec((C, C), lambda n, s: (0, 0)),          # W1 resident
                pl.BlockSpec((C, 1), lambda n, s: (0, 0)),          # b1 resident
                pl.BlockSpec((C, C), lambda n, s: (0, 0)),          # W2 resident
                pl.BlockSpec((C, 1), lambda n, s: (0, 0)),          # b2 resident
            ],
            out_specs=pl.BlockSpec((1, C, T), lambda n, s: (n, 0, s)),
        ),
        compiler_params=pltpu.CompilerParams(
            dimension_semantics=("parallel", "parallel")),
        cost_estimate=cost,
    )(x2, w1, b1c, w2, b2c)

    return out.reshape(N, C, D, H, W)


if __name__ == "__main__":
    # Small shapes consistent with the module: batch=2, channel=16, D=4, H=W=16.
    N, C, D, H, W = 2, 16, 4, 16, 16
    key = jax.random.PRNGKey(0)
    k1, k2, k3, k4, k5 = jax.random.split(key, 5)
    x = jax.random.normal(k1, (N, C, D, H, W), jnp.float32)
    # PyTorch Conv3d(C, C, kernel_size=1) weight is (Cout, Cin, 1, 1, 1);
    # its matmul form is simply (Cout, Cin).
    w1 = jax.random.normal(k2, (C, C), jnp.float32) * (0.5 / np.sqrt(C))
    b1 = jax.random.normal(k3, (C,), jnp.float32) * 0.01
    w2 = jax.random.normal(k4, (C, C), jnp.float32) * (0.5 / np.sqrt(C))
    b2 = jax.random.normal(k5, (C,), jnp.float32) * 0.01

    fwd = jax.jit(positionwise_feed_forward)
    out = jax.block_until_ready(fwd(x, w1, b1, w2, b2))

    # Pure-JAX f32 reference (highest precision einsums).
    S = D * H * W
    xf = x.reshape(N, C, S)
    h_ref = jnp.tanh(jnp.einsum('oc,ncs->nos', w1, xf,
                                precision=jax.lax.Precision.HIGHEST)
                     + b1[:, None])
    ref = (jnp.einsum('oc,ncs->nos', w2, h_ref,
                      precision=jax.lax.Precision.HIGHEST)
           + b2[:, None]).reshape(N, C, D, H, W)

    assert out.shape == (N, C, D, H, W)
    assert bool(jnp.all(jnp.isfinite(out)))
    assert bool(jnp.allclose(out, ref, atol=1e-3, rtol=1e-3)), \
        float(jnp.max(jnp.abs(out - ref)))
    print("KERNEL_OK")
</pallas_src>

<mosaic_0001>
module attributes {stable_mosaic.version = 11 : i64} {
  func.func @_ffn_kernel(%arg0: i32, %arg1: i32, %arg2: memref<1x16x1024xf32, #tpu.memory_space<vmem>>, %arg3: memref<16x16xf32, #tpu.memory_space<vmem>>, %arg4: memref<16x1xf32, #tpu.memory_space<vmem>>, %arg5: memref<16x16xf32, #tpu.memory_space<vmem>>, %arg6: memref<16x1xf32, #tpu.memory_space<vmem>>, %arg7: memref<1x16x1024xf32, #tpu.memory_space<vmem>>) attributes {dimension_semantics = [#tpu.dimension_semantics<parallel>, #tpu.dimension_semantics<parallel>], iteration_bounds = array<i64: 2, 1>, scalar_prefetch = 0 : i64, scratch_operands = 0 : i64, tpu.core_type = #tpu.core_type<tc>, window_params = [{transform_indices = @transform_0, window_bounds = array<i64: 1, 16, 1024>}, {pipeline_mode = #tpu.pipeline_mode<synchronous>, transform_indices = @transform_1, window_bounds = array<i64: 16, 16>}, {pipeline_mode = #tpu.pipeline_mode<synchronous>, transform_indices = @transform_2, window_bounds = array<i64: 16, 1>}, {pipeline_mode = #tpu.pipeline_mode<synchronous>, transform_indices = @transform_3, window_bounds = array<i64: 16, 16>}, {pipeline_mode = #tpu.pipeline_mode<synchronous>, transform_indices = @transform_4, window_bounds = array<i64: 16, 1>}, {transform_indices = @transform_5, window_bounds = array<i64: 1, 16, 1024>}]} {
    %c0 = arith.constant 0 : index
    %c0_0 = arith.constant 0 : index
    %c0_1 = arith.constant 0 : index
    %0 = vector.load %arg2[%c0, %c0_0, %c0_1] : memref<1x16x1024xf32, #tpu.memory_space<vmem>>, vector<1x16x1024xf32>
    %1 = vector.shape_cast %0 : vector<1x16x1024xf32> to vector<16x1024xf32>
    %c0_2 = arith.constant 0 : index
    %c0_3 = arith.constant 0 : index
    %2 = vector.load %arg3[%c0_2, %c0_3] : memref<16x16xf32, #tpu.memory_space<vmem>>, vector<16x16xf32>
    %cst = arith.constant dense<0.000000e+00> : vector<16x1024xf32>
    %3 = tpu.matmul %2, %1, %cst {dimension_numbers = #tpu.dot_dimension_numbers<[1], [0], [0], [1], [0, 0, 1, 1], [], []>, precision = #tpu.contract_precision<fp32>} : vector<16x16xf32>, vector<16x1024xf32>, vector<16x1024xf32> -> vector<16x1024xf32>
    %c0_4 = arith.constant 0 : index
    %c0_5 = arith.constant 0 : index
    %4 = vector.load %arg4[%c0_4, %c0_5] : memref<16x1xf32, #tpu.memory_space<vmem>>, vector<16x1xf32>
    %5 = vector.broadcast %4 : vector<16x1xf32> to vector<16x1024xf32>
    %6 = arith.addf %3, %5 : vector<16x1024xf32>
    %7 = math.tanh %6 : vector<16x1024xf32>
    %c0_6 = arith.constant 0 : index
    %c0_7 = arith.constant 0 : index
    %8 = vector.load %arg5[%c0_6, %c0_7] : memref<16x16xf32, #tpu.memory_space<vmem>>, vector<16x16xf32>
    %cst_8 = arith.constant dense<0.000000e+00> : vector<16x1024xf32>
    %9 = tpu.matmul %8, %7, %cst_8 {dimension_numbers = #tpu.dot_dimension_numbers<[1], [0], [0], [1], [0, 0, 1, 1], [], []>, precision = #tpu.contract_precision<fp32>} : vector<16x16xf32>, vector<16x1024xf32>, vector<16x1024xf32> -> vector<16x1024xf32>
    %c0_9 = arith.constant 0 : index
    %c0_10 = arith.constant 0 : index
    %10 = vector.load %arg6[%c0_9, %c0_10] : memref<16x1xf32, #tpu.memory_space<vmem>>, vector<16x1xf32>
    %11 = vector.broadcast %10 : vector<16x1xf32> to vector<16x1024xf32>
    %12 = arith.addf %9, %11 : vector<16x1024xf32>
    %c0_11 = arith.constant 0 : index
    %c0_12 = arith.constant 0 : index
    %c0_13 = arith.constant 0 : index
    %13 = vector.load %arg7[%c0_11, %c0_12, %c0_13] : memref<1x16x1024xf32, #tpu.memory_space<vmem>>, vector<1x16x1024xf32>
    %14 = vector.shape_cast %13 : vector<1x16x1024xf32> to vector<16x1024xf32>
    %15 = vector.shape_cast %12 : vector<16x1024xf32> to vector<1x16x1024xf32>
    tpu.vector_store %arg7[%c0_11, %c0_12, %c0_13], %15 {strides = array<i32>} : memref<1x16x1024xf32, #tpu.memory_space<vmem>>, vector<1x16x1024xf32>,
    return
  }
  func.func @transform_0(%arg0: i32, %arg1: i32) -> (i32, i32, i32) {
    %c0_i32 = arith.constant 0 : i32
    %c0_i32_0 = arith.constant 0 : i32
    return %arg0, %c0_i32, %arg1 : i32, i32, i32
  }
  func.func @transform_1(%arg0: i32, %arg1: i32) -> (i32, i32) {
    %c0_i32 = arith.constant 0 : i32
    %c0_i32_0 = arith.constant 0 : i32
    %c0_i32_1 = arith.constant 0 : i32
    return %c0_i32, %c0_i32_0 : i32, i32
  }
  func.func @transform_2(%arg0: i32, %arg1: i32) -> (i32, i32) {
    %c0_i32 = arith.constant 0 : i32
    %c0_i32_0 = arith.constant 0 : i32
    %c0_i32_1 = arith.constant 0 : i32
    return %c0_i32, %c0_i32_0 : i32, i32
  }
  func.func @transform_3(%arg0: i32, %arg1: i32) -> (i32, i32) {
    %c0_i32 = arith.constant 0 : i32
    %c0_i32_0 = arith.constant 0 : i32
    %c0_i32_1 = arith.constant 0 : i32
    return %c0_i32, %c0_i32_0 : i32, i32
  }
  func.func @transform_4(%arg0: i32, %arg1: i32) -> (i32, i32) {
    %c0_i32 = arith.constant 0 : i32
    %c0_i32_0 = arith.constant 0 : i32
    %c0_i32_1 = arith.constant 0 : i32
    return %c0_i32, %c0_i32_0 : i32, i32
  }
  func.func @transform_5(%arg0: i32, %arg1: i32) -> (i32, i32, i32) {
    %c0_i32 = arith.constant 0 : i32
    %c0_i32_0 = arith.constant 0 : i32
    return %arg0, %c0_i32, %arg1 : i32, i32, i32
  }
}

</mosaic_0001>

<llo_original>
// kernel: positionwise_feed_forward.1
$region0: #{positionwise_feed_forward.1}
  #allocation0 [shape = 'u32[]', space=smem, size = 0x4, offset = 0x4, fixed_abs, tag = 'smem constant byte address 0x4 - core index']
  #allocation1 [shape = 'u32[144,128]{1,0:T(1,128)}', space=vmem, size = 0x12000, scoped, tag = 'internal scratch']
  %s0 = inlined_call_operand.vmem [shape: f32[2,16,1024], index: 0, kind: input, shape index: {}]
  %s1 = inlined_call_operand.vmem [shape: f32[16,16], index: 1, kind: input, shape index: {}]
  %s2 = inlined_call_operand.vmem [shape: f32[16,1], index: 2, kind: input, shape index: {}]
  %s3 = inlined_call_operand.vmem [shape: f32[16,16], index: 3, kind: input, shape index: {}]
  %s4 = inlined_call_operand.vmem [shape: f32[16,1], index: 4, kind: input, shape index: {}]
  %s5 = inlined_call_operand.vmem [shape: f32[2,16,1024], index: 5, kind: output, shape index: {}]
  %s6 = sld [smem:[#allocation0]]
  $region53: #{positionwise_feed_forward.1} parent=0
    _
  %s8 = ssub.s32 1, %s6
  %s9 = scalar_select 0, %s8, %s6
  loop: start=0, step=1, limit=4
  $region2: #{positionwise_feed_forward.1} parent=0 // loop_pre_header
    _
  $region3: #{positionwise_feed_forward.1} parent=0 // loop_header
    %s11 = sphi 0, %s15
    %p12 = scmp.ge.s32.totalorder %s11, 4
    %s18 = sphi 0, %s30
    %s19 = sphi 0, %s26
    %s20 = sphi 0, %s18
    %s21 = sphi 0, %s19
    %s22 = sphi 0, %s20
    %s23 = sphi 0, %s21
    %s35 = sphi 0, %s37
    %s38 = sphi 0, %s35
    %s39 = sphi 0, %s38
    %s55 = sphi 0, %s39
    %s59 = sphi 0, %s59
    %s61 = sphi 0, %s59
    %s62 = sphi 0, %s61
    %s76 = sphi 0, %s62
    %s80 = sphi 0, %s80
    %s82 = sphi 0, %s80
    %s83 = sphi 0, %s82
    %s97 = sphi 0, %s83
    %s101 = sphi 0, %s101
    %s103 = sphi 0, %s101
    %s104 = sphi 0, %s103
    %s118 = sphi 0, %s104
    %s122 = sphi 0, %s122
    %s124 = sphi 0, %s122
    %s125 = sphi 0, %s124
    %s139 = sphi 0, %s125
    %s147 = sphi 0, %s149
    %s150 = sphi 0, %s147
    %s151 = sphi 0, %s150
    %s167 = sphi 0, %s151
  $region4: #{positionwise_feed_forward.1} parent=0 // loop_header_branch
    %14 = sbr.rel (%p12) target = $region8
  $region5: #{positionwise_feed_forward.1} parent=0 // loop_body
    %s16 = ssub.s32 %s11, 1
    %s17 = ssub.s32 %s11, 2
    %s24 = sadd.s32 1, %s19
    %p25 = scmp.ge.s32.totalorder %s24, 1
    %s26 = scalar_select %p25, 0, %s24
    %s27 = sadd.s32 1, %s18
    %s28 = scalar_select %p25, %s27, %s18
    %p29 = scmp.ge.s32.totalorder %s28, 2
    %s30 = scalar_select %p29, 0, %s28
    %s31 = ssub.s32 %s18, %s30
    %s32 = ssub.s32 %s19, %s26
    %s33 = sor.u32 %s31, %s32
    %p34 = scmp.eq.s32.totalorder %s33, 0
    %s36 = sadd.s32 %s35, 1
    %s37 = scalar_select %p34, %s35, %s36
    %p40 = pneg %p34
    %p41 = scmp.eq.s32.totalorder %s11, 1
    %p42 = por %p40, %p41
    %p43 = scmp.ne.s32.totalorder %s35, %s38
    %p44 = scmp.eq.s32.totalorder %s11, 0
    %p45 = por %p43, %p44
    %p46 = scmp.ne.s32.totalorder %s35, %s38
    %p47 = scmp.eq.s32.totalorder %s16, 1
    %p48 = por %p46, %p47
    %p49 = scmp.ne.s32.totalorder %s38, %s39
    %p50 = scmp.eq.s32.totalorder %s16, 0
    %p51 = por %p49, %p50
    %p52 = scmp.ne.s32.totalorder %s38, %s39
    %p53 = scmp.eq.s32.totalorder %s17, 1
    %p54 = por %p52, %p53
    %p56 = scmp.ne.s32.totalorder %s39, %s55
    %p57 = scmp.eq.s32.totalorder %s17, 0
    %p58 = por %p56, %p57
    %s60 = sadd.s32 %s59, 1
    %p63 = scmp.eq.s32.totalorder %s11, 1
    %p64 = scmp.ne.s32.totalorder %s59, %s61
    %p65 = scmp.eq.s32.totalorder %s11, 0
    %p66 = por %p64, %p65
    %p67 = scmp.ne.s32.totalorder %s59, %s61
    %p68 = scmp.eq.s32.totalorder %s16, 1
    %p69 = por %p67, %p68
    %p70 = scmp.ne.s32.totalorder %s61, %s62
    %p71 = scmp.eq.s32.totalorder %s16, 0
    %p72 = por %p70, %p71
    %p73 = scmp.ne.s32.totalorder %s61, %s62
    %p74 = scmp.eq.s32.totalorder %s17, 1
    %p75 = por %p73, %p74
    %p77 = scmp.ne.s32.totalorder %s62, %s76
    %p78 = scmp.eq.s32.totalorder %s17, 0
    %p79 = por %p77, %p78
    %s81 = sadd.s32 %s80, 1
    %p84 = scmp.eq.s32.totalorder %s11, 1
    %p85 = scmp.ne.s32.totalorder %s80, %s82
    %p86 = scmp.eq.s32.totalorder %s11, 0
    %p87 = por %p85, %p86
    %p88 = scmp.ne.s32.totalorder %s80, %s82
    %p89 = scmp.eq.s32.totalorder %s16, 1
    %p90 = por %p88, %p89
    %p91 = scmp.ne.s32.totalorder %s82, %s83
    %p92 = scmp.eq.s32.totalorder %s16, 0
    %p93 = por %p91, %p92
    %p94 = scmp.ne.s32.totalorder %s82, %s83
    %p95 = scmp.eq.s32.totalorder %s17, 1
    %p96 = por %p94, %p95
    %p98 = scmp.ne.s32.totalorder %s83, %s97
    %p99 = scmp.eq.s32.totalorder %s17, 0
    %p100 = por %p98, %p99
    %s102 = sadd.s32 %s101, 1
    %p105 = scmp.eq.s32.totalorder %s11, 1
    %p106 = scmp.ne.s32.totalorder %s101, %s103
    %p107 = scmp.eq.s32.totalorder %s11, 0
    %p108 = por %p106, %p107
    %p109 = scmp.ne.s32.totalorder %s101, %s103
    %p110 = scmp.eq.s32.totalorder %s16, 1
    %p111 = por %p109, %p110
    %p112 = scmp.ne.s32.totalorder %s103, %s104
    %p113 = scmp.eq.s32.totalorder %s16, 0
    %p114 = por %p112, %p113
    %p115 = scmp.ne.s32.totalorder %s103, %s104
    %p116 = scmp.eq.s32.totalorder %s17, 1
    %p117 = por %p115, %p116
    %p119 = scmp.ne.s32.totalorder %s104, %s118
    %p120 = scmp.eq.s32.totalorder %s17, 0
    %p121 = por %p119, %p120
    %s123 = sadd.s32 %s122, 1
    %p126 = scmp.eq.s32.totalorder %s11, 1
    %p127 = scmp.ne.s32.totalorder %s122, %s124
    %p128 = scmp.eq.s32.totalorder %s11, 0
    %p129 = por %p127, %p128
    %p130 = scmp.ne.s32.totalorder %s122, %s124
    %p131 = scmp.eq.s32.totalorder %s16, 1
    %p132 = por %p130, %p131
    %p133 = scmp.ne.s32.totalorder %s124, %s125
    %p134 = scmp.eq.s32.totalorder %s16, 0
    %p135 = por %p133, %p134
    %p136 = scmp.ne.s32.totalorder %s124, %s125
    %p137 = scmp.eq.s32.totalorder %s17, 1
    %p138 = por %p136, %p137
    %p140 = scmp.ne.s32.totalorder %s125, %s139
    %p141 = scmp.eq.s32.totalorder %s17, 0
    %p142 = por %p140, %p141
    %s143 = ssub.s32 %s18, %s30
    %s144 = ssub.s32 %s19, %s26
    %s145 = sor.u32 %s143, %s144
    %p146 = scmp.eq.s32.totalorder %s145, 0
    %s148 = sadd.s32 %s147, 1
    %s149 = scalar_select %p146, %s147, %s148
    %p152 = pneg %p146
    %p153 = scmp.eq.s32.totalorder %s11, 1
    %p154 = por %p152, %p153
    %p155 = scmp.ne.s32.totalorder %s147, %s150
    %p156 = scmp.eq.s32.totalorder %s11, 0
    %p157 = por %p155, %p156
    %p158 = scmp.ne.s32.totalorder %s147, %s150
    %p159 = scmp.eq.s32.totalorder %s16, 1
    %p160 = por %p158, %p159
    %p161 = scmp.ne.s32.totalorder %s150, %s151
    %p162 = scmp.eq.s32.totalorder %s16, 0
    %p163 = por %p161, %p162
    %p164 = scmp.ne.s32.totalorder %s150, %s151
    %p165 = scmp.eq.s32.totalorder %s17, 1
    %p166 = por %p164, %p165
    %p168 = scmp.ne.s32.totalorder %s151, %s167
    %p169 = scmp.eq.s32.totalorder %s17, 0
    %p170 = por %p168, %p169
    %p171 = scmp.le.s32.totalorder 1, %s11
    %p172 = scmp.lt.s32.totalorder %s11, 3
    %p173 = pnand %p171, %p172
    %p174 = pneg %p173
    // Predicated region
    $region9: #{positionwise_feed_forward.1} parent=5 // pred_check
      _
    $region10: #{positionwise_feed_forward.1} parent=5 // pred_check_branch
      %176 = sbr.rel (%p173) target = $region12
    $region11: #{positionwise_feed_forward.1} parent=5 // pred_region
      %s177 = ssub.s32 %s11, 1
      // Predicated region
      $region13: #{positionwise_feed_forward.1} parent=11 // pred_check
        %p178 = pneg %p72
      $region14: #{positionwise_feed_forward.1} parent=11 // pred_check_branch
        %180 = sbr.rel (%p178) target = $region16
      $region15: #{positionwise_feed_forward.1} parent=11 // pred_region
        _
      $region16: #{positionwise_feed_forward.1} parent=11 // pred_fallthru
        _
      // Predicated region
      $region17: #{positionwise_feed_forward.1} parent=11 // pred_check
        %p181 = pneg %p93
      $region18: #{positionwise_feed_forward.1} parent=11 // pred_check_branch
        %183 = sbr.rel (%p181) target = $region20
      $region19: #{positionwise_feed_forward.1} parent=11 // pred_region
        _
      $region20: #{positionwise_feed_forward.1} parent=11 // pred_fallthru
        _
      // Predicated region
      $region21: #{positionwise_feed_forward.1} parent=11 // pred_check
        %p184 = pneg %p114
      $region22: #{positionwise_feed_forward.1} parent=11 // pred_check_branch
        %186 = sbr.rel (%p184) target = $region24
      $region23: #{positionwise_feed_forward.1} parent=11 // pred_region
        _
      $region24: #{positionwise_feed_forward.1} parent=11 // pred_fallthru
        _
      // Predicated region
      $region25: #{positionwise_feed_forward.1} parent=11 // pred_check
        %p187 = pneg %p135
      $region26: #{positionwise_feed_forward.1} parent=11 // pred_check_branch
        %189 = sbr.rel (%p187) target = $region28
      $region27: #{positionwise_feed_forward.1} parent=11 // pred_region
        _
      $region28: #{positionwise_feed_forward.1} parent=11 // pred_fallthru
        _
    $region12: #{positionwise_feed_forward.1} parent=5 // pred_fallthru
      _
    %p190 = scmp.lt.s32.totalorder %s11, 2
    // Predicated region
    $region29: #{positionwise_feed_forward.1} parent=5 // pred_check
      %p191 = pneg %p190
    $region30: #{positionwise_feed_forward.1} parent=5 // pred_check_branch
      %193 = sbr.rel (%p191) target = $region32
    $region31: #{positionwise_feed_forward.1} parent=5 // pred_region
      // Predicated region
      $region33: #{positionwise_feed_forward.1} parent=31 // pred_check
        %p194 = pneg %p45
      $region34: #{positionwise_feed_forward.1} parent=31 // pred_check_branch
        %196 = sbr.rel (%p194) target = $region36
      $region35: #{positionwise_feed_forward.1} parent=31 // pred_region
        %s197 = smul.u32 8, %s19
        %p198 = scmp.lt.s32.totalorder %s18, 1
        %s199 = scalar_select %p198, %s18, 1
        %p200 = scmp.lt.s32.totalorder %s197, 7
        %s201 = scalar_select %p200, %s197, 7
        %s202 = smul.addr %s199, 16
        %s203 = sadd.s32 %s201, %s202
        %s204 = smul.addr %s203, 8
        %s205 = scalar_lea.vmem %s0, %s204
        %s206 = smul.u32 8, %s19
      $region36: #{positionwise_feed_forward.1} parent=31 // pred_fallthru
        _
    $region32: #{positionwise_feed_forward.1} parent=5 // pred_fallthru
      _
    %p207 = scmp.le.s32.totalorder 1, %s11
    %p208 = scmp.lt.s32.totalorder %s11, 3
    %p209 = pnand %p207, %p208
    %p210 = pneg %p209
    // Predicated region
    $region37: #{positionwise_feed_forward.1} parent=5 // pred_check
      _
    $region38: #{positionwise_feed_forward.1} parent=5 // pred_check_branch
      %212 = sbr.rel (%p209) target = $region40
    $region39: #{positionwise_feed_forward.1} parent=5 // pred_region
      %s213 = ssub.s32 %s11, 1
      %s214 = smul.u32 8, %s21
      %p215 = scmp.lt.s32.totalorder %s20, 1
      %s216 = scalar_select %p215, %s20, 1
      %p217 = scmp.lt.s32.totalorder %s214, 7
      %s218 = scalar_select %p217, %s214, 7
      %s219 = smul.addr %s216, 16
      %s220 = sadd.s32 %s218, %s219
      %s221 = smul.addr %s220, 8
      %s222 = scalar_lea.vmem %s0, %s221
      %p223 = pneg %p51
      %p224 = pneg %p48
      %p225 = pneg %p72
      %p226 = pneg %p69
      %p227 = pneg %p93
      %p228 = pneg %p90
      %p229 = pneg %p114
      %p230 = pneg %p111
      %p231 = pneg %p135
      %p232 = pneg %p132
      %p233 = pneg %p163
      %p234 = pneg %p160
      %s235 = smul.u32 8, %s21
      %p236 = scmp.lt.s32.totalorder %s20, 1
      %s237 = scalar_select %p236, %s20, 1
      %p238 = scmp.lt.s32.totalorder %s235, 7
      %s239 = scalar_select %p238, %s235, 7
      %s240 = smul.addr %s237, 16
      %s241 = sadd.s32 %s239, %s240
      %s242 = smul.addr %s241, 8
      %s243 = scalar_lea.vmem %s5, %s242
      %s244 = smul.u32 8, %s21
      %p245 = scmp.lt.s32.totalorder %s20, 1
      %s246 = scalar_select %p245, %s20, 1
      %p247 = scmp.lt.s32.totalorder %s244, 7
      %s248 = scalar_select %p247, %s244, 7
      %s249 = smul.addr %s246, 16
      %s250 = sadd.s32 %s248, %s249
      %s251 = smul.addr %s250, 8
      %s252 = scalar_lea.vmem %s0, %s251
      %s253 = smul.u32 8, %s21
      %s254 = smul.u32 8, %s21
      %p255 = scmp.lt.s32.totalorder %s20, 1
      %s256 = scalar_select %p255, %s20, 1
      %p257 = scmp.lt.s32.totalorder %s254, 7
      %s258 = scalar_select %p257, %s254, 7
      %s259 = smul.addr %s256, 16
      %s260 = sadd.s32 %s258, %s259
      %s261 = smul.addr %s260, 8
      %s262 = scalar_lea.vmem %s5, %s261
      %s263 = smul.u32 8, %s21
      %v264 = vld [vmem:[%s252] sm:$0xff]
      %v265 = vld [vmem:[%s252 + $0x8] sm:$0xff]
      %v266 = vld [vmem:[%s252 + $0x10] sm:$0xff]
      %v267 = vld [vmem:[%s252 + $0x18] sm:$0xff]
      %v268 = vld [vmem:[%s252 + $0x20] sm:$0xff]
      %v269 = vld [vmem:[%s252 + $0x28] sm:$0xff]
      %v270 = vld [vmem:[%s252 + $0x30] sm:$0xff]
      %v271 = vld [vmem:[%s252 + $0x38] sm:$0xff]
      %v272 = vld [vmem:[%s252 + $0x40] sm:$0xff]
      %v273 = vld [vmem:[%s252 + $0x48] sm:$0xff]
      %v274 = vld [vmem:[%s252 + $0x50] sm:$0xff]
      %v275 = vld [vmem:[%s252 + $0x58] sm:$0xff]
      %v276 = vld [vmem:[%s252 + $0x60] sm:$0xff]
      %v277 = vld [vmem:[%s252 + $0x68] sm:$0xff]
      %v278 = vld [vmem:[%s252 + $0x70] sm:$0xff]
      %v279 = vld [vmem:[%s252 + $0x78] sm:$0xff]
      %v280 = vld [vmem:[%s1] sm:$0xff]
      %v281 = vld [vmem:[%s1 + $0x8] sm:$0xff]
      %v282 = vld [vmem:[%s2] sm:$0xff]
      %v283 = vld [vmem:[%s2 + $0x8] sm:$0xff]
      %285 = vset.pattern.permute.xlu0 0
      %286 = vperm.xlu0 %285, %v282
      %v287 = vpop.permute.xlu0 %286
      %290 = vset.pattern.permute.xlu0 0
      %291 = vperm.xlu0 %290, %v283
      %v292 = vpop.permute.xlu0 %291
      %vm294 = vcmask 130048
      %v296 = vsel %vm294, %v280, 0
      %v299 = vsel %vm294, %v281, 0
      %v301 = vand.u32 %v265, 4294901760
      %302 = vmatprep.subr.mxu0 %v301
      %v303 = vand.u32 %v264, 4294901760
      %304 = vmatpush1.msra.mxu0 %v303
      %v305 = vand.u32 %v273, 4294901760
      %306 = vmatprep.subr.mxu0 %v305
      %v307 = vand.u32 %v272, 4294901760
      %308 = vmatpush1.msra.mxu0 %v307
      %309 = vmatprep.subr.mxu0 0.0
      %310 = vmatpush1.msra.mxu0 0.0
      %311 = vmatprep.subr.mxu0 0.0
      %312 = vmatpush1.msra.mxu0 0.0
      %313 = vmatprep.subr.mxu0 0.0
      %314 = vmatpush1.msra.mxu0 0.0
      %315 = vmatprep.subr.mxu0 0.0
      %316 = vmatpush1.msra.mxu0 0.0
      %317 = vmatprep.subr.mxu0 0.0
      %318 = vmatpush1.msra.mxu0 0.0
      %319 = vmatprep.subr.mxu0 0.0
      %320 = vmatpush1.msra.mxu0 0.0
      %321 = vmatprep.subr.mxu0 0.0
      %322 = vmatpush1.msra.mxu0 0.0
      %323 = vmatprep.subr.mxu0 0.0
      %324 = vmatpush1.msra.mxu0 0.0
      %325 = vmatprep.subr.mxu0 0.0
      %326 = vmatpush1.msra.mxu0 0.0
      %327 = vmatprep.subr.mxu0 0.0
      %328 = vmatpush1.msra.mxu0 0.0
      %329 = vmatprep.subr.mxu0 0.0
      %330 = vmatpush1.msra.mxu0 0.0
      %331 = vmatprep.subr.mxu0 0.0
      %332 = vmatpush1.msra.mxu0 0.0
      %333 = vmatprep.subr.mxu0 0.0
      %334 = vmatpush1.msra.mxu0 0.0
      %335 = vmatprep.subr.mxu0 0.0
      %336 = vmatpush1.msra.mxu0 0.0
      %337 = vmatprep.subr.mxu0 0.0
      %338 = vmatpush1.msra.mxu0 0.0
      %339 = vmatprep.subr.mxu0 0.0
      %340 = vmatpush1.msra.mxu0 0.0
      %341 = vmatprep.subr.mxu0 0.0
      %342 = vmatpush1.msra.mxu0 0.0
      %343 = vmatprep.subr.mxu0 0.0
      %344 = vmatpush1.msra.mxu0 0.0
      %345 = vmatprep.subr.mxu0 0.0
      %346 = vmatpush1.msra.mxu0 0.0
      %347 = vmatprep.subr.mxu0 0.0
      %348 = vmatpush1.msra.mxu0 0.0
      %349 = vmatprep.subr.mxu0 0.0
      %350 = vmatpush1.msra.mxu0 0.0
      %351 = vmatprep.subr.mxu0 0.0
      %352 = vmatpush1.msra.mxu0 0.0
      %353 = vmatprep.subr.mxu0 0.0
      %354 = vmatpush1.msra.mxu0 0.0
      %355 = vmatprep.subr.mxu0 0.0
      %356 = vmatpush1.msra.mxu0 0.0
      %357 = vmatprep.subr.mxu0 0.0
      %358 = vmatpush1.msra.mxu0 0.0
      %359 = vmatprep.subr.mxu0 0.0
      %360 = vmatpush1.msra.mxu0 0.0
      %361 = vmatprep.subr.mxu0 0.0
      %362 = vmatpush1.msra.mxu0 0.0
      %363 = vmatprep.subr.mxu0 0.0
      %364 = vmatpush1.msra.mxu0 0.0
      %365 = vmatprep.subr.mxu0 0.0
      %366 = vmatpush1.msra.mxu0 0.0
      %367 = vmatprep.subr.mxu0 0.0
      %368 = vmatpush1.msra.mxu0 0.0
      %369 = vmatprep.mubr.f32.mxu0 0.0
      %v370 = vand.u32 %v296, 4294901760
      %v371 = vsub.f32 %v296, %v370
      %v372 = vand.u32 %v371, 4294901760
      %v373 = vsub.f32 %v371, %v372
      %v374 = vand.u32 %v373, 4294901760
      %375 = vmatmul.mubr.f32.gmra.mrb[0].mxu0 %v374
      %v376 = vpop.f32.mrb[0].mxu0
      %v377 = vadd.f32 %v287, %v376
      %v378 = vpop.f32.mrb[0].mxu0
      %v379 = vadd.f32 %v287, %v378
      %380 = vmatprep.mubr.f32.mxu0 0.0
      %v381 = vand.u32 %v299, 4294901760
      %v382 = vsub.f32 %v299, %v381
      %v383 = vand.u32 %v382, 4294901760
      %v384 = vsub.f32 %v382, %v383
      %v385 = vand.u32 %v384, 4294901760
      %386 = vmatmul.mubr.f32.gmra.mrb[0].mxu0 %v385
      %v387 = vpop.f32.mrb[0].mxu0
      %v388 = vadd.f32 %v292, %v387
      %v389 = vpop.f32.mrb[0].mxu0
      %v390 = vadd.f32 %v292, %v389
      %391 = vdwg.mxu0
      %v392 = vand.u32 %v265, 4294901760
      %v393 = vsub.f32 %v265, %v392
      %v394 = vand.u32 %v393, 4294901760
      %v395 = vsub.f32 %v393, %v394
      %v396 = vand.u32 %v395, 4294901760
      %397 = vmatprep.subr.mxu0 %v396
      %v398 = vand.u32 %v264, 4294901760
      %v399 = vsub.f32 %v264, %v398
      %v400 = vand.u32 %v399, 4294901760
      %v401 = vsub.f32 %v399, %v400
      %v402 = vand.u32 %v401, 4294901760
      %403 = vmatpush1.msra.mxu0 %v402
      %v404 = vand.u32 %v273, 4294901760
      %v405 = vsub.f32 %v273, %v404
      %v406 = vand.u32 %v405, 4294901760
      %v407 = vsub.f32 %v405, %v406
      %v408 = vand.u32 %v407, 4294901760
      %409 = vmatprep.subr.mxu0 %v408
      %v410 = vand.u32 %v272, 4294901760
      %v411 = vsub.f32 %v272, %v410
      %v412 = vand.u32 %v411, 4294901760
      %v413 = vsub.f32 %v411, %v412
      %v414 = vand.u32 %v413, 4294901760
      %415 = vmatpush1.msra.mxu0 %v414
      %416 = vmatprep.subr.mxu0 0.0
      %417 = vmatpush1.msra.mxu0 0.0
      %418 = vmatprep.subr.mxu0 0.0
      %419 = vmatpush1.msra.mxu0 0.0
      %420 = vmatprep.subr.mxu0 0.0
      %421 = vmatpush1.msra.mxu0 0.0
      %422 = vmatprep.subr.mxu0 0.0
      %423 = vmatpush1.msra.mxu0 0.0
      %424 = vmatprep.subr.mxu0 0.0
      %425 = vmatpush1.msra.mxu0 0.0
      %426 = vmatprep.subr.mxu0 0.0
      %427 = vmatpush1.msra.mxu0 0.0
      %428 = vmatprep.subr.mxu0 0.0
      %429 = vmatpush1.msra.mxu0 0.0
      %430 = vmatprep.subr.mxu0 0.0
      %431 = vmatpush1.msra.mxu0 0.0
      %432 = vmatprep.subr.mxu0 0.0
      %433 = vmatpush1.msra.mxu0 0.0
      %434 = vmatprep.subr.mxu0 0.0
      %435 = vmatpush1.msra.mxu0 0.0
      %436 = vmatprep.subr.mxu0 0.0
      %437 = vmatpush1.msra.mxu0 0.0
      %438 = vmatprep.subr.mxu0 0.0
      %439 = vmatpush1.msra.mxu0 0.0
      %440 = vmatprep.subr.mxu0 0.0
      %441 = vmatpush1.msra.mxu0 0.0
      %442 = vmatprep.subr.mxu0 0.0
      %443 = vmatpush1.msra.mxu0 0.0
      %444 = vmatprep.subr.mxu0 0.0
      %445 = vmatpush1.msra.mxu0 0.0
      %446 = vmatprep.subr.mxu0 0.0
      %447 = vmatpush1.msra.mxu0 0.0
      %448 = vmatprep.subr.mxu0 0.0
      %449 = vmatpush1.msra.mxu0 0.0
      %450 = vmatprep.subr.mxu0 0.0
      %451 = vmatpush1.msra.mxu0 0.0
      %452 = vmatprep.subr.mxu0 0.0
      %453 = vmatpush1.msra.mxu0 0.0
      %454 = vmatprep.subr.mxu0 0.0
      %455 = vmatpush1.msra.mxu0 0.0
      %456 = vmatprep.subr.mxu0 0.0
      %457 = vmatpush1.msra.mxu0 0.0
      %458 = vmatprep.subr.mxu0 0.0
      %459 = vmatpush1.msra.mxu0 0.0
      %460 = vmatprep.subr.mxu0 0.0
      %461 = vmatpush1.msra.mxu0 0.0
      %462 = vmatprep.subr.mxu0 0.0
      %463 = vmatpush1.msra.mxu0 0.0
      %464 = vmatprep.subr.mxu0 0.0
      %465 = vmatpush1.msra.mxu0 0.0
      %466 = vmatprep.subr.mxu0 0.0
      %467 = vmatpush1.msra.mxu0 0.0
      %468 = vmatprep.subr.mxu0 0.0
      %469 = vmatpush1.msra.mxu0 0.0
      %470 = vmatprep.subr.mxu0 0.0
      %471 = vmatpush1.msra.mxu0 0.0
      %472 = vmatprep.subr.mxu0 0.0
      %473 = vmatpush1.msra.mxu0 0.0
      %474 = vmatprep.subr.mxu0 0.0
      %475 = vmatpush1.msra.mxu0 0.0
      %476 = vmatprep.mubr.f32.mxu0 0.0
      %v477 = vand.u32 %v296, 4294901760
      %478 = vmatmul.mubr.f32.gmra.mrb[0].mxu0 %v477
      %v479 = vpop.f32.mrb[0].mxu0
      %v480 = vadd.f32 %v377, %v479
      %v481 = vpop.f32.mrb[0].mxu0
      %v482 = vadd.f32 %v379, %v481
      %483 = vmatprep.mubr.f32.mxu0 0.0
      %v484 = vand.u32 %v299, 4294901760
      %485 = vmatmul.mubr.f32.gmra.mrb[0].mxu0 %v484
      %v486 = vpop.f32.mrb[0].mxu0
      %v487 = vadd.f32 %v388, %v486
      %v488 = vpop.f32.mrb[0].mxu0
      %v489 = vadd.f32 %v390, %v488
      %490 = vdwg.mxu0
      %v491 = vand.u32 %v265, 4294901760
      %v492 = vsub.f32 %v265, %v491
      %493 = vmatprep.subr.mxu0 %v492
      %v494 = vand.u32 %v264, 4294901760
      %v495 = vsub.f32 %v264, %v494
      %496 = vmatpush1.msra.mxu0 %v495
      %v497 = vand.u32 %v273, 4294901760
      %v498 = vsub.f32 %v273, %v497
      %499 = vmatprep.subr.mxu0 %v498
      %v500 = vand.u32 %v272, 4294901760
      %v501 = vsub.f32 %v272, %v500
      %502 = vmatpush1.msra.mxu0 %v501
      %503 = vmatprep.subr.mxu0 0.0
      %504 = vmatpush1.msra.mxu0 0.0
      %505 = vmatprep.subr.mxu0 0.0
      %506 = vmatpush1.msra.mxu0 0.0
      %507 = vmatprep.subr.mxu0 0.0
      %508 = vmatpush1.msra.mxu0 0.0
      %509 = vmatprep.subr.mxu0 0.0
      %510 = vmatpush1.msra.mxu0 0.0
      %511 = vmatprep.subr.mxu0 0.0
      %512 = vmatpush1.msra.mxu0 0.0
      %513 = vmatprep.subr.mxu0 0.0
      %514 = vmatpush1.msra.mxu0 0.0
      %515 = vmatprep.subr.mxu0 0.0
      %516 = vmatpush1.msra.mxu0 0.0
      %517 = vmatprep.subr.mxu0 0.0
      %518 = vmatpush1.msra.mxu0 0.0
      %519 = vmatprep.subr.mxu0 0.0
      %520 = vmatpush1.msra.mxu0 0.0
      %521 = vmatprep.subr.mxu0 0.0
      %522 = vmatpush1.msra.mxu0 0.0
      %523 = vmatprep.subr.mxu0 0.0
      %524 = vmatpush1.msra.mxu0 0.0
      %525 = vmatprep.subr.mxu0 0.0
      %526 = vmatpush1.msra.mxu0 0.0
      %527 = vmatprep.subr.mxu0 0.0
      %528 = vmatpush1.msra.mxu0 0.0
      %529 = vmatprep.subr.mxu0 0.0
      %530 = vmatpush1.msra.mxu0 0.0
      %531 = vmatprep.subr.mxu0 0.0
      %532 = vmatpush1.msra.mxu0 0.0
      %533 = vmatprep.subr.mxu0 0.0
      %534 = vmatpush1.msra.mxu0 0.0
      %535 = vmatprep.subr.mxu0 0.0
      %536 = vmatpush1.msra.mxu0 0.0
      %537 = vmatprep.subr.mxu0 0.0
      %538 = vmatpush1.msra.mxu0 0.0
      %539 = vmatprep.subr.mxu0 0.0
      %540 = vmatpush1.msra.mxu0 0.0
      %541 = vmatprep.subr.mxu0 0.0
      %542 = vmatpush1.msra.mxu0 0.0
      %543 = vmatprep.subr.mxu0 0.0
      %544 = vmatpush1.msra.mxu0 0.0
      %545 = vmatprep.subr.mxu0 0.0
      %546 = vmatpush1.msra.mxu0 0.0
      %547 = vmatprep.subr.mxu0 0.0
      %548 = vmatpush1.msra.mxu0 0.0
      %549 = vmatprep.subr.mxu0 0.0
      %550 = vmatpush1.msra.mxu0 0.0
      %551 = vmatprep.subr.mxu0 0.0
      %552 = vmatpush1.msra.mxu0 0.0
      %553 = vmatprep.subr.mxu0 0.0
      %554 = vmatpush1.msra.mxu0 0.0
      %555 = vmatprep.subr.mxu0 0.0
      %556 = vmatpush1.msra.mxu0 0.0
      %557 = vmatprep.subr.mxu0 0.0
      %558 = vmatpush1.msra.mxu0 0.0
      %559 = vmatprep.subr.mxu0 0.0
      %560 = vmatpush1.msra.mxu0 0.0
      %561 = vmatprep.subr.mxu0 0.0
      %562 = vmatpush1.msra.mxu0 0.0
      %563 = vmatprep.mubr.f32.mxu0 0.0
      %v564 = vand.u32 %v296, 4294901760
      %v565 = vsub.f32 %v296, %v564
      %566 = vmatmul.mubr.f32.gmra.mrb[0].mxu0 %v565
      %v567 = vpop.f32.mrb[0].mxu0
      %v568 = vadd.f32 %v480, %v567
      %v569 = vpop.f32.mrb[0].mxu0
      %v570 = vadd.f32 %v482, %v569
      %571 = vmatprep.mubr.f32.mxu0 0.0
      %v572 = vand.u32 %v299, 4294901760
      %v573 = vsub.f32 %v299, %v572
      %574 = vmatmul.mubr.f32.gmra.mrb[0].mxu0 %v573
      %v575 = vpop.f32.mrb[0].mxu0
      %v576 = vadd.f32 %v487, %v575
      %v577 = vpop.f32.mrb[0].mxu0
      %v578 = vadd.f32 %v489, %v577
      %579 = vdwg.mxu0
      %v580 = vand.u32 %v265, 4294901760
      %581 = vmatprep.subr.mxu0 %v580
      %v582 = vand.u32 %v264, 4294901760
      %583 = vmatpush1.msra.mxu0 %v582
      %v584 = vand.u32 %v273, 4294901760
      %585 = vmatprep.subr.mxu0 %v584
      %v586 = vand.u32 %v272, 4294901760
      %587 = vmatpush1.msra.mxu0 %v586
      %588 = vmatprep.subr.mxu0 0.0
      %589 = vmatpush1.msra.mxu0 0.0
      %590 = vmatprep.subr.mxu0 0.0
      %591 = vmatpush1.msra.mxu0 0.0
      %592 = vmatprep.subr.mxu0 0.0
      %593 = vmatpush1.msra.mxu0 0.0
      %594 = vmatprep.subr.mxu0 0.0
      %595 = vmatpush1.msra.mxu0 0.0
      %596 = vmatprep.subr.mxu0 0.0
      %597 = vmatpush1.msra.mxu0 0.0
      %598 = vmatprep.subr.mxu0 0.0
      %599 = vmatpush1.msra.mxu0 0.0
      %600 = vmatprep.subr.mxu0 0.0
      %601 = vmatpush1.msra.mxu0 0.0
      %602 = vmatprep.subr.mxu0 0.0
      %603 = vmatpush1.msra.mxu0 0.0
      %604 = vmatprep.subr.mxu0 0.0
      %605 = vmatpush1.msra.mxu0 0.0
      %606 = vmatprep.subr.mxu0 0.0
      %607 = vmatpush1.msra.mxu0 0.0
      %608 = vmatprep.subr.mxu0 0.0
      %609 = vmatpush1.msra.mxu0 0.0
      %610 = vmatprep.subr.mxu0 0.0
      %611 = vmatpush1.msra.mxu0 0.0
      %612 = vmatprep.subr.mxu0 0.0
      %613 = vmatpush1.msra.mxu0 0.0
      %614 = vmatprep.subr.mxu0 0.0
      %615 = vmatpush1.msra.mxu0 0.0
      %616 = vmatprep.subr.mxu0 0.0
      %617 = vmatpush1.msra.mxu0 0.0
      %618 = vmatprep.subr.mxu0 0.0
      %619 = vmatpush1.msra.mxu0 0.0
      %620 = vmatprep.subr.mxu0 0.0
      %621 = vmatpush1.msra.mxu0 0.0
      %622 = vmatprep.subr.mxu0 0.0
      %623 = vmatpush1.msra.mxu0 0.0
      %624 = vmatprep.subr.mxu0 0.0
      %625 = vmatpush1.msra.mxu0 0.0
      %626 = vmatprep.subr.mxu0 0.0
      %627 = vmatpush1.msra.mxu0 0.0
      %628 = vmatprep.subr.mxu0 0.0
      %629 = vmatpush1.msra.mxu0 0.0
      %630 = vmatprep.subr.mxu0 0.0
      %631 = vmatpush1.msra.mxu0 0.0
      %632 = vmatprep.subr.mxu0 0.0
      %633 = vmatpush1.msra.mxu0 0.0
      %634 = vmatprep.subr.mxu0 0.0
      %635 = vmatpush1.msra.mxu0 0.0
      %636 = vmatprep.subr.mxu0 0.0
      %637 = vmatpush1.msra.mxu0 0.0
      %638 = vmatprep.subr.mxu0 0.0
      %639 = vmatpush1.msra.mxu0 0.0
      %640 = vmatprep.subr.mxu0 0.0
      %641 = vmatpush1.msra.mxu0 0.0
      %642 = vmatprep.subr.mxu0 0.0
      %643 = vmatpush1.msra.mxu0 0.0
      %644 = vmatprep.subr.mxu0 0.0
      %645 = vmatpush1.msra.mxu0 0.0
      %646 = vmatprep.subr.mxu0 0.0
      %647 = vmatpush1.msra.mxu0 0.0
      %648 = vmatprep.mubr.f32.mxu0 0.0
      %v649 = vand.u32 %v296, 4294901760
      %v650 = vsub.f32 %v296, %v649
      %v651 = vand.u32 %v650, 4294901760
      %652 = vmatmul.mubr.f32.gmra.mrb[0].mxu0 %v651
      %v653 = vpop.f32.mrb[0].mxu0
      %v654 = vadd.f32 %v568, %v653
      %v655 = vpop.f32.mrb[0].mxu0
      %v656 = vadd.f32 %v570, %v655
      %657 = vmatprep.mubr.f32.mxu0 0.0
      %v658 = vand.u32 %v299, 4294901760
      %v659 = vsub.f32 %v299, %v658
      %v660 = vand.u32 %v659, 4294901760
      %661 = vmatmul.mubr.f32.gmra.mrb[0].mxu0 %v660
      %v662 = vpop.f32.mrb[0].mxu0
      %v663 = vadd.f32 %v576, %v662
      %v664 = vpop.f32.mrb[0].mxu0
      %v665 = vadd.f32 %v578, %v664
      %666 = vdwg.mxu0
      %v667 = vand.u32 %v265, 4294901760
      %v668 = vsub.f32 %v265, %v667
      %v669 = vand.u32 %v668, 4294901760
      %670 = vmatprep.subr.mxu0 %v669
      %v671 = vand.u32 %v264, 4294901760
      %v672 = vsub.f32 %v264, %v671
      %v673 = vand.u32 %v672, 4294901760
      %674 = vmatpush1.msra.mxu0 %v673
      %v675 = vand.u32 %v273, 4294901760
      %v676 = vsub.f32 %v273, %v675
      %v677 = vand.u32 %v676, 4294901760
      %678 = vmatprep.subr.mxu0 %v677
      %v679 = vand.u32 %v272, 4294901760
      %v680 = vsub.f32 %v272, %v679
      %v681 = vand.u32 %v680, 4294901760
      %682 = vmatpush1.msra.mxu0 %v681
      %683 = vmatprep.subr.mxu0 0.0
      %684 = vmatpush1.msra.mxu0 0.0
      %685 = vmatprep.subr.mxu0 0.0
      %686 = vmatpush1.msra.mxu0 0.0
      %687 = vmatprep.subr.mxu0 0.0
      %688 = vmatpush1.msra.mxu0 0.0
      %689 = vmatprep.subr.mxu0 0.0
      %690 = vmatpush1.msra.mxu0 0.0
      %691 = vmatprep.subr.mxu0 0.0
      %692 = vmatpush1.msra.mxu0 0.0
      %693 = vmatprep.subr.mxu0 0.0
      %694 = vmatpush1.msra.mxu0 0.0
      %695 = vmatprep.subr.mxu0 0.0
      %696 = vmatpush1.msra.mxu0 0.0
      %697 = vmatprep.subr.mxu0 0.0
      %698 = vmatpush1.msra.mxu0 0.0
      %699 = vmatprep.subr.mxu0 0.0
      %700 = vmatpush1.msra.mxu0 0.0
      %701 = vmatprep.subr.mxu0 0.0
      %702 = vmatpush1.msra.mxu0 0.0
      %703 = vmatprep.subr.mxu0 0.0
      %704 = vmatpush1.msra.mxu0 0.0
      %705 = vmatprep.subr.mxu0 0.0
      %706 = vmatpush1.msra.mxu0 0.0
      %707 = vmatprep.subr.mxu0 0.0
      %708 = vmatpush1.msra.mxu0 0.0
      %709 = vmatprep.subr.mxu0 0.0
      %710 = vmatpush1.msra.mxu0 0.0
      %711 = vmatprep.subr.mxu0 0.0
      %712 = vmatpush1.msra.mxu0 0.0
      %713 = vmatprep.subr.mxu0 0.0
      %714 = vmatpush1.msra.mxu0 0.0
      %715 = vmatprep.subr.mxu0 0.0
      %716 = vmatpush1.msra.mxu0 0.0
      %717 = vmatprep.subr.mxu0 0.0
      %718 = vmatpush1.msra.mxu0 0.0
      %719 = vmatprep.subr.mxu0 0.0
      %720 = vmatpush1.msra.mxu0 0.0
      %721 = vmatprep.subr.mxu0 0.0
      %722 = vmatpush1.msra.mxu0 0.0
      %723 = vmatprep.subr.mxu0 0.0
      %724 = vmatpush1.msra.mxu0 0.0
      %725 = vmatprep.subr.mxu0 0.0
      %726 = vmatpush1.msra.mxu0 0.0
      %727 = vmatprep.subr.mxu0 0.0
      %728 = vmatpush1.msra.mxu0 0.0
      %729 = vmatprep.subr.mxu0 0.0
      %730 = vmatpush1.msra.mxu0 0.0
      %731 = vmatprep.subr.mxu0 0.0
      %732 = vmatpush1.msra.mxu0 0.0
      %733 = vmatprep.subr.mxu0 0.0
      %734 = vmatpush1.msra.mxu0 0.0
      %735 = vmatprep.subr.mxu0 0.0
      %736 = vmatpush1.msra.mxu0 0.0
      %737 = vmatprep.subr.mxu0 0.0
      %738 = vmatpush1.msra.mxu0 0.0
      %739 = vmatprep.subr.mxu0 0.0
      %740 = vmatpush1.msra.mxu0 0.0
      %741 = vmatprep.subr.mxu0 0.0
      %742 = vmatpush1.msra.mxu0 0.0
      %743 = vmatprep.mubr.f32.mxu0 0.0
      %v744 = vand.u32 %v296, 4294901760
      %745 = vmatmul.mubr.f32.gmra.mrb[0].mxu0 %v744
      %v746 = vpop.f32.mrb[0].mxu0
      %v747 = vadd.f32 %v654, %v746
      %v748 = vpop.f32.mrb[0].mxu0
      %v749 = vadd.f32 %v656, %v748
      %750 = vmatprep.mubr.f32.mxu0 0.0
      %v751 = vand.u32 %v299, 4294901760
      %752 = vmatmul.mubr.f32.gmra.mrb[0].mxu0 %v751
      %v753 = vpop.f32.mrb[0].mxu0
      %v754 = vadd.f32 %v663, %v753
      %v755 = vpop.f32.mrb[0].mxu0
      %v756 = vadd.f32 %v665, %v755
      %757 = vdwg.mxu0
      %v758 = vand.u32 %v265, 4294901760
      %759 = vmatprep.subr.mxu0 %v758
      %v760 = vand.u32 %v264, 4294901760
      %761 = vmatpush1.msra.mxu0 %v760
      %v762 = vand.u32 %v273, 4294901760
      %763 = vmatprep.subr.mxu0 %v762
      %v764 = vand.u32 %v272, 4294901760
      %765 = vmatpush1.msra.mxu0 %v764
      %766 = vmatprep.subr.mxu0 0.0
      %767 = vmatpush1.msra.mxu0 0.0
      %768 = vmatprep.subr.mxu0 0.0
      %769 = vmatpush1.msra.mxu0 0.0
      %770 = vmatprep.subr.mxu0 0.0
      %771 = vmatpush1.msra.mxu0 0.0
      %772 = vmatprep.subr.mxu0 0.0
      %773 = vmatpush1.msra.mxu0 0.0
      %774 = vmatprep.subr.mxu0 0.0
      %775 = vmatpush1.msra.mxu0 0.0
      %776 = vmatprep.subr.mxu0 0.0
      %777 = vmatpush1.msra.mxu0 0.0
      %778 = vmatprep.subr.mxu0 0.0
      %779 = vmatpush1.msra.mxu0 0.0
      %780 = vmatprep.subr.mxu0 0.0
      %781 = vmatpush1.msra.mxu0 0.0
      %782 = vmatprep.subr.mxu0 0.0
      %783 = vmatpush1.msra.mxu0 0.0
      %784 = vmatprep.subr.mxu0 0.0
      %785 = vmatpush1.msra.mxu0 0.0
      %786 = vmatprep.subr.mxu0 0.0
      %787 = vmatpush1.msra.mxu0 0.0
      %788 = vmatprep.subr.mxu0 0.0
      %789 = vmatpush1.msra.mxu0 0.0
      %790 = vmatprep.subr.mxu0 0.0
      %791 = vmatpush1.msra.mxu0 0.0
      %792 = vmatprep.subr.mxu0 0.0
      %793 = vmatpush1.msra.mxu0 0.0
      %794 = vmatprep.subr.mxu0 0.0
      %795 = vmatpush1.msra.mxu0 0.0
      %796 = vmatprep.subr.mxu0 0.0
      %797 = vmatpush1.msra.mxu0 0.0
      %798 = vmatprep.subr.mxu0 0.0
      %799 = vmatpush1.msra.mxu0 0.0
      %800 = vmatprep.subr.mxu0 0.0
      %801 = vmatpush1.msra.mxu0 0.0
      %802 = vmatprep.subr.mxu0 0.0
      %803 = vmatpush1.msra.mxu0 0.0
      %804 = vmatprep.subr.mxu0 0.0
      %805 = vmatpush1.msra.mxu0 0.0
      %806 = vmatprep.subr.mxu0 0.0
      %807 = vmatpush1.msra.mxu0 0.0
      %808 = vmatprep.subr.mxu0 0.0
      %809 = vmatpush1.msra.mxu0 0.0
      %810 = vmatprep.subr.mxu0 0.0
      %811 = vmatpush1.msra.mxu0 0.0
      %812 = vmatprep.subr.mxu0 0.0
      %813 = vmatpush1.msra.mxu0 0.0
      %814 = vmatprep.subr.mxu0 0.0
      %815 = vmatpush1.msra.mxu0 0.0
      %816 = vmatprep.subr.mxu0 0.0
      %817 = vmatpush1.msra.mxu0 0.0
      %818 = vmatprep.subr.mxu0 0.0
      %819 = vmatpush1.msra.mxu0 0.0
      %820 = vmatprep.subr.mxu0 0.0
      %821 = vmatpush1.msra.mxu0 0.0
      %822 = vmatprep.subr.mxu0 0.0
      %823 = vmatpush1.msra.mxu0 0.0
      %824 = vmatprep.subr.mxu0 0.0
      %825 = vmatpush1.msra.mxu0 0.0
      %826 = vmatprep.mubr.f32.mxu0 0.0
      %v827 = vand.u32 %v296, 4294901760
      %828 = vmatmul.mubr.f32.gmra.mrb[0].mxu0 %v827
      %v829 = vpop.f32.mrb[0].mxu0
      %v830 = vadd.f32 %v747, %v829
      %v831 = vpop.f32.mrb[0].mxu0
      %v832 = vadd.f32 %v749, %v831
      %833 = vmatprep.mubr.f32.mxu0 0.0
      %v834 = vand.u32 %v299, 4294901760
      %835 = vmatmul.mubr.f32.gmra.mrb[0].mxu0 %v834
      %v836 = vpop.f32.mrb[0].mxu0
      %v837 = vadd.f32 %v754, %v836
      %v838 = vpop.f32.mrb[0].mxu0
      %v839 = vadd.f32 %v756, %v838
      %840 = vdwg.mxu0
      %v841 = vand.u32 %v267, 4294901760
      %842 = vmatprep.subr.mxu0 %v841
      %v843 = vand.u32 %v266, 4294901760
      %844 = vmatpush1.msra.mxu0 %v843
      %v845 = vand.u32 %v275, 4294901760
      %846 = vmatprep.subr.mxu0 %v845
      %v847 = vand.u32 %v274, 4294901760
      %848 = vmatpush1.msra.mxu0 %v847
      %849 = vmatprep.subr.mxu0 0.0
      %850 = vmatpush1.msra.mxu0 0.0
      %851 = vmatprep.subr.mxu0 0.0
      %852 = vmatpush1.msra.mxu0 0.0
      %853 = vmatprep.subr.mxu0 0.0
      %854 = vmatpush1.msra.mxu0 0.0
      %855 = vmatprep.subr.mxu0 0.0
      %856 = vmatpush1.msra.mxu0 0.0
      %857 = vmatprep.subr.mxu0 0.0
      %858 = vmatpush1.msra.mxu0 0.0
      %859 = vmatprep.subr.mxu0 0.0
      %860 = vmatpush1.msra.mxu0 0.0
      %861 = vmatprep.subr.mxu0 0.0
      %862 = vmatpush1.msra.mxu0 0.0
      %863 = vmatprep.subr.mxu0 0.0
      %864 = vmatpush1.msra.mxu0 0.0
      %865 = vmatprep.subr.mxu0 0.0
      %866 = vmatpush1.msra.mxu0 0.0
      %867 = vmatprep.subr.mxu0 0.0
      %868 = vmatpush1.msra.mxu0 0.0
      %869 = vmatprep.subr.mxu0 0.0
      %870 = vmatpush1.msra.mxu0 0.0
      %871 = vmatprep.subr.mxu0 0.0
      %872 = vmatpush1.msra.mxu0 0.0
      %873 = vmatprep.subr.mxu0 0.0
      %874 = vmatpush1.msra.mxu0 0.0
      %875 = vmatprep.subr.mxu0 0.0
      %876 = vmatpush1.msra.mxu0 0.0
      %877 = vmatprep.subr.mxu0 0.0
      %878 = vmatpush1.msra.mxu0 0.0
      %879 = vmatprep.subr.mxu0 0.0
      %880 = vmatpush1.msra.mxu0 0.0
      %881 = vmatprep.subr.mxu0 0.0
      %882 = vmatpush1.msra.mxu0 0.0
      %883 = vmatprep.subr.mxu0 0.0
      %884 = vmatpush1.msra.mxu0 0.0
      %885 = vmatprep.subr.mxu0 0.0
      %886 = vmatpush1.msra.mxu0 0.0
      %887 = vmatprep.subr.mxu0 0.0
      %888 = vmatpush1.msra.mxu0 0.0
      %889 = vmatprep.subr.mxu0 0.0
      %890 = vmatpush1.msra.mxu0 0.0
      %891 = vmatprep.subr.mxu0 0.0
      %892 = vmatpush1.msra.mxu0 0.0
      %893 = vmatprep.subr.mxu0 0.0
      %894 = vmatpush1.msra.mxu0 0.0
      %895 = vmatprep.subr.mxu0 0.0
      %896 = vmatpush1.msra.mxu0 0.0
      %897 = vmatprep.subr.mxu0 0.0
      %898 = vmatpush1.msra.mxu0 0.0
      %899 = vmatprep.subr.mxu0 0.0
      %900 = vmatpush1.msra.mxu0 0.0
      %901 = vmatprep.subr.mxu0 0.0
      %902 = vmatpush1.msra.mxu0 0.0
      %903 = vmatprep.subr.mxu0 0.0
      %904 = vmatpush1.msra.mxu0 0.0
      %905 = vmatprep.subr.mxu0 0.0
      %906 = vmatpush1.msra.mxu0 0.0
      %907 = vmatprep.subr.mxu0 0.0
      %908 = vmatpush1.msra.mxu0 0.0
      %909 = vmatprep.mubr.f32.mxu0 0.0
      %v910 = vand.u32 %v296, 4294901760
      %v911 = vsub.f32 %v296, %v910
      %v912 = vand.u32 %v911, 4294901760
      %v913 = vsub.f32 %v911, %v912
      %v914 = vand.u32 %v913, 4294901760
      %915 = vmatmul.mubr.f32.gmra.mrb[0].mxu0 %v914
      %v916 = vpop.f32.mrb[0].mxu0
      %v917 = vadd.f32 %v287, %v916
      %v918 = vpop.f32.mrb[0].mxu0
      %v919 = vadd.f32 %v287, %v918
      %920 = vmatprep.mubr.f32.mxu0 0.0
      %v921 = vand.u32 %v299, 4294901760
      %v922 = vsub.f32 %v299, %v921
      %v923 = vand.u32 %v922, 4294901760
      %v924 = vsub.f32 %v922, %v923
      %v925 = vand.u32 %v924, 4294901760
      %926 = vmatmul.mubr.f32.gmra.mrb[0].mxu0 %v925
      %v927 = vpop.f32.mrb[0].mxu0
      %v928 = vadd.f32 %v292, %v927
      %v929 = vpop.f32.mrb[0].mxu0
      %v930 = vadd.f32 %v292, %v929
      %931 = vdwg.mxu0
      %v932 = vand.u32 %v267, 4294901760
      %v933 = vsub.f32 %v267, %v932
      %v934 = vand.u32 %v933, 4294901760
      %v935 = vsub.f32 %v933, %v934
      %v936 = vand.u32 %v935, 4294901760
      %937 = vmatprep.subr.mxu0 %v936
      %v938 = vand.u32 %v266, 4294901760
      %v939 = vsub.f32 %v266, %v938
      %v940 = vand.u32 %v939, 4294901760
      %v941 = vsub.f32 %v939, %v940
      %v942 = vand.u32 %v941, 4294901760
      %943 = vmatpush1.msra.mxu0 %v942
      %v944 = vand.u32 %v275, 4294901760
      %v945 = vsub.f32 %v275, %v944
      %v946 = vand.u32 %v945, 4294901760
      %v947 = vsub.f32 %v945, %v946
      %v948 = vand.u32 %v947, 4294901760
      %949 = vmatprep.subr.mxu0 %v948
      %v950 = vand.u32 %v274, 4294901760
      %v951 = vsub.f32 %v274, %v950
      %v952 = vand.u32 %v951, 4294901760
      %v953 = vsub.f32 %v951, %v952
      %v954 = vand.u32 %v953, 4294901760
      %955 = vmatpush1.msra.mxu0 %v954
      %956 = vmatprep.subr.mxu0 0.0
      %957 = vmatpush1.msra.mxu0 0.0
      %958 = vmatprep.subr.mxu0 0.0
      %959 = vmatpush1.msra.mxu0 0.0
      %960 = vmatprep.subr.mxu0 0.0
      %961 = vmatpush1.msra.mxu0 0.0
      %962 = vmatprep.subr.mxu0 0.0
      %963 = vmatpush1.msra.mxu0 0.0
      %964 = vmatprep.subr.mxu0 0.0
      %965 = vmatpush1.msra.mxu0 0.0
      %966 = vmatprep.subr.mxu0 0.0
      %967 = vmatpush1.msra.mxu0 0.0
      %968 = vmatprep.subr.mxu0 0.0
      %969 = vmatpush1.msra.mxu0 0.0
      %970 = vmatprep.subr.mxu0 0.0
      %971 = vmatpush1.msra.mxu0 0.0
      %972 = vmatprep.subr.mxu0 0.0
      %973 = vmatpush1.msra.mxu0 0.0
      %974 = vmatprep.subr.mxu0 0.0
      %975 = vmatpush1.msra.mxu0 0.0
      %976 = vmatprep.subr.mxu0 0.0
      %977 = vmatpush1.msra.mxu0 0.0
      %978 = vmatprep.subr.mxu0 0.0
      %979 = vmatpush1.msra.mxu0 0.0
      %980 = vmatprep.subr.mxu0 0.0
      %981 = vmatpush1.msra.mxu0 0.0
      %982 = vmatprep.subr.mxu0 0.0
      %983 = vmatpush1.msra.mxu0 0.0
      %984 = vmatprep.subr.mxu0 0.0
      %985 = vmatpush1.msra.mxu0 0.0
      %986 = vmatprep.subr.mxu0 0.0
      %987 = vmatpush1.msra.mxu0 0.0
      %988 = vmatprep.subr.mxu0 0.0
      %989 = vmatpush1.msra.mxu0 0.0
      %990 = vmatprep.subr.mxu0 0.0
      %991 = vmatpush1.msra.mxu0 0.0
      %992 = vmatprep.subr.mxu0 0.0
      %993 = vmatpush1.msra.mxu0 0.0
      %994 = vmatprep.subr.mxu0 0.0
      %995 = vmatpush1.msra.mxu0 0.0
      %996 = vmatprep.subr.mxu0 0.0
      %997 = vmatpush1.msra.mxu0 0.0
      %998 = vmatprep.subr.mxu0 0.0
      %999 = vmatpush1.msra.mxu0 0.0
      %1000 = vmatprep.subr.mxu0 0.0
      %1001 = vmatpush1.msra.mxu0 0.0
      %1002 = vmatprep.subr.mxu0 0.0
      %1003 = vmatpush1.msra.mxu0 0.0
      %1004 = vmatprep.subr.mxu0 0.0
      %1005 = vmatpush1.msra.mxu0 0.0
      %1006 = vmatprep.subr.mxu0 0.0
      %1007 = vmatpush1.msra.mxu0 0.0
      %1008 = vmatprep.subr.mxu0 0.0
      %1009 = vmatpush1.msra.mxu0 0.0
      %1010 = vmatprep.subr.mxu0 0.0
      %1011 = vmatpush1.msra.mxu0 0.0
      %1012 = vmatprep.subr.mxu0 0.0
      %1013 = vmatpush1.msra.mxu0 0.0
      %1014 = vmatprep.subr.mxu0 0.0
      %1015 = vmatpush1.msra.mxu0 0.0
      %1016 = vmatprep.mubr.f32.mxu0 0.0
      %v1017 = vand.u32 %v296, 4294901760
      %1018 = vmatmul.mubr.f32.gmra.mrb[0].mxu0 %v1017
      %v1019 = vpop.f32.mrb[0].mxu0
      %v1020 = vadd.f32 %v917, %v1019
      %v1021 = vpop.f32.mrb[0].mxu0
      %v1022 = vadd.f32 %v919, %v1021
      %1023 = vmatprep.mubr.f32.mxu0 0.0
      %v1024 = vand.u32 %v299, 4294901760
      %1025 = vmatmul.mubr.f32.gmra.mrb[0].mxu0 %v1024
      %v1026 = vpop.f32.mrb[0].mxu0
      %v1027 = vadd.f32 %v928, %v1026
      %v1028 = vpop.f32.mrb[0].mxu0
      %v1029 = vadd.f32 %v930, %v1028
      %1030 = vdwg.mxu0
      %v1031 = vand.u32 %v267, 4294901760
      %v1032 = vsub.f32 %v267, %v1031
      %1033 = vmatprep.subr.mxu0 %v1032
      %v1034 = vand.u32 %v266, 4294901760
      %v1035 = vsub.f32 %v266, %v1034
      %1036 = vmatpush1.msra.mxu0 %v1035
      %v1037 = vand.u32 %v275, 4294901760
      %v1038 = vsub.f32 %v275, %v1037
      %1039 = vmatprep.subr.mxu0 %v1038
      %v1040 = vand.u32 %v274, 4294901760
      %v1041 = vsub.f32 %v274, %v1040
      %1042 = vmatpush1.msra.mxu0 %v1041
      %1043 = vmatprep.subr.mxu0 0.0
      %1044 = vmatpush1.msra.mxu0 0.0
      %1045 = vmatprep.subr.mxu0 0.0
      %1046 = vmatpush1.msra.mxu0 0.0
      %1047 = vmatprep.subr.mxu0 0.0
      %1048 = vmatpush1.msra.mxu0 0.0
      %1049 = vmatprep.subr.mxu0 0.0
      %1050 = vmatpush1.msra.mxu0 0.0
      %1051 = vmatprep.subr.mxu0 0.0
      %1052 = vmatpush1.msra.mxu0 0.0
      %1053 = vmatprep.subr.mxu0 0.0
      %1054 = vmatpush1.msra.mxu0 0.0
      %1055 = vmatprep.subr.mxu0 0.0
      %1056 = vmatpush1.msra.mxu0 0.0
      %1057 = vmatprep.subr.mxu0 0.0
      %1058 = vmatpush1.msra.mxu0 0.0
      %1059 = vmatprep.subr.mxu0 0.0
      %1060 = vmatpush1.msra.mxu0 0.0
      %1061 = vmatprep.subr.mxu0 0.0
      %1062 = vmatpush1.msra.mxu0 0.0
      %1063 = vmatprep.subr.mxu0 0.0
      %1064 = vmatpush1.msra.mxu0 0.0
      %1065 = vmatprep.subr.mxu0 0.0
      %1066 = vmatpush1.msra.mxu0 0.0
      %1067 = vmatprep.subr.mxu0 0.0
      %1068 = vmatpush1.msra.mxu0 0.0
      %1069 = vmatprep.subr.mxu0 0.0
      %1070 = vmatpush1.msra.mxu0 0.0
      %1071 = vmatprep.subr.mxu0 0.0
      %1072 = vmatpush1.msra.mxu0 0.0
      %1073 = vmatprep.subr.mxu0 0.0
      %1074 = vmatpush1.msra.mxu0 0.0
      %1075 = vmatprep.subr.mxu0 0.0
      %1076 = vmatpush1.msra.mxu0 0.0
      %1077 = vmatprep.subr.mxu0 0.0
      %1078 = vmatpush1.msra.mxu0 0.0
      %1079 = vmatprep.subr.mxu0 0.0
      %1080 = vmatpush1.msra.mxu0 0.0
      %1081 = vmatprep.subr.mxu0 0.0
      %1082 = vmatpush1.msra.mxu0 0.0
      %1083 = vmatprep.subr.mxu0 0.0
      %1084 = vmatpush1.msra.mxu0 0.0
      %1085 = vmatprep.subr.mxu0 0.0
      %1086 = vmatpush1.msra.mxu0 0.0
      %1087 = vmatprep.subr.mxu0 0.0
      %1088 = vmatpush1.msra.mxu0 0.0
      %1089 = vmatprep.subr.mxu0 0.0
      %1090 = vmatpush1.msra.mxu0 0.0
      %1091 = vmatprep.subr.mxu0 0.0
      %1092 = vmatpush1.msra.mxu0 0.0
      %1093 = vmatprep.subr.mxu0 0.0
      %1094 = vmatpush1.msra.mxu0 0.0
      %1095 = vmatprep.subr.mxu0 0.0
      %1096 = vmatpush1.msra.mxu0 0.0
      %1097 = vmatprep.subr.mxu0 0.0
      %1098 = vmatpush1.msra.mxu0 0.0
      %1099 = vmatprep.subr.mxu0 0.0
      %1100 = vmatpush1.msra.mxu0 0.0
      %1101 = vmatprep.subr.mxu0 0.0
      %1102 = vmatpush1.msra.mxu0 0.0
      %1103 = vmatprep.mubr.f32.mxu0 0.0
      %v1104 = vand.u32 %v296, 4294901760
      %v1105 = vsub.f32 %v296, %v1104
      %1106 = vmatmul.mubr.f32.gmra.mrb[0].mxu0 %v1105
      %v1107 = vpop.f32.mrb[0].mxu0
      %v1108 = vadd.f32 %v1020, %v1107
      %v1109 = vpop.f32.mrb[0].mxu0
      %v1110 = vadd.f32 %v1022, %v1109
      %1111 = vmatprep.mubr.f32.mxu0 0.0
      %v1112 = vand.u32 %v299, 4294901760
      %v1113 = vsub.f32 %v299, %v1112
      %1114 = vmatmul.mubr.f32.gmra.mrb[0].mxu0 %v1113
      %v1115 = vpop.f32.mrb[0].mxu0
      %v1116 = vadd.f32 %v1027, %v1115
      %v1117 = vpop.f32.mrb[0].mxu0
      %v1118 = vadd.f32 %v1029, %v1117
      %1119 = vdwg.mxu0
      %v1120 = vand.u32 %v267, 4294901760
      %1121 = vmatprep.subr.mxu0 %v1120
      %v1122 = vand.u32 %v266, 4294901760
      %1123 = vmatpush1.msra.mxu0 %v1122
      %v1124 = vand.u32 %v275, 4294901760
      %1125 = vmatprep.subr.mxu0 %v1124
      %v1126 = vand.u32 %v274, 4294901760
      %1127 = vmatpush1.msra.mxu0 %v1126
      %1128 = vmatprep.subr.mxu0 0.0
      %1129 = vmatpush1.msra.mxu0 0.0
      %1130 = vmatprep.subr.mxu0 0.0
      %1131 = vmatpush1.msra.mxu0 0.0
      %1132 = vmatprep.subr.mxu0 0.0
      %1133 = vmatpush1.msra.mxu0 0.0
      %1134 = vmatprep.subr.mxu0 0.0
      %1135 = vmatpush1.msra.mxu0 0.0
      %1136 = vmatprep.subr.mxu0 0.0
      %1137 = vmatpush1.msra.mxu0 0.0
      %1138 = vmatprep.subr.mxu0 0.0
      %1139 = vmatpush1.msra.mxu0 0.0
      %1140 = vmatprep.subr.mxu0 0.0
      %1141 = vmatpush1.msra.mxu0 0.0
      %1142 = vmatprep.subr.mxu0 0.0
      %1143 = vmatpush1.msra.mxu0 0.0
      %1144 = vmatprep.subr.mxu0 0.0
      %1145 = vmatpush1.msra.mxu0 0.0
      %1146 = vmatprep.subr.mxu0 0.0
      %1147 = vmatpush1.msra.mxu0 0.0
      %1148 = vmatprep.subr.mxu0 0.0
      %1149 = vmatpush1.msra.mxu0 0.0
      %1150 = vmatprep.subr.mxu0 0.0
      %1151 = vmatpush1.msra.mxu0 0.0
      %1152 = vmatprep.subr.mxu0 0.0
      %1153 = vmatpush1.msra.mxu0 0.0
      %1154 = vmatprep.subr.mxu0 0.0
      %1155 = vmatpush1.msra.mxu0 0.0
      %1156 = vmatprep.subr.mxu0 0.0
      %1157 = vmatpush1.msra.mxu0 0.0
      %1158 = vmatprep.subr.mxu0 0.0
      %1159 = vmatpush1.msra.mxu0 0.0
      %1160 = vmatprep.subr.mxu0 0.0
      %1161 = vmatpush1.msra.mxu0 0.0
      %1162 = vmatprep.subr.mxu0 0.0
      %1163 = vmatpush1.msra.mxu0 0.0
      %1164 = vmatprep.subr.mxu0 0.0
      %1165 = vmatpush1.msra.mxu0 0.0
      %1166 = vmatprep.subr.mxu0 0.0
      %1167 = vmatpush1.msra.mxu0 0.0
      %1168 = vmatprep.subr.mxu0 0.0
      %1169 = vmatpush1.msra.mxu0 0.0
      %1170 = vmatprep.subr.mxu0 0.0
      %1171 = vmatpush1.msra.mxu0 0.0
      %1172 = vmatprep.subr.mxu0 0.0
      %1173 = vmatpush1.msra.mxu0 0.0
      %1174 = vmatprep.subr.mxu0 0.0
      %1175 = vmatpush1.msra.mxu0 0.0
      %1176 = vmatprep.subr.mxu0 0.0
      %1177 = vmatpush1.msra.mxu0 0.0
      %1178 = vmatprep.subr.mxu0 0.0
      %1179 = vmatpush1.msra.mxu0 0.0
      %1180 = vmatprep.subr.mxu0 0.0
      %1181 = vmatpush1.msra.mxu0 0.0
      %1182 = vmatprep.subr.mxu0 0.0
      %1183 = vmatpush1.msra.mxu0 0.0
      %1184 = vmatprep.subr.mxu0 0.0
      %1185 = vmatpush1.msra.mxu0 0.0
      %1186 = vmatprep.subr.mxu0 0.0
      %1187 = vmatpush1.msra.mxu0 0.0
      %1188 = vmatprep.mubr.f32.mxu0 0.0
      %v1189 = vand.u32 %v296, 4294901760
      %v1190 = vsub.f32 %v296, %v1189
      %v1191 = vand.u32 %v1190, 4294901760
      %1192 = vmatmul.mubr.f32.gmra.mrb[0].mxu0 %v1191
      %v1193 = vpop.f32.mrb[0].mxu0
      %v1194 = vadd.f32 %v1108, %v1193
      %v1195 = vpop.f32.mrb[0].mxu0
      %v1196 = vadd.f32 %v1110, %v1195
      %1197 = vmatprep.mubr.f32.mxu0 0.0
      %v1198 = vand.u32 %v299, 4294901760
      %v1199 = vsub.f32 %v299, %v1198
      %v1200 = vand.u32 %v1199, 4294901760
      %1201 = vmatmul.mubr.f32.gmra.mrb[0].mxu0 %v1200
      %v1202 = vpop.f32.mrb[0].mxu0
      %v1203 = vadd.f32 %v1116, %v1202
      %v1204 = vpop.f32.mrb[0].mxu0
      %v1205 = vadd.f32 %v1118, %v1204
      %1206 = vdwg.mxu0
      %v1207 = vand.u32 %v267, 4294901760
      %v1208 = vsub.f32 %v267, %v1207
      %v1209 = vand.u32 %v1208, 4294901760
      %1210 = vmatprep.subr.mxu0 %v1209
      %v1211 = vand.u32 %v266, 4294901760
      %v1212 = vsub.f32 %v266, %v1211
      %v1213 = vand.u32 %v1212, 4294901760
      %1214 = vmatpush1.msra.mxu0 %v1213
      %v1215 = vand.u32 %v275, 4294901760
      %v1216 = vsub.f32 %v275, %v1215
      %v1217 = vand.u32 %v1216, 4294901760
      %1218 = vmatprep.subr.mxu0 %v1217
      %v1219 = vand.u32 %v274, 4294901760
      %v1220 = vsub.f32 %v274, %v1219
      %v1221 = vand.u32 %v1220, 4294901760
      %1222 = vmatpush1.msra.mxu0 %v1221
      %1223 = vmatprep.subr.mxu0 0.0
      %1224 = vmatpush1.msra.mxu0 0.0
      %1225 = vmatprep.subr.mxu0 0.0
      %1226 = vmatpush1.msra.mxu0 0.0
      %1227 = vmatprep.subr.mxu0 0.0
      %1228 = vmatpush1.msra.mxu0 0.0
      %1229 = vmatprep.subr.mxu0 0.0
      %1230 = vmatpush1.msra.mxu0 0.0
      %1231 = vmatprep.subr.mxu0 0.0
      %1232 = vmatpush1.msra.mxu0 0.0
      %1233 = vmatprep.subr.mxu0 0.0
      %1234 = vmatpush1.msra.mxu0 0.0
      %1235 = vmatprep.subr.mxu0 0.0
      %1236 = vmatpush1.msra.mxu0 0.0
      %1237 = vmatprep.subr.mxu0 0.0
      %1238 = vmatpush1.msra.mxu0 0.0
      %1239 = vmatprep.subr.mxu0 0.0
      %1240 = vmatpush1.msra.mxu0 0.0
      %1241 = vmatprep.subr.mxu0 0.0
      %1242 = vmatpush1.msra.mxu0 0.0
      %1243 = vmatprep.subr.mxu0 0.0
      %1244 = vmatpush1.msra.mxu0 0.0
      %1245 = vmatprep.subr.mxu0 0.0
      %1246 = vmatpush1.msra.mxu0 0.0
      %1247 = vmatprep.subr.mxu0 0.0
      %1248 = vmatpush1.msra.mxu0 0.0
      %1249 = vmatprep.subr.mxu0 0.0
      %1250 = vmatpush1.msra.mxu0 0.0
      %1251 = vmatprep.subr.mxu0 0.0
      %1252 = vmatpush1.msra.mxu0 0.0
      %1253 = vmatprep.subr.mxu0 0.0
      %1254 = vmatpush1.msra.mxu0 0.0
      %1255 = vmatprep.subr.mxu0 0.0
      %1256 = vmatpush1.msra.mxu0 0.0
      %1257 = vmatprep.subr.mxu0 0.0
      %1258 = vmatpush1.msra.mxu0 0.0
      %1259 = vmatprep.subr.mxu0 0.0
      %1260 = vmatpush1.msra.mxu0 0.0
      %1261 = vmatprep.subr.mxu0 0.0
      %1262 = vmatpush1.msra.mxu0 0.0
      %1263 = vmatprep.subr.mxu0 0.0
      %1264 = vmatpush1.msra.mxu0 0.0
      %1265 = vmatprep.subr.mxu0 0.0
      %1266 = vmatpush1.msra.mxu0 0.0
      %1267 = vmatprep.subr.mxu0 0.0
      %1268 = vmatpush1.msra.mxu0 0.0
      %1269 = vmatprep.subr.mxu0 0.0
      %1270 = vmatpush1.msra.mxu0 0.0
      %1271 = vmatprep.subr.mxu0 0.0
      %1272 = vmatpush1.msra.mxu0 0.0
      %1273 = vmatprep.subr.mxu0 0.0
      %1274 = vmatpush1.msra.mxu0 0.0
      %1275 = vmatprep.subr.mxu0 0.0
      %1276 = vmatpush1.msra.mxu0 0.0
      %1277 = vmatprep.subr.mxu0 0.0
      %1278 = vmatpush1.msra.mxu0 0.0
      %1279 = vmatprep.subr.mxu0 0.0
      %1280 = vmatpush1.msra.mxu0 0.0
      %1281 = vmatprep.subr.mxu0 0.0
      %1282 = vmatpush1.msra.mxu0 0.0
      %1283 = vmatprep.mubr.f32.mxu0 0.0
      %v1284 = vand.u32 %v296, 4294901760
      %1285 = vmatmul.mubr.f32.gmra.mrb[0].mxu0 %v1284
      %v1286 = vpop.f32.mrb[0].mxu0
      %v1287 = vadd.f32 %v1194, %v1286
      %v1288 = vpop.f32.mrb[0].mxu0
      %v1289 = vadd.f32 %v1196, %v1288
      %1290 = vmatprep.mubr.f32.mxu0 0.0
      %v1291 = vand.u32 %v299, 4294901760
      %1292 = vmatmul.mubr.f32.gmra.mrb[0].mxu0 %v1291
      %v1293 = vpop.f32.mrb[0].mxu0
      %v1294 = vadd.f32 %v1203, %v1293
      %v1295 = vpop.f32.mrb[0].mxu0
      %v1296 = vadd.f32 %v1205, %v1295
      %1297 = vdwg.mxu0
      %v1298 = vand.u32 %v267, 4294901760
      %1299 = vmatprep.subr.mxu0 %v1298
      %v1300 = vand.u32 %v266, 4294901760
      %1301 = vmatpush1.msra.mxu0 %v1300
      %v1302 = vand.u32 %v275, 4294901760
      %1303 = vmatprep.subr.mxu0 %v1302
      %v1304 = vand.u32 %v274, 4294901760
      %1305 = vmatpush1.msra.mxu0 %v1304
      %1306 = vmatprep.subr.mxu0 0.0
      %1307 = vmatpush1.msra.mxu0 0.0
      %1308 = vmatprep.subr.mxu0 0.0
      %1309 = vmatpush1.msra.mxu0 0.0
      %1310 = vmatprep.subr.mxu0 0.0
      %1311 = vmatpush1.msra.mxu0 0.0
      %1312 = vmatprep.subr.mxu0 0.0
      %1313 = vmatpush1.msra.mxu0 0.0
      %1314 = vmatprep.subr.mxu0 0.0
      %1315 = vmatpush1.msra.mxu0 0.0
      %1316 = vmatprep.subr.mxu0 0.0
      %1317 = vmatpush1.msra.mxu0 0.0
      %1318 = vmatprep.subr.mxu0 0.0
      %1319 = vmatpush1.msra.mxu0 0.0
      %1320 = vmatprep.subr.mxu0 0.0
      %1321 = vmatpush1.msra.mxu0 0.0
      %1322 = vmatprep.subr.mxu0 0.0
      %1323 = vmatpush1.msra.mxu0 0.0
      %1324 = vmatprep.subr.mxu0 0.0
      %1325 = vmatpush1.msra.mxu0 0.0
      %1326 = vmatprep.subr.mxu0 0.0
      %1327 = vmatpush1.msra.mxu0 0.0
      %1328 = vmatprep.subr.mxu0 0.0
      %1329 = vmatpush1.msra.mxu0 0.0
      %1330 = vmatprep.subr.mxu0 0.0
      %1331 = vmatpush1.msra.mxu0 0.0
      %1332 = vmatprep.subr.mxu0 0.0
      %1333 = vmatpush1.msra.mxu0 0.0
      %1334 = vmatprep.subr.mxu0 0.0
      %1335 = vmatpush1.msra.mxu0 0.0
      %1336 = vmatprep.subr.mxu0 0.0
      %1337 = vmatpush1.msra.mxu0 0.0
      %1338 = vmatprep.subr.mxu0 0.0
      %1339 = vmatpush1.msra.mxu0 0.0
      %1340 = vmatprep.subr.mxu0 0.0
      %1341 = vmatpush1.msra.mxu0 0.0
      %1342 = vmatprep.subr.mxu0 0.0
      %1343 = vmatpush1.msra.mxu0 0.0
      %1344 = vmatprep.subr.mxu0 0.0
      %1345 = vmatpush1.msra.mxu0 0.0
      %1346 = vmatprep.subr.mxu0 0.0
      %1347 = vmatpush1.msra.mxu0 0.0
      %1348 = vmatprep.subr.mxu0 0.0
      %1349 = vmatpush1.msra.mxu0 0.0
      %1350 = vmatprep.subr.mxu0 0.0
      %1351 = vmatpush1.msra.mxu0 0.0
      %1352 = vmatprep.subr.mxu0 0.0
      %1353 = vmatpush1.msra.mxu0 0.0
      %1354 = vmatprep.subr.mxu0 0.0
      %1355 = vmatpush1.msra.mxu0 0.0
      %1356 = vmatprep.subr.mxu0 0.0
      %1357 = vmatpush1.msra.mxu0 0.0
      %1358 = vmatprep.subr.mxu0 0.0
      %1359 = vmatpush1.msra.mxu0 0.0
      %1360 = vmatprep.subr.mxu0 0.0
      %1361 = vmatpush1.msra.mxu0 0.0
      %1362 = vmatprep.subr.mxu0 0.0
      %1363 = vmatpush1.msra.mxu0 0.0
      %1364 = vmatprep.subr.mxu0 0.0
      %1365 = vmatpush1.msra.mxu0 0.0
      %1366 = vmatprep.mubr.f32.mxu0 0.0
      %v1367 = vand.u32 %v296, 4294901760
      %1368 = vmatmul.mubr.f32.gmra.mrb[0].mxu0 %v1367
      %v1369 = vpop.f32.mrb[0].mxu0
      %v1370 = vadd.f32 %v1287, %v1369
      %v1371 = vpop.f32.mrb[0].mxu0
      %v1372 = vadd.f32 %v1289, %v1371
      %1373 = vmatprep.mubr.f32.mxu0 0.0
      %v1374 = vand.u32 %v299, 4294901760
      %1375 = vmatmul.mubr.f32.gmra.mrb[0].mxu0 %v1374
      %v1376 = vpop.f32.mrb[0].mxu0
      %v1377 = vadd.f32 %v1294, %v1376
      %v1378 = vpop.f32.mrb[0].mxu0
      %v1379 = vadd.f32 %v1296, %v1378
      %1380 = vdwg.mxu0
      %v1381 = vand.u32 %v269, 4294901760
      %1382 = vmatprep.subr.mxu0 %v1381
      %v1383 = vand.u32 %v268, 4294901760
      %1384 = vmatpush1.msra.mxu0 %v1383
      %v1385 = vand.u32 %v277, 4294901760
      %1386 = vmatprep.subr.mxu0 %v1385
      %v1387 = vand.u32 %v276, 4294901760
      %1388 = vmatpush1.msra.mxu0 %v1387
      %1389 = vmatprep.subr.mxu0 0.0
      %1390 = vmatpush1.msra.mxu0 0.0
      %1391 = vmatprep.subr.mxu0 0.0
      %1392 = vmatpush1.msra.mxu0 0.0
      %1393 = vmatprep.subr.mxu0 0.0
      %1394 = vmatpush1.msra.mxu0 0.0
      %1395 = vmatprep.subr.mxu0 0.0
      %1396 = vmatpush1.msra.mxu0 0.0
      %1397 = vmatprep.subr.mxu0 0.0
      %1398 = vmatpush1.msra.mxu0 0.0
      %1399 = vmatprep.subr.mxu0 0.0
      %1400 = vmatpush1.msra.mxu0 0.0
      %1401 = vmatprep.subr.mxu0 0.0
      %1402 = vmatpush1.msra.mxu0 0.0
      %1403 = vmatprep.subr.mxu0 0.0
      %1404 = vmatpush1.msra.mxu0 0.0
      %1405 = vmatprep.subr.mxu0 0.0
      %1406 = vmatpush1.msra.mxu0 0.0
      %1407 = vmatprep.subr.mxu0 0.0
      %1408 = vmatpush1.msra.mxu0 0.0
      %1409 = vmatprep.subr.mxu0 0.0
      %1410 = vmatpush1.msra.mxu0 0.0
      %1411 = vmatprep.subr.mxu0 0.0
      %1412 = vmatpush1.msra.mxu0 0.0
      %1413 = vmatprep.subr.mxu0 0.0
      %1414 = vmatpush1.msra.mxu0 0.0
      %1415 = vmatprep.subr.mxu0 0.0
      %1416 = vmatpush1.msra.mxu0 0.0
      %1417 = vmatprep.subr.mxu0 0.0
      %1418 = vmatpush1.msra.mxu0 0.0
      %1419 = vmatprep.subr.mxu0 0.0
      %1420 = vmatpush1.msra.mxu0 0.0
      %1421 = vmatprep.subr.mxu0 0.0
      %1422 = vmatpush1.msra.mxu0 0.0
      %1423 = vmatprep.subr.mxu0 0.0
      %1424 = vmatpush1.msra.mxu0 0.0
      %1425 = vmatprep.subr.mxu0 0.0
      %1426 = vmatpush1.msra.mxu0 0.0
      %1427 = vmatprep.subr.mxu0 0.0
      %1428 = vmatpush1.msra.mxu0 0.0
      %1429 = vmatprep.subr.mxu0 0.0
      %1430 = vmatpush1.msra.mxu0 0.0
      %1431 = vmatprep.subr.mxu0 0.0
      %1432 = vmatpush1.msra.mxu0 0.0
      %1433 = vmatprep.subr.mxu0 0.0
      %1434 = vmatpush1.msra.mxu0 0.0
      %1435 = vmatprep.subr.mxu0 0.0
      %1436 = vmatpush1.msra.mxu0 0.0
      %1437 = vmatprep.subr.mxu0 0.0
      %1438 = vmatpush1.msra.mxu0 0.0
      %1439 = vmatprep.subr.mxu0 0.0
      %1440 = vmatpush1.msra.mxu0 0.0
      %1441 = vmatprep.subr.mxu0 0.0
      %1442 = vmatpush1.msra.mxu0 0.0
      %1443 = vmatprep.subr.mxu0 0.0
      %1444 = vmatpush1.msra.mxu0 0.0
      %1445 = vmatprep.subr.mxu0 0.0
      %1446 = vmatpush1.msra.mxu0 0.0
      %1447 = vmatprep.subr.mxu0 0.0
      %1448 = vmatpush1.msra.mxu0 0.0
      %1449 = vmatprep.mubr.f32.mxu0 0.0
      %v1450 = vand.u32 %v296, 4294901760
      %v1451 = vsub.f32 %v296, %v1450
      %v1452 = vand.u32 %v1451, 4294901760
      %v1453 = vsub.f32 %v1451, %v1452
      %v1454 = vand.u32 %v1453, 4294901760
      %1455 = vmatmul.mubr.f32.gmra.mrb[0].mxu0 %v1454
      %v1456 = vpop.f32.mrb[0].mxu0
      %v1457 = vadd.f32 %v287, %v1456
      %v1458 = vpop.f32.mrb[0].mxu0
      %v1459 = vadd.f32 %v287, %v1458
      %1460 = vmatprep.mubr.f32.mxu0 0.0
      %v1461 = vand.u32 %v299, 4294901760
      %v1462 = vsub.f32 %v299, %v1461
      %v1463 = vand.u32 %v1462, 4294901760
      %v1464 = vsub.f32 %v1462, %v1463
      %v1465 = vand.u32 %v1464, 4294901760
      %1466 = vmatmul.mubr.f32.gmra.mrb[0].mxu0 %v1465
      %v1467 = vpop.f32.mrb[0].mxu0
      %v1468 = vadd.f32 %v292, %v1467
      %v1469 = vpop.f32.mrb[0].mxu0
      %v1470 = vadd.f32 %v292, %v1469
      %1471 = vdwg.mxu0
      %v1472 = vand.u32 %v269, 4294901760
      %v1473 = vsub.f32 %v269, %v1472
      %v1474 = vand.u32 %v1473, 4294901760
      %v1475 = vsub.f32 %v1473, %v1474
      %v1476 = vand.u32 %v1475, 4294901760
      %1477 = vmatprep.subr.mxu0 %v1476
      %v1478 = vand.u32 %v268, 4294901760
      %v1479 = vsub.f32 %v268, %v1478
      %v1480 = vand.u32 %v1479, 4294901760
      %v1481 = vsub.f32 %v1479, %v1480
      %v1482 = vand.u32 %v1481, 4294901760
      %1483 = vmatpush1.msra.mxu0 %v1482
      %v1484 = vand.u32 %v277, 4294901760
      %v1485 = vsub.f32 %v277, %v1484
      %v1486 = vand.u32 %v1485, 4294901760
      %v1487 = vsub.f32 %v1485, %v1486
      %v1488 = vand.u32 %v1487, 4294901760
      %1489 = vmatprep.subr.mxu0 %v1488
      %v1490 = vand.u32 %v276, 4294901760
      %v1491 = vsub.f32 %v276, %v1490
      %v1492 = vand.u32 %v1491, 4294901760
      %v1493 = vsub.f32 %v1491, %v1492
      %v1494 = vand.u32 %v1493, 4294901760
      %1495 = vmatpush1.msra.mxu0 %v1494
      %1496 = vmatprep.subr.mxu0 0.0
      %1497 = vmatpush1.msra.mxu0 0.0
      %1498 = vmatprep.subr.mxu0 0.0
      %1499 = vmatpush1.msra.mxu0 0.0
      %1500 = vmatprep.subr.mxu0 0.0
      %1501 = vmatpush1.msra.mxu0 0.0
      %1502 = vmatprep.subr.mxu0 0.0
      %1503 = vmatpush1.msra.mxu0 0.0
      %1504 = vmatprep.subr.mxu0 0.0
      %1505 = vmatpush1.msra.mxu0 0.0
      %1506 = vmatprep.subr.mxu0 0.0
      %1507 = vmatpush1.msra.mxu0 0.0
      %1508 = vmatprep.subr.mxu0 0.0
      %1509 = vmatpush1.msra.mxu0 0.0
      %1510 = vmatprep.subr.mxu0 0.0
      %1511 = vmatpush1.msra.mxu0 0.0
      %1512 = vmatprep.subr.mxu0 0.0
      %1513 = vmatpush1.msra.mxu0 0.0
      %1514 = vmatprep.subr.mxu0 0.0
      %1515 = vmatpush1.msra.mxu0 0.0
      %1516 = vmatprep.subr.mxu0 0.0
      %1517 = vmatpush1.msra.mxu0 0.0
      %1518 = vmatprep.subr.mxu0 0.0
      %1519 = vmatpush1.msra.mxu0 0.0
      %1520 = vmatprep.subr.mxu0 0.0
      %1521 = vmatpush1.msra.mxu0 0.0
      %1522 = vmatprep.subr.mxu0 0.0
      %1523 = vmatpush1.msra.mxu0 0.0
      %1524 = vmatprep.subr.mxu0 0.0
      %1525 = vmatpush1.msra.mxu0 0.0
      %1526 = vmatprep.subr.mxu0 0.0
      %1527 = vmatpush1.msra.mxu0 0.0
      %1528 = vmatprep.subr.mxu0 0.0
      %1529 = vmatpush1.msra.mxu0 0.0
      %1530 = vmatprep.subr.mxu0 0.0
      %1531 = vmatpush1.msra.mxu0 0.0
      %1532 = vmatprep.subr.mxu0 0.0
      %1533 = vmatpush1.msra.mxu0 0.0
      %1534 = vmatprep.subr.mxu0 0.0
      %1535 = vmatpush1.msra.mxu0 0.0
      %1536 = vmatprep.subr.mxu0 0.0
      %1537 = vmatpush1.msra.mxu0 0.0
      %1538 = vmatprep.subr.mxu0 0.0
      %1539 = vmatpush1.msra.mxu0 0.0
      %1540 = vmatprep.subr.mxu0 0.0
      %1541 = vmatpush1.msra.mxu0 0.0
      %1542 = vmatprep.subr.mxu0 0.0
      %1543 = vmatpush1.msra.mxu0 0.0
      %1544 = vmatprep.subr.mxu0 0.0
      %1545 = vmatpush1.msra.mxu0 0.0
      %1546 = vmatprep.subr.mxu0 0.0
      %1547 = vmatpush1.msra.mxu0 0.0
      %1548 = vmatprep.subr.mxu0 0.0
      %1549 = vmatpush1.msra.mxu0 0.0
      %1550 = vmatprep.subr.mxu0 0.0
      %1551 = vmatpush1.msra.mxu0 0.0
      %1552 = vmatprep.subr.mxu0 0.0
      %1553 = vmatpush1.msra.mxu0 0.0
      %1554 = vmatprep.subr.mxu0 0.0
      %1555 = vmatpush1.msra.mxu0 0.0
      %1556 = vmatprep.mubr.f32.mxu0 0.0
      %v1557 = vand.u32 %v296, 4294901760
      %1558 = vmatmul.mubr.f32.gmra.mrb[0].mxu0 %v1557
      %v1559 = vpop.f32.mrb[0].mxu0
      %v1560 = vadd.f32 %v1457, %v1559
      %v1561 = vpop.f32.mrb[0].mxu0
      %v1562 = vadd.f32 %v1459, %v1561
      %1563 = vmatprep.mubr.f32.mxu0 0.0
      %v1564 = vand.u32 %v299, 4294901760
      %1565 = vmatmul.mubr.f32.gmra.mrb[0].mxu0 %v1564
      %v1566 = vpop.f32.mrb[0].mxu0
      %v1567 = vadd.f32 %v1468, %v1566
      %v1568 = vpop.f32.mrb[0].mxu0
      %v1569 = vadd.f32 %v1470, %v1568
      %1570 = vdwg.mxu0
      %v1571 = vand.u32 %v269, 4294901760
      %v1572 = vsub.f32 %v269, %v1571
      %1573 = vmatprep.subr.mxu0 %v1572
      %v1574 = vand.u32 %v268, 4294901760
      %v1575 = vsub.f32 %v268, %v1574
      %1576 = vmatpush1.msra.mxu0 %v1575
      %v1577 = vand.u32 %v277, 4294901760
      %v1578 = vsub.f32 %v277, %v1577
      %1579 = vmatprep.subr.mxu0 %v1578
      %v1580 = vand.u32 %v276, 4294901760
      %v1581 = vsub.f32 %v276, %v1580
      %1582 = vmatpush1.msra.mxu0 %v1581
      %1583 = vmatprep.subr.mxu0 0.0
      %1584 = vmatpush1.msra.mxu0 0.0
      %1585 = vmatprep.subr.mxu0 0.0
      %1586 = vmatpush1.msra.mxu0 0.0
      %1587 = vmatprep.subr.mxu0 0.0
      %1588 = vmatpush1.msra.mxu0 0.0
      %1589 = vmatprep.subr.mxu0 0.0
      %1590 = vmatpush1.msra.mxu0 0.0
      %1591 = vmatprep.subr.mxu0 0.0
      %1592 = vmatpush1.msra.mxu0 0.0
      %1593 = vmatprep.subr.mxu0 0.0
      %1594 = vmatpush1.msra.mxu0 0.0
      %1595 = vmatprep.subr.mxu0 0.0
      %1596 = vmatpush1.msra.mxu0 0.0
      %1597 = vmatprep.subr.mxu0 0.0
      %1598 = vmatpush1.msra.mxu0 0.0
      %1599 = vmatprep.subr.mxu0 0.0
      %1600 = vmatpush1.msra.mxu0 0.0
      %1601 = vmatprep.subr.mxu0 0.0
      %1602 = vmatpush1.msra.mxu0 0.0
      %1603 = vmatprep.subr.mxu0 0.0
      %1604 = vmatpush1.msra.mxu0 0.0
      %1605 = vmatprep.subr.mxu0 0.0
      %1606 = vmatpush1.msra.mxu0 0.0
      %1607 = vmatprep.subr.mxu0 0.0
      %1608 = vmatpush1.msra.mxu0 0.0
      %1609 = vmatprep.subr.mxu0 0.0
      %1610 = vmatpush1.msra.mxu0 0.0
      %1611 = vmatprep.subr.mxu0 0.0
      %1612 = vmatpush1.msra.mxu0 0.0
      %1613 = vmatprep.subr.mxu0 0.0
      %1614 = vmatpush1.msra.mxu0 0.0
      %1615 = vmatprep.subr.mxu0 0.0
      %1616 = vmatpush1.msra.mxu0 0.0
      %1617 = vmatprep.subr.mxu0 0.0
      %1618 = vmatpush1.msra.mxu0 0.0
      %1619 = vmatprep.subr.mxu0 0.0
      %1620 = vmatpush1.msra.mxu0 0.0
      %1621 = vmatprep.subr.mxu0 0.0
      %1622 = vmatpush1.msra.mxu0 0.0
      %1623 = vmatprep.subr.mxu0 0.0
      %1624 = vmatpush1.msra.mxu0 0.0
      %1625 = vmatprep.subr.mxu0 0.0
      %1626 = vmatpush1.msra.mxu0 0.0
      %1627 = vmatprep.subr.mxu0 0.0
      %1628 = vmatpush1.msra.mxu0 0.0
      %1629 = vmatprep.subr.mxu0 0.0
      %1630 = vmatpush1.msra.mxu0 0.0
      %1631 = vmatprep.subr.mxu0 0.0
      %1632 = vmatpush1.msra.mxu0 0.0
      %1633 = vmatprep.subr.mxu0 0.0
      %1634 = vmatpush1.msra.mxu0 0.0
      %1635 = vmatprep.subr.mxu0 0.0
      %1636 = vmatpush1.msra.mxu0 0.0
      %1637 = vmatprep.subr.mxu0 0.0
      %1638 = vmatpush1.msra.mxu0 0.0
      %1639 = vmatprep.subr.mxu0 0.0
      %1640 = vmatpush1.msra.mxu0 0.0
      %1641 = vmatprep.subr.mxu0 0.0
      %1642 = vmatpush1.msra.mxu0 0.0
      %1643 = vmatprep.mubr.f32.mxu0 0.0
      %v1644 = vand.u32 %v296, 4294901760
      %v1645 = vsub.f32 %v296, %v1644
      %1646 = vmatmul.mubr.f32.gmra.mrb[0].mxu0 %v1645
      %v1647 = vpop.f32.mrb[0].mxu0
      %v1648 = vadd.f32 %v1560, %v1647
      %v1649 = vpop.f32.mrb[0].mxu0
      %v1650 = vadd.f32 %v1562, %v1649
      %1651 = vmatprep.mubr.f32.mxu0 0.0
      %v1652 = vand.u32 %v299, 4294901760
      %v1653 = vsub.f32 %v299, %v1652
      %1654 = vmatmul.mubr.f32.gmra.mrb[0].mxu0 %v1653
      %v1655 = vpop.f32.mrb[0].mxu0
      %v1656 = vadd.f32 %v1567, %v1655
      %v1657 = vpop.f32.mrb[0].mxu0
      %v1658 = vadd.f32 %v1569, %v1657
      %1659 = vdwg.mxu0
      %v1660 = vand.u32 %v269, 4294901760
      %1661 = vmatprep.subr.mxu0 %v1660
      %v1662 = vand.u32 %v268, 4294901760
      %1663 = vmatpush1.msra.mxu0 %v1662
      %v1664 = vand.u32 %v277, 4294901760
      %1665 = vmatprep.subr.mxu0 %v1664
      %v1666 = vand.u32 %v276, 4294901760
      %1667 = vmatpush1.msra.mxu0 %v1666
      %1668 = vmatprep.subr.mxu0 0.0
      %1669 = vmatpush1.msra.mxu0 0.0
      %1670 = vmatprep.subr.mxu0 0.0
      %1671 = vmatpush1.msra.mxu0 0.0
      %1672 = vmatprep.subr.mxu0 0.0
      %1673 = vmatpush1.msra.mxu0 0.0
      %1674 = vmatprep.subr.mxu0 0.0
      %1675 = vmatpush1.msra.mxu0 0.0
      %1676 = vmatprep.subr.mxu0 0.0
      %1677 = vmatpush1.msra.mxu0 0.0
      %1678 = vmatprep.subr.mxu0 0.0
      %1679 = vmatpush1.msra.mxu0 0.0
      %1680 = vmatprep.subr.mxu0 0.0
      %1681 = vmatpush1.msra.mxu0 0.0
      %1682 = vmatprep.subr.mxu0 0.0
      %1683 = vmatpush1.msra.mxu0 0.0
      %1684 = vmatprep.subr.mxu0 0.0
      %1685 = vmatpush1.msra.mxu0 0.0
      %1686 = vmatprep.subr.mxu0 0.0
      %1687 = vmatpush1.msra.mxu0 0.0
      %1688 = vmatprep.subr.mxu0 0.0
      %1689 = vmatpush1.msra.mxu0 0.0
      %1690 = vmatprep.subr.mxu0 0.0
      %1691 = vmatpush1.msra.mxu0 0.0
      %1692 = vmatprep.subr.mxu0 0.0
      %1693 = vmatpush1.msra.mxu0 0.0
      %1694 = vmatprep.subr.mxu0 0.0
      %1695 = vmatpush1.msra.mxu0 0.0
      %1696 = vmatprep.subr.mxu0 0.0
      %1697 = vmatpush1.msra.mxu0 0.0
      %1698 = vmatprep.subr.mxu0 0.0
      %1699 = vmatpush1.msra.mxu0 0.0
      %1700 = vmatprep.subr.mxu0 0.0
      %1701 = vmatpush1.msra.mxu0 0.0
      %1702 = vmatprep.subr.mxu0 0.0
      %1703 = vmatpush1.msra.mxu0 0.0
      %1704 = vmatprep.subr.mxu0 0.0
      %1705 = vmatpush1.msra.mxu0 0.0
      %1706 = vmatprep.subr.mxu0 0.0
      %1707 = vmatpush1.msra.mxu0 0.0
      %1708 = vmatprep.subr.mxu0 0.0
      %1709 = vmatpush1.msra.mxu0 0.0
      %1710 = vmatprep.subr.mxu0 0.0
      %1711 = vmatpush1.msra.mxu0 0.0
      %1712 = vmatprep.subr.mxu0 0.0
      %1713 = vmatpush1.msra.mxu0 0.0
      %1714 = vmatprep.subr.mxu0 0.0
      %1715 = vmatpush1.msra.mxu0 0.0
      %1716 = vmatprep.subr.mxu0 0.0
      %1717 = vmatpush1.msra.mxu0 0.0
      %1718 = vmatprep.subr.mxu0 0.0
      %1719 = vmatpush1.msra.mxu0 0.0
      %1720 = vmatprep.subr.mxu0 0.0
      %1721 = vmatpush1.msra.mxu0 0.0
      %1722 = vmatprep.subr.mxu0 0.0
      %1723 = vmatpush1.msra.mxu0 0.0
      %1724 = vmatprep.subr.mxu0 0.0
      %1725 = vmatpush1.msra.mxu0 0.0
      %1726 = vmatprep.subr.mxu0 0.0
      %1727 = vmatpush1.msra.mxu0 0.0
      %1728 = vmatprep.mubr.f32.mxu0 0.0
      %v1729 = vand.u32 %v296, 4294901760
      %v1730 = vsub.f32 %v296, %v1729
      %v1731 = vand.u32 %v1730, 4294901760
      %1732 = vmatmul.mubr.f32.gmra.mrb[0].mxu0 %v1731
      %v1733 = vpop.f32.mrb[0].mxu0
      %v1734 = vadd.f32 %v1648, %v1733
      %v1735 = vpop.f32.mrb[0].mxu0
      %v1736 = vadd.f32 %v1650, %v1735
      %1737 = vmatprep.mubr.f32.mxu0 0.0
      %v1738 = vand.u32 %v299, 4294901760
      %v1739 = vsub.f32 %v299, %v1738
      %v1740 = vand.u32 %v1739, 4294901760
      %1741 = vmatmul.mubr.f32.gmra.mrb[0].mxu0 %v1740
      %v1742 = vpop.f32.mrb[0].mxu0
      %v1743 = vadd.f32 %v1656, %v1742
      %v1744 = vpop.f32.mrb[0].mxu0
      %v1745 = vadd.f32 %v1658, %v1744
      %1746 = vdwg.mxu0
      %v1747 = vand.u32 %v269, 4294901760
      %v1748 = vsub.f32 %v269, %v1747
      %v1749 = vand.u32 %v1748, 4294901760
      %1750 = vmatprep.subr.mxu0 %v1749
      %v1751 = vand.u32 %v268, 4294901760
      %v1752 = vsub.f32 %v268, %v1751
      %v1753 = vand.u32 %v1752, 4294901760
      %1754 = vmatpush1.msra.mxu0 %v1753
      %v1755 = vand.u32 %v277, 4294901760
      %v1756 = vsub.f32 %v277, %v1755
      %v1757 = vand.u32 %v1756, 4294901760
      %1758 = vmatprep.subr.mxu0 %v1757
      %v1759 = vand.u32 %v276, 4294901760
      %v1760 = vsub.f32 %v276, %v1759
      %v1761 = vand.u32 %v1760, 4294901760
      %1762 = vmatpush1.msra.mxu0 %v1761
      %1763 = vmatprep.subr.mxu0 0.0
      %1764 = vmatpush1.msra.mxu0 0.0
      %1765 = vmatprep.subr.mxu0 0.0
      %1766 = vmatpush1.msra.mxu0 0.0
      %1767 = vmatprep.subr.mxu0 0.0
      %1768 = vmatpush1.msra.mxu0 0.0
      %1769 = vmatprep.subr.mxu0 0.0
      %1770 = vmatpush1.msra.mxu0 0.0
      %1771 = vmatprep.subr.mxu0 0.0
      %1772 = vmatpush1.msra.mxu0 0.0
      %1773 = vmatprep.subr.mxu0 0.0
      %1774 = vmatpush1.msra.mxu0 0.0
      %1775 = vmatprep.subr.mxu0 0.0
      %1776 = vmatpush1.msra.mxu0 0.0
      %1777 = vmatprep.subr.mxu0 0.0
      %1778 = vmatpush1.msra.mxu0 0.0
      %1779 = vmatprep.subr.mxu0 0.0
      %1780 = vmatpush1.msra.mxu0 0.0
      %1781 = vmatprep.subr.mxu0 0.0
      %1782 = vmatpush1.msra.mxu0 0.0
      %1783 = vmatprep.subr.mxu0 0.0
      %1784 = vmatpush1.msra.mxu0 0.0
      %1785 = vmatprep.subr.mxu0 0.0
      %1786 = vmatpush1.msra.mxu0 0.0
      %1787 = vmatprep.subr.mxu0 0.0
      %1788 = vmatpush1.msra.mxu0 0.0
      %1789 = vmatprep.subr.mxu0 0.0
      %1790 = vmatpush1.msra.mxu0 0.0
      %1791 = vmatprep.subr.mxu0 0.0
      %1792 = vmatpush1.msra.mxu0 0.0
      %1793 = vmatprep.subr.mxu0 0.0
      %1794 = vmatpush1.msra.mxu0 0.0
      %1795 = vmatprep.subr.mxu0 0.0
      %1796 = vmatpush1.msra.mxu0 0.0
      %1797 = vmatprep.subr.mxu0 0.0
      %1798 = vmatpush1.msra.mxu0 0.0
      %1799 = vmatprep.subr.mxu0 0.0
      %1800 = vmatpush1.msra.mxu0 0.0
      %1801 = vmatprep.subr.mxu0 0.0
      %1802 = vmatpush1.msra.mxu0 0.0
      %1803 = vmatprep.subr.mxu0 0.0
      %1804 = vmatpush1.msra.mxu0 0.0
      %1805 = vmatprep.subr.mxu0 0.0
      %1806 = vmatpush1.msra.mxu0 0.0
      %1807 = vmatprep.subr.mxu0 0.0
      %1808 = vmatpush1.msra.mxu0 0.0
      %1809 = vmatprep.subr.mxu0 0.0
      %1810 = vmatpush1.msra.mxu0 0.0
      %1811 = vmatprep.subr.mxu0 0.0
      %1812 = vmatpush1.msra.mxu0 0.0
      %1813 = vmatprep.subr.mxu0 0.0
      %1814 = vmatpush1.msra.mxu0 0.0
      %1815 = vmatprep.subr.mxu0 0.0
      %1816 = vmatpush1.msra.mxu0 0.0
      %1817 = vmatprep.subr.mxu0 0.0
      %1818 = vmatpush1.msra.mxu0 0.0
      %1819 = vmatprep.subr.mxu0 0.0
      %1820 = vmatpush1.msra.mxu0 0.0
      %1821 = vmatprep.subr.mxu0 0.0
      %1822 = vmatpush1.msra.mxu0 0.0
      %1823 = vmatprep.mubr.f32.mxu0 0.0
      %v1824 = vand.u32 %v296, 4294901760
      %1825 = vmatmul.mubr.f32.gmra.mrb[0].mxu0 %v1824
      %v1826 = vpop.f32.mrb[0].mxu0
      %v1827 = vadd.f32 %v1734, %v1826
      %v1828 = vpop.f32.mrb[0].mxu0
      %v1829 = vadd.f32 %v1736, %v1828
      %1830 = vmatprep.mubr.f32.mxu0 0.0
      %v1831 = vand.u32 %v299, 4294901760
      %1832 = vmatmul.mubr.f32.gmra.mrb[0].mxu0 %v1831
      %v1833 = vpop.f32.mrb[0].mxu0
      %v1834 = vadd.f32 %v1743, %v1833
      %v1835 = vpop.f32.mrb[0].mxu0
      %v1836 = vadd.f32 %v1745, %v1835
      %1837 = vdwg.mxu0
      %v1838 = vand.u32 %v269, 4294901760
      %1839 = vmatprep.subr.mxu0 %v1838
      %v1840 = vand.u32 %v268, 4294901760
      %1841 = vmatpush1.msra.mxu0 %v1840
      %v1842 = vand.u32 %v277, 4294901760
      %1843 = vmatprep.subr.mxu0 %v1842
      %v1844 = vand.u32 %v276, 4294901760
      %1845 = vmatpush1.msra.mxu0 %v1844
      %1846 = vmatprep.subr.mxu0 0.0
      %1847 = vmatpush1.msra.mxu0 0.0
      %1848 = vmatprep.subr.mxu0 0.0
      %1849 = vmatpush1.msra.mxu0 0.0
      %1850 = vmatprep.subr.mxu0 0.0
      %1851 = vmatpush1.msra.mxu0 0.0
      %1852 = vmatprep.subr.mxu0 0.0
      %1853 = vmatpush1.msra.mxu0 0.0
      %1854 = vmatprep.subr.mxu0 0.0
      %1855 = vmatpush1.msra.mxu0 0.0
      %1856 = vmatprep.subr.mxu0 0.0
      %1857 = vmatpush1.msra.mxu0 0.0
      %1858 = vmatprep.subr.mxu0 0.0
      %1859 = vmatpush1.msra.mxu0 0.0
      %1860 = vmatprep.subr.mxu0 0.0
      %1861 = vmatpush1.msra.mxu0 0.0
      %1862 = vmatprep.subr.mxu0 0.0
      %1863 = vmatpush1.msra.mxu0 0.0
      %1864 = vmatprep.subr.mxu0 0.0
      %1865 = vmatpush1.msra.mxu0 0.0
      %1866 = vmatprep.subr.mxu0 0.0
      %1867 = vmatpush1.msra.mxu0 0.0
      %1868 = vmatprep.subr.mxu0 0.0
      %1869 = vmatpush1.msra.mxu0 0.0
      %1870 = vmatprep.subr.mxu0 0.0
      %1871 = vmatpush1.msra.mxu0 0.0
      %1872 = vmatprep.subr.mxu0 0.0
      %1873 = vmatpush1.msra.mxu0 0.0
      %1874 = vmatprep.subr.mxu0 0.0
      %1875 = vmatpush1.msra.mxu0 0.0
      %1876 = vmatprep.subr.mxu0 0.0
      %1877 = vmatpush1.msra.mxu0 0.0
      %1878 = vmatprep.subr.mxu0 0.0
      %1879 = vmatpush1.msra.mxu0 0.0
      %1880 = vmatprep.subr.mxu0 0.0
      %1881 = vmatpush1.msra.mxu0 0.0
      %1882 = vmatprep.subr.mxu0 0.0
      %1883 = vmatpush1.msra.mxu0 0.0
      %1884 = vmatprep.subr.mxu0 0.0
      %1885 = vmatpush1.msra.mxu0 0.0
      %1886 = vmatprep.subr.mxu0 0.0
      %1887 = vmatpush1.msra.mxu0 0.0
      %1888 = vmatprep.subr.mxu0 0.0
      %1889 = vmatpush1.msra.mxu0 0.0
      %1890 = vmatprep.subr.mxu0 0.0
      %1891 = vmatpush1.msra.mxu0 0.0
      %1892 = vmatprep.subr.mxu0 0.0
      %1893 = vmatpush1.msra.mxu0 0.0
      %1894 = vmatprep.subr.mxu0 0.0
      %1895 = vmatpush1.msra.mxu0 0.0
      %1896 = vmatprep.subr.mxu0 0.0
      %1897 = vmatpush1.msra.mxu0 0.0
      %1898 = vmatprep.subr.mxu0 0.0
      %1899 = vmatpush1.msra.mxu0 0.0
      %1900 = vmatprep.subr.mxu0 0.0
      %1901 = vmatpush1.msra.mxu0 0.0
      %1902 = vmatprep.subr.mxu0 0.0
      %1903 = vmatpush1.msra.mxu0 0.0
      %1904 = vmatprep.subr.mxu0 0.0
      %1905 = vmatpush1.msra.mxu0 0.0
      %1906 = vmatprep.mubr.f32.mxu0 0.0
      %v1907 = vand.u32 %v296, 4294901760
      %1908 = vmatmul.mubr.f32.gmra.mrb[0].mxu0 %v1907
      %v1909 = vpop.f32.mrb[0].mxu0
      %v1910 = vadd.f32 %v1827, %v1909
      %v1911 = vpop.f32.mrb[0].mxu0
      %v1912 = vadd.f32 %v1829, %v1911
      %1913 = vmatprep.mubr.f32.mxu0 0.0
      %v1914 = vand.u32 %v299, 4294901760
      %1915 = vmatmul.mubr.f32.gmra.mrb[0].mxu0 %v1914
      %v1916 = vpop.f32.mrb[0].mxu0
      %v1917 = vadd.f32 %v1834, %v1916
      %v1918 = vpop.f32.mrb[0].mxu0
      %v1919 = vadd.f32 %v1836, %v1918
      %1920 = vdwg.mxu0
      %v1921 = vand.u32 %v271, 4294901760
      %1922 = vmatprep.subr.mxu0 %v1921
      %v1923 = vand.u32 %v270, 4294901760
      %1924 = vmatpush1.msra.mxu0 %v1923
      %v1925 = vand.u32 %v279, 4294901760
      %1926 = vmatprep.subr.mxu0 %v1925
      %v1927 = vand.u32 %v278, 4294901760
      %1928 = vmatpush1.msra.mxu0 %v1927
      %1929 = vmatprep.subr.mxu0 0.0
      %1930 = vmatpush1.msra.mxu0 0.0
      %1931 = vmatprep.subr.mxu0 0.0
      %1932 = vmatpush1.msra.mxu0 0.0
      %1933 = vmatprep.subr.mxu0 0.0
      %1934 = vmatpush1.msra.mxu0 0.0
      %1935 = vmatprep.subr.mxu0 0.0
      %1936 = vmatpush1.msra.mxu0 0.0
      %1937 = vmatprep.subr.mxu0 0.0
      %1938 = vmatpush1.msra.mxu0 0.0
      %1939 = vmatprep.subr.mxu0 0.0
      %1940 = vmatpush1.msra.mxu0 0.0
      %1941 = vmatprep.subr.mxu0 0.0
      %1942 = vmatpush1.msra.mxu0 0.0
      %1943 = vmatprep.subr.mxu0 0.0
      %1944 = vmatpush1.msra.mxu0 0.0
      %1945 = vmatprep.subr.mxu0 0.0
      %1946 = vmatpush1.msra.mxu0 0.0
      %1947 = vmatprep.subr.mxu0 0.0
      %1948 = vmatpush1.msra.mxu0 0.0
      %1949 = vmatprep.subr.mxu0 0.0
      %1950 = vmatpush1.msra.mxu0 0.0
      %1951 = vmatprep.subr.mxu0 0.0
      %1952 = vmatpush1.msra.mxu0 0.0
      %1953 = vmatprep.subr.mxu0 0.0
      %1954 = vmatpush1.msra.mxu0 0.0
      %1955 = vmatprep.subr.mxu0 0.0
      %1956 = vmatpush1.msra.mxu0 0.0
      %1957 = vmatprep.subr.mxu0 0.0
      %1958 = vmatpush1.msra.mxu0 0.0
      %1959 = vmatprep.subr.mxu0 0.0
      %1960 = vmatpush1.msra.mxu0 0.0
      %1961 = vmatprep.subr.mxu0 0.0
      %1962 = vmatpush1.msra.mxu0 0.0
      %1963 = vmatprep.subr.mxu0 0.0
      %1964 = vmatpush1.msra.mxu0 0.0
      %1965 = vmatprep.subr.mxu0 0.0
      %1966 = vmatpush1.msra.mxu0 0.0
      %1967 = vmatprep.subr.mxu0 0.0
      %1968 = vmatpush1.msra.mxu0 0.0
      %1969 = vmatprep.subr.mxu0 0.0
      %1970 = vmatpush1.msra.mxu0 0.0
      %1971 = vmatprep.subr.mxu0 0.0
      %1972 = vmatpush1.msra.mxu0 0.0
      %1973 = vmatprep.subr.mxu0 0.0
      %1974 = vmatpush1.msra.mxu0 0.0
      %1975 = vmatprep.subr.mxu0 0.0
      %1976 = vmatpush1.msra.mxu0 0.0
      %1977 = vmatprep.subr.mxu0 0.0
      %1978 = vmatpush1.msra.mxu0 0.0
      %1979 = vmatprep.subr.mxu0 0.0
      %1980 = vmatpush1.msra.mxu0 0.0
      %1981 = vmatprep.subr.mxu0 0.0
      %1982 = vmatpush1.msra.mxu0 0.0
      %1983 = vmatprep.subr.mxu0 0.0
      %1984 = vmatpush1.msra.mxu0 0.0
      %1985 = vmatprep.subr.mxu0 0.0
      %1986 = vmatpush1.msra.mxu0 0.0
      %1987 = vmatprep.subr.mxu0 0.0
      %1988 = vmatpush1.msra.mxu0 0.0
      %1989 = vmatprep.mubr.f32.mxu0 0.0
      %v1990 = vand.u32 %v296, 4294901760
      %v1991 = vsub.f32 %v296, %v1990
      %v1992 = vand.u32 %v1991, 4294901760
      %v1993 = vsub.f32 %v1991, %v1992
      %v1994 = vand.u32 %v1993, 4294901760
      %1995 = vmatmul.mubr.f32.gmra.mrb[0].mxu0 %v1994
      %v1996 = vpop.f32.mrb[0].mxu0
      %v1997 = vadd.f32 %v287, %v1996
      %v1998 = vpop.f32.mrb[0].mxu0
      %v1999 = vadd.f32 %v287, %v1998
      %2000 = vmatprep.mubr.f32.mxu0 0.0
      %v2001 = vand.u32 %v299, 4294901760
      %v2002 = vsub.f32 %v299, %v2001
      %v2003 = vand.u32 %v2002, 4294901760
      %v2004 = vsub.f32 %v2002, %v2003
      %v2005 = vand.u32 %v2004, 4294901760
      %2006 = vmatmul.mubr.f32.gmra.mrb[0].mxu0 %v2005
      %v2007 = vpop.f32.mrb[0].mxu0
      %v2008 = vadd.f32 %v292, %v2007
      %v2009 = vpop.f32.mrb[0].mxu0
      %v2010 = vadd.f32 %v292, %v2009
      %2011 = vdwg.mxu0
      %v2012 = vand.u32 %v271, 4294901760
      %v2013 = vsub.f32 %v271, %v2012
      %v2014 = vand.u32 %v2013, 4294901760
      %v2015 = vsub.f32 %v2013, %v2014
      %v2016 = vand.u32 %v2015, 4294901760
      %2017 = vmatprep.subr.mxu0 %v2016
      %v2018 = vand.u32 %v270, 4294901760
      %v2019 = vsub.f32 %v270, %v2018
      %v2020 = vand.u32 %v2019, 4294901760
      %v2021 = vsub.f32 %v2019, %v2020
      %v2022 = vand.u32 %v2021, 4294901760
      %2023 = vmatpush1.msra.mxu0 %v2022
      %v2024 = vand.u32 %v279, 4294901760
      %v2025 = vsub.f32 %v279, %v2024
      %v2026 = vand.u32 %v2025, 4294901760
      %v2027 = vsub.f32 %v2025, %v2026
      %v2028 = vand.u32 %v2027, 4294901760
      %2029 = vmatprep.subr.mxu0 %v2028
      %v2030 = vand.u32 %v278, 4294901760
      %v2031 = vsub.f32 %v278, %v2030
      %v2032 = vand.u32 %v2031, 4294901760
      %v2033 = vsub.f32 %v2031, %v2032
      %v2034 = vand.u32 %v2033, 4294901760
      %2035 = vmatpush1.msra.mxu0 %v2034
      %2036 = vmatprep.subr.mxu0 0.0
      %2037 = vmatpush1.msra.mxu0 0.0
      %2038 = vmatprep.subr.mxu0 0.0
      %2039 = vmatpush1.msra.mxu0 0.0
      %2040 = vmatprep.subr.mxu0 0.0
      %2041 = vmatpush1.msra.mxu0 0.0
      %2042 = vmatprep.subr.mxu0 0.0
      %2043 = vmatpush1.msra.mxu0 0.0
      %2044 = vmatprep.subr.mxu0 0.0
      %2045 = vmatpush1.msra.mxu0 0.0
      %2046 = vmatprep.subr.mxu0 0.0
      %2047 = vmatpush1.msra.mxu0 0.0
      %2048 = vmatprep.subr.mxu0 0.0
      %2049 = vmatpush1.msra.mxu0 0.0
      %2050 = vmatprep.subr.mxu0 0.0
      %2051 = vmatpush1.msra.mxu0 0.0
      %2052 = vmatprep.subr.mxu0 0.0
      %2053 = vmatpush1.msra.mxu0 0.0
      %2054 = vmatprep.subr.mxu0 0.0
      %2055 = vmatpush1.msra.mxu0 0.0
      %2056 = vmatprep.subr.mxu0 0.0
      %2057 = vmatpush1.msra.mxu0 0.0
      %2058 = vmatprep.subr.mxu0 0.0
      %2059 = vmatpush1.msra.mxu0 0.0
      %2060 = vmatprep.subr.mxu0 0.0
      %2061 = vmatpush1.msra.mxu0 0.0
      %2062 = vmatprep.subr.mxu0 0.0
      %2063 = vmatpush1.msra.mxu0 0.0
      %2064 = vmatprep.subr.mxu0 0.0
      %2065 = vmatpush1.msra.mxu0 0.0
      %2066 = vmatprep.subr.mxu0 0.0
      %2067 = vmatpush1.msra.mxu0 0.0
      %2068 = vmatprep.subr.mxu0 0.0
      %2069 = vmatpush1.msra.mxu0 0.0
      %2070 = vmatprep.subr.mxu0 0.0
      %2071 = vmatpush1.msra.mxu0 0.0
      %2072 = vmatprep.subr.mxu0 0.0
      %2073 = vmatpush1.msra.mxu0 0.0
      %2074 = vmatprep.subr.mxu0 0.0
      %2075 = vmatpush1.msra.mxu0 0.0
      %2076 = vmatprep.subr.mxu0 0.0
      %2077 = vmatpush1.msra.mxu0 0.0
      %2078 = vmatprep.subr.mxu0 0.0
      %2079 = vmatpush1.msra.mxu0 0.0
      %2080 = vmatprep.subr.mxu0 0.0
      %2081 = vmatpush1.msra.mxu0 0.0
      %2082 = vmatprep.subr.mxu0 0.0
      %2083 = vmatpush1.msra.mxu0 0.0
      %2084 = vmatprep.subr.mxu0 0.0
      %2085 = vmatpush1.msra.mxu0 0.0
      %2086 = vmatprep.subr.mxu0 0.0
      %2087 = vmatpush1.msra.mxu0 0.0
      %2088 = vmatprep.subr.mxu0 0.0
      %2089 = vmatpush1.msra.mxu0 0.0
      %2090 = vmatprep.subr.mxu0 0.0
      %2091 = vmatpush1.msra.mxu0 0.0
      %2092 = vmatprep.subr.mxu0 0.0
      %2093 = vmatpush1.msra.mxu0 0.0
      %2094 = vmatprep.subr.mxu0 0.0
      %2095 = vmatpush1.msra.mxu0 0.0
      %2096 = vmatprep.mubr.f32.mxu0 0.0
      %v2097 = vand.u32 %v296, 4294901760
      %2098 = vmatmul.mubr.f32.gmra.mrb[0].mxu0 %v2097
      %v2099 = vpop.f32.mrb[0].mxu0
      %v2100 = vadd.f32 %v1997, %v2099
      %v2101 = vpop.f32.mrb[0].mxu0
      %v2102 = vadd.f32 %v1999, %v2101
      %2103 = vmatprep.mubr.f32.mxu0 0.0
      %v2104 = vand.u32 %v299, 4294901760
      %2105 = vmatmul.mubr.f32.gmra.mrb[0].mxu0 %v2104
      %v2106 = vpop.f32.mrb[0].mxu0
      %v2107 = vadd.f32 %v2008, %v2106
      %v2108 = vpop.f32.mrb[0].mxu0
      %v2109 = vadd.f32 %v2010, %v2108
      %2110 = vdwg.mxu0
      %v2111 = vand.u32 %v271, 4294901760
      %v2112 = vsub.f32 %v271, %v2111
      %2113 = vmatprep.subr.mxu0 %v2112
      %v2114 = vand.u32 %v270, 4294901760
      %v2115 = vsub.f32 %v270, %v2114
      %2116 = vmatpush1.msra.mxu0 %v2115
      %v2117 = vand.u32 %v279, 4294901760
      %v2118 = vsub.f32 %v279, %v2117
      %2119 = vmatprep.subr.mxu0 %v2118
      %v2120 = vand.u32 %v278, 4294901760
      %v2121 = vsub.f32 %v278, %v2120
      %2122 = vmatpush1.msra.mxu0 %v2121
      %2123 = vmatprep.subr.mxu0 0.0
      %2124 = vmatpush1.msra.mxu0 0.0
      %2125 = vmatprep.subr.mxu0 0.0
      %2126 = vmatpush1.msra.mxu0 0.0
      %2127 = vmatprep.subr.mxu0 0.0
      %2128 = vmatpush1.msra.mxu0 0.0
      %2129 = vmatprep.subr.mxu0 0.0
      %2130 = vmatpush1.msra.mxu0 0.0
      %2131 = vmatprep.subr.mxu0 0.0
      %2132 = vmatpush1.msra.mxu0 0.0
      %2133 = vmatprep.subr.mxu0 0.0
      %2134 = vmatpush1.msra.mxu0 0.0
      %2135 = vmatprep.subr.mxu0 0.0
      %2136 = vmatpush1.msra.mxu0 0.0
      %2137 = vmatprep.subr.mxu0 0.0
      %2138 = vmatpush1.msra.mxu0 0.0
      %2139 = vmatprep.subr.mxu0 0.0
      %2140 = vmatpush1.msra.mxu0 0.0
      %2141 = vmatprep.subr.mxu0 0.0
      %2142 = vmatpush1.msra.mxu0 0.0
      %2143 = vmatprep.subr.mxu0 0.0
      %2144 = vmatpush1.msra.mxu0 0.0
      %2145 = vmatprep.subr.mxu0 0.0
      %2146 = vmatpush1.msra.mxu0 0.0
      %2147 = vmatprep.subr.mxu0 0.0
      %2148 = vmatpush1.msra.mxu0 0.0
      %2149 = vmatprep.subr.mxu0 0.0
      %2150 = vmatpush1.msra.mxu0 0.0
      %2151 = vmatprep.subr.mxu0 0.0
      %2152 = vmatpush1.msra.mxu0 0.0
      %2153 = vmatprep.subr.mxu0 0.0
      %2154 = vmatpush1.msra.mxu0 0.0
      %2155 = vmatprep.subr.mxu0 0.0
      %2156 = vmatpush1.msra.mxu0 0.0
      %2157 = vmatprep.subr.mxu0 0.0
      %2158 = vmatpush1.msra.mxu0 0.0
      %2159 = vmatprep.subr.mxu0 0.0
      %2160 = vmatpush1.msra.mxu0 0.0
      %2161 = vmatprep.subr.mxu0 0.0
      %2162 = vmatpush1.msra.mxu0 0.0
      %2163 = vmatprep.subr.mxu0 0.0
      %2164 = vmatpush1.msra.mxu0 0.0
      %2165 = vmatprep.subr.mxu0 0.0
      %2166 = vmatpush1.msra.mxu0 0.0
      %2167 = vmatprep.subr.mxu0 0.0
      %2168 = vmatpush1.msra.mxu0 0.0
      %2169 = vmatprep.subr.mxu0 0.0
      %2170 = vmatpush1.msra.mxu0 0.0
      %2171 = vmatprep.subr.mxu0 0.0
      %2172 = vmatpush1.msra.mxu0 0.0
      %2173 = vmatprep.subr.mxu0 0.0
      %2174 = vmatpush1.msra.mxu0 0.0
      %2175 = vmatprep.subr.mxu0 0.0
      %2176 = vmatpush1.msra.mxu0 0.0
      %2177 = vmatprep.subr.mxu0 0.0
      %2178 = vmatpush1.msra.mxu0 0.0
      %2179 = vmatprep.subr.mxu0 0.0
      %2180 = vmatpush1.msra.mxu0 0.0
      %2181 = vmatprep.subr.mxu0 0.0
      %2182 = vmatpush1.msra.mxu0 0.0
      %2183 = vmatprep.mubr.f32.mxu0 0.0
      %v2184 = vand.u32 %v296, 4294901760
      %v2185 = vsub.f32 %v296, %v2184
      %2186 = vmatmul.mubr.f32.gmra.mrb[0].mxu0 %v2185
      %v2187 = vpop.f32.mrb[0].mxu0
      %v2188 = vadd.f32 %v2100, %v2187
      %v2189 = vpop.f32.mrb[0].mxu0
      %v2190 = vadd.f32 %v2102, %v2189
      %2191 = vmatprep.mubr.f32.mxu0 0.0
      %v2192 = vand.u32 %v299, 4294901760
      %v2193 = vsub.f32 %v299, %v2192
      %2194 = vmatmul.mubr.f32.gmra.mrb[0].mxu0 %v2193
      %v2195 = vpop.f32.mrb[0].mxu0
      %v2196 = vadd.f32 %v2107, %v2195
      %v2197 = vpop.f32.mrb[0].mxu0
      %v2198 = vadd.f32 %v2109, %v2197
      %2199 = vdwg.mxu0
      %v2200 = vand.u32 %v271, 4294901760
      %2201 = vmatprep.subr.mxu0 %v2200
      %v2202 = vand.u32 %v270, 4294901760
      %2203 = vmatpush1.msra.mxu0 %v2202
      %v2204 = vand.u32 %v279, 4294901760
      %2205 = vmatprep.subr.mxu0 %v2204
      %v2206 = vand.u32 %v278, 4294901760
      %2207 = vmatpush1.msra.mxu0 %v2206
      %2208 = vmatprep.subr.mxu0 0.0
      %2209 = vmatpush1.msra.mxu0 0.0
      %2210 = vmatprep.subr.mxu0 0.0
      %2211 = vmatpush1.msra.mxu0 0.0
      %2212 = vmatprep.subr.mxu0 0.0
      %2213 = vmatpush1.msra.mxu0 0.0
      %2214 = vmatprep.subr.mxu0 0.0
      %2215 = vmatpush1.msra.mxu0 0.0
      %2216 = vmatprep.subr.mxu0 0.0
      %2217 = vmatpush1.msra.mxu0 0.0
      %2218 = vmatprep.subr.mxu0 0.0
      %2219 = vmatpush1.msra.mxu0 0.0
      %2220 = vmatprep.subr.mxu0 0.0
      %2221 = vmatpush1.msra.mxu0 0.0
      %2222 = vmatprep.subr.mxu0 0.0
      %2223 = vmatpush1.msra.mxu0 0.0
      %2224 = vmatprep.subr.mxu0 0.0
      %2225 = vmatpush1.msra.mxu0 0.0
      %2226 = vmatprep.subr.mxu0 0.0
      %2227 = vmatpush1.msra.mxu0 0.0
      %2228 = vmatprep.subr.mxu0 0.0
      %2229 = vmatpush1.msra.mxu0 0.0
      %2230 = vmatprep.subr.mxu0 0.0
      %2231 = vmatpush1.msra.mxu0 0.0
      %2232 = vmatprep.subr.mxu0 0.0
      %2233 = vmatpush1.msra.mxu0 0.0
      %2234 = vmatprep.subr.mxu0 0.0
      %2235 = vmatpush1.msra.mxu0 0.0
      %2236 = vmatprep.subr.mxu0 0.0
      %2237 = vmatpush1.msra.mxu0 0.0
      %2238 = vmatprep.subr.mxu0 0.0
      %2239 = vmatpush1.msra.mxu0 0.0
      %2240 = vmatprep.subr.mxu0 0.0
      %2241 = vmatpush1.msra.mxu0 0.0
      %2242 = vmatprep.subr.mxu0 0.0
      %2243 = vmatpush1.msra.mxu0 0.0
      %2244 = vmatprep.subr.mxu0 0.0
      %2245 = vmatpush1.msra.mxu0 0.0
      %2246 = vmatprep.subr.mxu0 0.0
      %2247 = vmatpush1.msra.mxu0 0.0
      %2248 = vmatprep.subr.mxu0 0.0
      %2249 = vmatpush1.msra.mxu0 0.0
      %2250 = vmatprep.subr.mxu0 0.0
      %2251 = vmatpush1.msra.mxu0 0.0
      %2252 = vmatprep.subr.mxu0 0.0
      %2253 = vmatpush1.msra.mxu0 0.0
      %2254 = vmatprep.subr.mxu0 0.0
      %2255 = vmatpush1.msra.mxu0 0.0
      %2256 = vmatprep.subr.mxu0 0.0
      %2257 = vmatpush1.msra.mxu0 0.0
      %2258 = vmatprep.subr.mxu0 0.0
      %2259 = vmatpush1.msra.mxu0 0.0
      %2260 = vmatprep.subr.mxu0 0.0
      %2261 = vmatpush1.msra.mxu0 0.0
      %2262 = vmatprep.subr.mxu0 0.0
      %2263 = vmatpush1.msra.mxu0 0.0
      %2264 = vmatprep.subr.mxu0 0.0
      %2265 = vmatpush1.msra.mxu0 0.0
      %2266 = vmatprep.subr.mxu0 0.0
      %2267 = vmatpush1.msra.mxu0 0.0
      %2268 = vmatprep.mubr.f32.mxu0 0.0
      %v2269 = vand.u32 %v296, 4294901760
      %v2270 = vsub.f32 %v296, %v2269
      %v2271 = vand.u32 %v2270, 4294901760
      %2272 = vmatmul.mubr.f32.gmra.mrb[0].mxu0 %v2271
      %v2273 = vpop.f32.mrb[0].mxu0
      %v2274 = vadd.f32 %v2188, %v2273
      %v2275 = vpop.f32.mrb[0].mxu0
      %v2276 = vadd.f32 %v2190, %v2275
      %2277 = vmatprep.mubr.f32.mxu0 0.0
      %v2278 = vand.u32 %v299, 4294901760
      %v2279 = vsub.f32 %v299, %v2278
      %v2280 = vand.u32 %v2279, 4294901760
      %2281 = vmatmul.mubr.f32.gmra.mrb[0].mxu0 %v2280
      %v2282 = vpop.f32.mrb[0].mxu0
      %v2283 = vadd.f32 %v2196, %v2282
      %v2284 = vpop.f32.mrb[0].mxu0
      %v2285 = vadd.f32 %v2198, %v2284
      %2286 = vdwg.mxu0
      %v2287 = vand.u32 %v271, 4294901760
      %v2288 = vsub.f32 %v271, %v2287
      %v2289 = vand.u32 %v2288, 4294901760
      %2290 = vmatprep.subr.mxu0 %v2289
      %v2291 = vand.u32 %v270, 4294901760
      %v2292 = vsub.f32 %v270, %v2291
      %v2293 = vand.u32 %v2292, 4294901760
      %2294 = vmatpush1.msra.mxu0 %v2293
      %v2295 = vand.u32 %v279, 4294901760
      %v2296 = vsub.f32 %v279, %v2295
      %v2297 = vand.u32 %v2296, 4294901760
      %2298 = vmatprep.subr.mxu0 %v2297
      %v2299 = vand.u32 %v278, 4294901760
      %v2300 = vsub.f32 %v278, %v2299
      %v2301 = vand.u32 %v2300, 4294901760
      %2302 = vmatpush1.msra.mxu0 %v2301
      %2303 = vmatprep.subr.mxu0 0.0
      %2304 = vmatpush1.msra.mxu0 0.0
      %2305 = vmatprep.subr.mxu0 0.0
      %2306 = vmatpush1.msra.mxu0 0.0
      %2307 = vmatprep.subr.mxu0 0.0
      %2308 = vmatpush1.msra.mxu0 0.0
      %2309 = vmatprep.subr.mxu0 0.0
      %2310 = vmatpush1.msra.mxu0 0.0
      %2311 = vmatprep.subr.mxu0 0.0
      %2312 = vmatpush1.msra.mxu0 0.0
      %2313 = vmatprep.subr.mxu0 0.0
      %2314 = vmatpush1.msra.mxu0 0.0
      %2315 = vmatprep.subr.mxu0 0.0
      %2316 = vmatpush1.msra.mxu0 0.0
      %2317 = vmatprep.subr.mxu0 0.0
      %2318 = vmatpush1.msra.mxu0 0.0
      %2319 = vmatprep.subr.mxu0 0.0
      %2320 = vmatpush1.msra.mxu0 0.0
      %2321 = vmatprep.subr.mxu0 0.0
      %2322 = vmatpush1.msra.mxu0 0.0
      %2323 = vmatprep.subr.mxu0 0.0
      %2324 = vmatpush1.msra.mxu0 0.0
      %2325 = vmatprep.subr.mxu0 0.0
      %2326 = vmatpush1.msra.mxu0 0.0
      %2327 = vmatprep.subr.mxu0 0.0
      %2328 = vmatpush1.msra.mxu0 0.0
      %2329 = vmatprep.subr.mxu0 0.0
      %2330 = vmatpush1.msra.mxu0 0.0
      %2331 = vmatprep.subr.mxu0 0.0
      %2332 = vmatpush1.msra.mxu0 0.0
      %2333 = vmatprep.subr.mxu0 0.0
      %2334 = vmatpush1.msra.mxu0 0.0
      %2335 = vmatprep.subr.mxu0 0.0
      %2336 = vmatpush1.msra.mxu0 0.0
      %2337 = vmatprep.subr.mxu0 0.0
      %2338 = vmatpush1.msra.mxu0 0.0
      %2339 = vmatprep.subr.mxu0 0.0
      %2340 = vmatpush1.msra.mxu0 0.0
      %2341 = vmatprep.subr.mxu0 0.0
      %2342 = vmatpush1.msra.mxu0 0.0
      %2343 = vmatprep.subr.mxu0 0.0
      %2344 = vmatpush1.msra.mxu0 0.0
      %2345 = vmatprep.subr.mxu0 0.0
      %2346 = vmatpush1.msra.mxu0 0.0
      %2347 = vmatprep.subr.mxu0 0.0
      %2348 = vmatpush1.msra.mxu0 0.0
      %2349 = vmatprep.subr.mxu0 0.0
      %2350 = vmatpush1.msra.mxu0 0.0
      %2351 = vmatprep.subr.mxu0 0.0
      %2352 = vmatpush1.msra.mxu0 0.0
      %2353 = vmatprep.subr.mxu0 0.0
      %2354 = vmatpush1.msra.mxu0 0.0
      %2355 = vmatprep.subr.mxu0 0.0
      %2356 = vmatpush1.msra.mxu0 0.0
      %2357 = vmatprep.subr.mxu0 0.0
      %2358 = vmatpush1.msra.mxu0 0.0
      %2359 = vmatprep.subr.mxu0 0.0
      %2360 = vmatpush1.msra.mxu0 0.0
      %2361 = vmatprep.subr.mxu0 0.0
      %2362 = vmatpush1.msra.mxu0 0.0
      %2363 = vmatprep.mubr.f32.mxu0 0.0
      %v2364 = vand.u32 %v296, 4294901760
      %2365 = vmatmul.mubr.f32.gmra.mrb[0].mxu0 %v2364
      %v2366 = vpop.f32.mrb[0].mxu0
      %v2367 = vadd.f32 %v2274, %v2366
      %v2368 = vpop.f32.mrb[0].mxu0
      %v2369 = vadd.f32 %v2276, %v2368
      %2370 = vmatprep.mubr.f32.mxu0 0.0
      %v2371 = vand.u32 %v299, 4294901760
      %2372 = vmatmul.mubr.f32.gmra.mrb[0].mxu0 %v2371
      %v2373 = vpop.f32.mrb[0].mxu0
      %v2374 = vadd.f32 %v2283, %v2373
      %v2375 = vpop.f32.mrb[0].mxu0
      %v2376 = vadd.f32 %v2285, %v2375
      %2377 = vdwg.mxu0
      %v2378 = vand.u32 %v271, 4294901760
      %2379 = vmatprep.subr.mxu0 %v2378
      %v2380 = vand.u32 %v270, 4294901760
      %2381 = vmatpush1.msra.mxu0 %v2380
      %v2382 = vand.u32 %v279, 4294901760
      %2383 = vmatprep.subr.mxu0 %v2382
      %v2384 = vand.u32 %v278, 4294901760
      %2385 = vmatpush1.msra.mxu0 %v2384
      %2386 = vmatprep.subr.mxu0 0.0
      %2387 = vmatpush1.msra.mxu0 0.0
      %2388 = vmatprep.subr.mxu0 0.0
      %2389 = vmatpush1.msra.mxu0 0.0
      %2390 = vmatprep.subr.mxu0 0.0
      %2391 = vmatpush1.msra.mxu0 0.0
      %2392 = vmatprep.subr.mxu0 0.0
      %2393 = vmatpush1.msra.mxu0 0.0
      %2394 = vmatprep.subr.mxu0 0.0
      %2395 = vmatpush1.msra.mxu0 0.0
      %2396 = vmatprep.subr.mxu0 0.0
      %2397 = vmatpush1.msra.mxu0 0.0
      %2398 = vmatprep.subr.mxu0 0.0
      %2399 = vmatpush1.msra.mxu0 0.0
      %2400 = vmatprep.subr.mxu0 0.0
      %2401 = vmatpush1.msra.mxu0 0.0
      %2402 = vmatprep.subr.mxu0 0.0
      %2403 = vmatpush1.msra.mxu0 0.0
      %2404 = vmatprep.subr.mxu0 0.0
      %2405 = vmatpush1.msra.mxu0 0.0
      %2406 = vmatprep.subr.mxu0 0.0
      %2407 = vmatpush1.msra.mxu0 0.0
      %2408 = vmatprep.subr.mxu0 0.0
      %2409 = vmatpush1.msra.mxu0 0.0
      %2410 = vmatprep.subr.mxu0 0.0
      %2411 = vmatpush1.msra.mxu0 0.0
      %2412 = vmatprep.subr.mxu0 0.0
      %2413 = vmatpush1.msra.mxu0 0.0
      %2414 = vmatprep.subr.mxu0 0.0
      %2415 = vmatpush1.msra.mxu0 0.0
      %2416 = vmatprep.subr.mxu0 0.0
      %2417 = vmatpush1.msra.mxu0 0.0
      %2418 = vmatprep.subr.mxu0 0.0
      %2419 = vmatpush1.msra.mxu0 0.0
      %2420 = vmatprep.subr.mxu0 0.0
      %2421 = vmatpush1.msra.mxu0 0.0
      %2422 = vmatprep.subr.mxu0 0.0
      %2423 = vmatpush1.msra.mxu0 0.0
      %2424 = vmatprep.subr.mxu0 0.0
      %2425 = vmatpush1.msra.mxu0 0.0
      %2426 = vmatprep.subr.mxu0 0.0
      %2427 = vmatpush1.msra.mxu0 0.0
      %2428 = vmatprep.subr.mxu0 0.0
      %2429 = vmatpush1.msra.mxu0 0.0
      %2430 = vmatprep.subr.mxu0 0.0
      %2431 = vmatpush1.msra.mxu0 0.0
      %2432 = vmatprep.subr.mxu0 0.0
      %2433 = vmatpush1.msra.mxu0 0.0
      %2434 = vmatprep.subr.mxu0 0.0
      %2435 = vmatpush1.msra.mxu0 0.0
      %2436 = vmatprep.subr.mxu0 0.0
      %2437 = vmatpush1.msra.mxu0 0.0
      %2438 = vmatprep.subr.mxu0 0.0
      %2439 = vmatpush1.msra.mxu0 0.0
      %2440 = vmatprep.subr.mxu0 0.0
      %2441 = vmatpush1.msra.mxu0 0.0
      %2442 = vmatprep.subr.mxu0 0.0
      %2443 = vmatpush1.msra.mxu0 0.0
      %2444 = vmatprep.subr.mxu0 0.0
      %2445 = vmatpush1.msra.mxu0 0.0
      %2446 = vmatprep.mubr.f32.mxu0 0.0
      %v2447 = vand.u32 %v296, 4294901760
      %2448 = vmatmul.mubr.f32.gmra.mrb[0].mxu0 %v2447
      %v2449 = vpop.f32.mrb[0].mxu0
      %v2450 = vadd.f32 %v2367, %v2449
      %v2451 = vpop.f32.mrb[0].mxu0
      %v2452 = vadd.f32 %v2369, %v2451
      %2453 = vmatprep.mubr.f32.mxu0 0.0
      %v2454 = vand.u32 %v299, 4294901760
      %2455 = vmatmul.mubr.f32.gmra.mrb[0].mxu0 %v2454
      %v2456 = vpop.f32.mrb[0].mxu0
      %v2457 = vadd.f32 %v2374, %v2456
      %v2458 = vpop.f32.mrb[0].mxu0
      %v2459 = vadd.f32 %v2376, %v2458
      %2460 = vdwg.mxu0
      %v2461 = vtanh.pop %v830
      %v2462 = vtanh.pop %v832
      %v2463 = vtanh.pop %v1370
      %v2464 = vtanh.pop %v1372
      %v2465 = vtanh.pop %v1910
      %v2466 = vtanh.pop %v1912
      %v2467 = vtanh.pop %v2450
      %v2468 = vtanh.pop %v2452
      %v2469 = vtanh.pop %v837
      %v2470 = vtanh.pop %v839
      %v2471 = vtanh.pop %v1377
      %v2472 = vtanh.pop %v1379
      %v2473 = vtanh.pop %v1917
      %v2474 = vtanh.pop %v1919
      %v2475 = vtanh.pop %v2457
      %v2476 = vtanh.pop %v2459
      %v2477 = vld [vmem:[%s3] sm:$0xff]
      %v2478 = vld [vmem:[%s3 + $0x8] sm:$0xff]
      %v2479 = vld [vmem:[%s4] sm:$0xff]
      %v2480 = vld [vmem:[%s4 + $0x8] sm:$0xff]
      %2482 = vset.pattern.permute.xlu0 0
      %2483 = vperm.xlu0 %2482, %v2479
      %v2484 = vpop.permute.xlu0 %2483
      %2487 = vset.pattern.permute.xlu0 0
      %2488 = vperm.xlu0 %2487, %v2480
      %v2489 = vpop.permute.xlu0 %2488
      %v2492 = vsel %vm294, %v2477, 0
      %v2495 = vsel %vm294, %v2478, 0
      %v2497 = vand.u32 %v2462, 4294901760
      %2498 = vmatprep.subr.mxu0 %v2497
      %v2499 = vand.u32 %v2461, 4294901760
      %2500 = vmatpush1.msra.mxu0 %v2499
      %v2501 = vand.u32 %v2470, 4294901760
      %2502 = vmatprep.subr.mxu0 %v2501
      %v2503 = vand.u32 %v2469, 4294901760
      %2504 = vmatpush1.msra.mxu0 %v2503
      %2505 = vmatprep.subr.mxu0 0.0
      %2506 = vmatpush1.msra.mxu0 0.0
      %2507 = vmatprep.subr.mxu0 0.0
      %2508 = vmatpush1.msra.mxu0 0.0
      %2509 = vmatprep.subr.mxu0 0.0
      %2510 = vmatpush1.msra.mxu0 0.0
      %2511 = vmatprep.subr.mxu0 0.0
      %2512 = vmatpush1.msra.mxu0 0.0
      %2513 = vmatprep.subr.mxu0 0.0
      %2514 = vmatpush1.msra.mxu0 0.0
      %2515 = vmatprep.subr.mxu0 0.0
      %2516 = vmatpush1.msra.mxu0 0.0
      %2517 = vmatprep.subr.mxu0 0.0
      %2518 = vmatpush1.msra.mxu0 0.0
      %2519 = vmatprep.subr.mxu0 0.0
      %2520 = vmatpush1.msra.mxu0 0.0
      %2521 = vmatprep.subr.mxu0 0.0
      %2522 = vmatpush1.msra.mxu0 0.0
      %2523 = vmatprep.subr.mxu0 0.0
      %2524 = vmatpush1.msra.mxu0 0.0
      %2525 = vmatprep.subr.mxu0 0.0
      %2526 = vmatpush1.msra.mxu0 0.0
      %2527 = vmatprep.subr.mxu0 0.0
      %2528 = vmatpush1.msra.mxu0 0.0
      %2529 = vmatprep.subr.mxu0 0.0
      %2530 = vmatpush1.msra.mxu0 0.0
      %2531 = vmatprep.subr.mxu0 0.0
      %2532 = vmatpush1.msra.mxu0 0.0
      %2533 = vmatprep.subr.mxu0 0.0
      %2534 = vmatpush1.msra.mxu0 0.0
      %2535 = vmatprep.subr.mxu0 0.0
      %2536 = vmatpush1.msra.mxu0 0.0
      %2537 = vmatprep.subr.mxu0 0.0
      %2538 = vmatpush1.msra.mxu0 0.0
      %2539 = vmatprep.subr.mxu0 0.0
      %2540 = vmatpush1.msra.mxu0 0.0
      %2541 = vmatprep.subr.mxu0 0.0
      %2542 = vmatpush1.msra.mxu0 0.0
      %2543 = vmatprep.subr.mxu0 0.0
      %2544 = vmatpush1.msra.mxu0 0.0
      %2545 = vmatprep.subr.mxu0 0.0
      %2546 = vmatpush1.msra.mxu0 0.0
      %2547 = vmatprep.subr.mxu0 0.0
      %2548 = vmatpush1.msra.mxu0 0.0
      %2549 = vmatprep.subr.mxu0 0.0
      %2550 = vmatpush1.msra.mxu0 0.0
      %2551 = vmatprep.subr.mxu0 0.0
      %2552 = vmatpush1.msra.mxu0 0.0
      %2553 = vmatprep.subr.mxu0 0.0
      %2554 = vmatpush1.msra.mxu0 0.0
      %2555 = vmatprep.subr.mxu0 0.0
      %2556 = vmatpush1.msra.mxu0 0.0
      %2557 = vmatprep.subr.mxu0 0.0
      %2558 = vmatpush1.msra.mxu0 0.0
      %2559 = vmatprep.subr.mxu0 0.0
      %2560 = vmatpush1.msra.mxu0 0.0
      %2561 = vmatprep.subr.mxu0 0.0
      %2562 = vmatpush1.msra.mxu0 0.0
      %2563 = vmatprep.subr.mxu0 0.0
      %2564 = vmatpush1.msra.mxu0 0.0
      %2565 = vmatprep.mubr.f32.mxu0 0.0
      %v2566 = vand.u32 %v2492, 4294901760
      %v2567 = vsub.f32 %v2492, %v2566
      %v2568 = vand.u32 %v2567, 4294901760
      %v2569 = vsub.f32 %v2567, %v2568
      %v2570 = vand.u32 %v2569, 4294901760
      %2571 = vmatmul.mubr.f32.gmra.mrb[0].mxu0 %v2570
      %v2572 = vpop.f32.mrb[0].mxu0
      %v2573 = vadd.f32 %v2484, %v2572
      %v2574 = vpop.f32.mrb[0].mxu0
      %v2575 = vadd.f32 %v2484, %v2574
      %2576 = vmatprep.mubr.f32.mxu0 0.0
      %v2577 = vand.u32 %v2495, 4294901760
      %v2578 = vsub.f32 %v2495, %v2577
      %v2579 = vand.u32 %v2578, 4294901760
      %v2580 = vsub.f32 %v2578, %v2579
      %v2581 = vand.u32 %v2580, 4294901760
      %2582 = vmatmul.mubr.f32.gmra.mrb[0].mxu0 %v2581
      %v2583 = vpop.f32.mrb[0].mxu0
      %v2584 = vadd.f32 %v2489, %v2583
      %v2585 = vpop.f32.mrb[0].mxu0
      %v2586 = vadd.f32 %v2489, %v2585
      %2587 = vdwg.mxu0
      %v2588 = vand.u32 %v2462, 4294901760
      %v2589 = vsub.f32 %v2462, %v2588
      %v2590 = vand.u32 %v2589, 4294901760
      %v2591 = vsub.f32 %v2589, %v2590
      %v2592 = vand.u32 %v2591, 4294901760
      %2593 = vmatprep.subr.mxu0 %v2592
      %v2594 = vand.u32 %v2461, 4294901760
      %v2595 = vsub.f32 %v2461, %v2594
      %v2596 = vand.u32 %v2595, 4294901760
      %v2597 = vsub.f32 %v2595, %v2596
      %v2598 = vand.u32 %v2597, 4294901760
      %2599 = vmatpush1.msra.mxu0 %v2598
      %v2600 = vand.u32 %v2470, 4294901760
      %v2601 = vsub.f32 %v2470, %v2600
      %v2602 = vand.u32 %v2601, 4294901760
      %v2603 = vsub.f32 %v2601, %v2602
      %v2604 = vand.u32 %v2603, 4294901760
      %2605 = vmatprep.subr.mxu0 %v2604
      %v2606 = vand.u32 %v2469, 4294901760
      %v2607 = vsub.f32 %v2469, %v2606
      %v2608 = vand.u32 %v2607, 4294901760
      %v2609 = vsub.f32 %v2607, %v2608
      %v2610 = vand.u32 %v2609, 4294901760
      %2611 = vmatpush1.msra.mxu0 %v2610
      %2612 = vmatprep.subr.mxu0 0.0
      %2613 = vmatpush1.msra.mxu0 0.0
      %2614 = vmatprep.subr.mxu0 0.0
      %2615 = vmatpush1.msra.mxu0 0.0
      %2616 = vmatprep.subr.mxu0 0.0
      %2617 = vmatpush1.msra.mxu0 0.0
      %2618 = vmatprep.subr.mxu0 0.0
      %2619 = vmatpush1.msra.mxu0 0.0
      %2620 = vmatprep.subr.mxu0 0.0
      %2621 = vmatpush1.msra.mxu0 0.0
      %2622 = vmatprep.subr.mxu0 0.0
      %2623 = vmatpush1.msra.mxu0 0.0
      %2624 = vmatprep.subr.mxu0 0.0
      %2625 = vmatpush1.msra.mxu0 0.0
      %2626 = vmatprep.subr.mxu0 0.0
      %2627 = vmatpush1.msra.mxu0 0.0
      %2628 = vmatprep.subr.mxu0 0.0
      %2629 = vmatpush1.msra.mxu0 0.0
      %2630 = vmatprep.subr.mxu0 0.0
      %2631 = vmatpush1.msra.mxu0 0.0
      %2632 = vmatprep.subr.mxu0 0.0
      %2633 = vmatpush1.msra.mxu0 0.0
      %2634 = vmatprep.subr.mxu0 0.0
      %2635 = vmatpush1.msra.mxu0 0.0
      %2636 = vmatprep.subr.mxu0 0.0
      %2637 = vmatpush1.msra.mxu0 0.0
      %2638 = vmatprep.subr.mxu0 0.0
      %2639 = vmatpush1.msra.mxu0 0.0
      %2640 = vmatprep.subr.mxu0 0.0
      %2641 = vmatpush1.msra.mxu0 0.0
      %2642 = vmatprep.subr.mxu0 0.0
      %2643 = vmatpush1.msra.mxu0 0.0
      %2644 = vmatprep.subr.mxu0 0.0
      %2645 = vmatpush1.msra.mxu0 0.0
      %2646 = vmatprep.subr.mxu0 0.0
      %2647 = vmatpush1.msra.mxu0 0.0
      %2648 = vmatprep.subr.mxu0 0.0
      %2649 = vmatpush1.msra.mxu0 0.0
      %2650 = vmatprep.subr.mxu0 0.0
      %2651 = vmatpush1.msra.mxu0 0.0
      %2652 = vmatprep.subr.mxu0 0.0
      %2653 = vmatpush1.msra.mxu0 0.0
      %2654 = vmatprep.subr.mxu0 0.0
      %2655 = vmatpush1.msra.mxu0 0.0
      %2656 = vmatprep.subr.mxu0 0.0
      %2657 = vmatpush1.msra.mxu0 0.0
      %2658 = vmatprep.subr.mxu0 0.0
      %2659 = vmatpush1.msra.mxu0 0.0
      %2660 = vmatprep.subr.mxu0 0.0
      %2661 = vmatpush1.msra.mxu0 0.0
      %2662 = vmatprep.subr.mxu0 0.0
      %2663 = vmatpush1.msra.mxu0 0.0
      %2664 = vmatprep.subr.mxu0 0.0
      %2665 = vmatpush1.msra.mxu0 0.0
      %2666 = vmatprep.subr.mxu0 0.0
      %2667 = vmatpush1.msra.mxu0 0.0
      %2668 = vmatprep.subr.mxu0 0.0
      %2669 = vmatpush1.msra.mxu0 0.0
      %2670 = vmatprep.subr.mxu0 0.0
      %2671 = vmatpush1.msra.mxu0 0.0
      %2672 = vmatprep.mubr.f32.mxu0 0.0
      %v2673 = vand.u32 %v2492, 4294901760
      %2674 = vmatmul.mubr.f32.gmra.mrb[0].mxu0 %v2673
      %v2675 = vpop.f32.mrb[0].mxu0
      %v2676 = vadd.f32 %v2573, %v2675
      %v2677 = vpop.f32.mrb[0].mxu0
      %v2678 = vadd.f32 %v2575, %v2677
      %2679 = vmatprep.mubr.f32.mxu0 0.0
      %v2680 = vand.u32 %v2495, 4294901760
      %2681 = vmatmul.mubr.f32.gmra.mrb[0].mxu0 %v2680
      %v2682 = vpop.f32.mrb[0].mxu0
      %v2683 = vadd.f32 %v2584, %v2682
      %v2684 = vpop.f32.mrb[0].mxu0
      %v2685 = vadd.f32 %v2586, %v2684
      %2686 = vdwg.mxu0
      %v2687 = vand.u32 %v2462, 4294901760
      %v2688 = vsub.f32 %v2462, %v2687
      %2689 = vmatprep.subr.mxu0 %v2688
      %v2690 = vand.u32 %v2461, 4294901760
      %v2691 = vsub.f32 %v2461, %v2690
      %2692 = vmatpush1.msra.mxu0 %v2691
      %v2693 = vand.u32 %v2470, 4294901760
      %v2694 = vsub.f32 %v2470, %v2693
      %2695 = vmatprep.subr.mxu0 %v2694
      %v2696 = vand.u32 %v2469, 4294901760
      %v2697 = vsub.f32 %v2469, %v2696
      %2698 = vmatpush1.msra.mxu0 %v2697
      %2699 = vmatprep.subr.mxu0 0.0
      %2700 = vmatpush1.msra.mxu0 0.0
      %2701 = vmatprep.subr.mxu0 0.0
      %2702 = vmatpush1.msra.mxu0 0.0
      %2703 = vmatprep.subr.mxu0 0.0
      %2704 = vmatpush1.msra.mxu0 0.0
      %2705 = vmatprep.subr.mxu0 0.0
      %2706 = vmatpush1.msra.mxu0 0.0
      %2707 = vmatprep.subr.mxu0 0.0
      %2708 = vmatpush1.msra.mxu0 0.0
      %2709 = vmatprep.subr.mxu0 0.0
      %2710 = vmatpush1.msra.mxu0 0.0
      %2711 = vmatprep.subr.mxu0 0.0
      %2712 = vmatpush1.msra.mxu0 0.0
      %2713 = vmatprep.subr.mxu0 0.0
      %2714 = vmatpush1.msra.mxu0 0.0
      %2715 = vmatprep.subr.mxu0 0.0
      %2716 = vmatpush1.msra.mxu0 0.0
      %2717 = vmatprep.subr.mxu0 0.0
      %2718 = vmatpush1.msra.mxu0 0.0
      %2719 = vmatprep.subr.mxu0 0.0
      %2720 = vmatpush1.msra.mxu0 0.0
      %2721 = vmatprep.subr.mxu0 0.0
      %2722 = vmatpush1.msra.mxu0 0.0
      %2723 = vmatprep.subr.mxu0 0.0
      %2724 = vmatpush1.msra.mxu0 0.0
      %2725 = vmatprep.subr.mxu0 0.0
      %2726 = vmatpush1.msra.mxu0 0.0
      %2727 = vmatprep.subr.mxu0 0.0
      %2728 = vmatpush1.msra.mxu0 0.0
      %2729 = vmatprep.subr.mxu0 0.0
      %2730 = vmatpush1.msra.mxu0 0.0
      %2731 = vmatprep.subr.mxu0 0.0
      %2732 = vmatpush1.msra.mxu0 0.0
      %2733 = vmatprep.subr.mxu0 0.0
      %2734 = vmatpush1.msra.mxu0 0.0
      %2735 = vmatprep.subr.mxu0 0.0
      %2736 = vmatpush1.msra.mxu0 0.0
      %2737 = vmatprep.subr.mxu0 0.0
      %2738 = vmatpush1.msra.mxu0 0.0
      %2739 = vmatprep.subr.mxu0 0.0
      %2740 = vmatpush1.msra.mxu0 0.0
      %2741 = vmatprep.subr.mxu0 0.0
      %2742 = vmatpush1.msra.mxu0 0.0
      %2743 = vmatprep.subr.mxu0 0.0
      %2744 = vmatpush1.msra.mxu0 0.0
      %2745 = vmatprep.subr.mxu0 0.0
      %2746 = vmatpush1.msra.mxu0 0.0
      %2747 = vmatprep.subr.mxu0 0.0
      %2748 = vmatpush1.msra.mxu0 0.0
      %2749 = vmatprep.subr.mxu0 0.0
      %2750 = vmatpush1.msra.mxu0 0.0
      %2751 = vmatprep.subr.mxu0 0.0
      %2752 = vmatpush1.msra.mxu0 0.0
      %2753 = vmatprep.subr.mxu0 0.0
      %2754 = vmatpush1.msra.mxu0 0.0
      %2755 = vmatprep.subr.mxu0 0.0
      %2756 = vmatpush1.msra.mxu0 0.0
      %2757 = vmatprep.subr.mxu0 0.0
      %2758 = vmatpush1.msra.mxu0 0.0
      %2759 = vmatprep.mubr.f32.mxu0 0.0
      %v2760 = vand.u32 %v2492, 4294901760
      %v2761 = vsub.f32 %v2492, %v2760
      %2762 = vmatmul.mubr.f32.gmra.mrb[0].mxu0 %v2761
      %v2763 = vpop.f32.mrb[0].mxu0
      %v2764 = vadd.f32 %v2676, %v2763
      %v2765 = vpop.f32.mrb[0].mxu0
      %v2766 = vadd.f32 %v2678, %v2765
      %2767 = vmatprep.mubr.f32.mxu0 0.0
      %v2768 = vand.u32 %v2495, 4294901760
      %v2769 = vsub.f32 %v2495, %v2768
      %2770 = vmatmul.mubr.f32.gmra.mrb[0].mxu0 %v2769
      %v2771 = vpop.f32.mrb[0].mxu0
      %v2772 = vadd.f32 %v2683, %v2771
      %v2773 = vpop.f32.mrb[0].mxu0
      %v2774 = vadd.f32 %v2685, %v2773
      %2775 = vdwg.mxu0
      %v2776 = vand.u32 %v2462, 4294901760
      %2777 = vmatprep.subr.mxu0 %v2776
      %v2778 = vand.u32 %v2461, 4294901760
      %2779 = vmatpush1.msra.mxu0 %v2778
      %v2780 = vand.u32 %v2470, 4294901760
      %2781 = vmatprep.subr.mxu0 %v2780
      %v2782 = vand.u32 %v2469, 4294901760
      %2783 = vmatpush1.msra.mxu0 %v2782
      %2784 = vmatprep.subr.mxu0 0.0
      %2785 = vmatpush1.msra.mxu0 0.0
      %2786 = vmatprep.subr.mxu0 0.0
      %2787 = vmatpush1.msra.mxu0 0.0
      %2788 = vmatprep.subr.mxu0 0.0
      %2789 = vmatpush1.msra.mxu0 0.0
      %2790 = vmatprep.subr.mxu0 0.0
      %2791 = vmatpush1.msra.mxu0 0.0
      %2792 = vmatprep.subr.mxu0 0.0
      %2793 = vmatpush1.msra.mxu0 0.0
      %2794 = vmatprep.subr.mxu0 0.0
      %2795 = vmatpush1.msra.mxu0 0.0
      %2796 = vmatprep.subr.mxu0 0.0
      %2797 = vmatpush1.msra.mxu0 0.0
      %2798 = vmatprep.subr.mxu0 0.0
      %2799 = vmatpush1.msra.mxu0 0.0
      %2800 = vmatprep.subr.mxu0 0.0
      %2801 = vmatpush1.msra.mxu0 0.0
      %2802 = vmatprep.subr.mxu0 0.0
      %2803 = vmatpush1.msra.mxu0 0.0
      %2804 = vmatprep.subr.mxu0 0.0
      %2805 = vmatpush1.msra.mxu0 0.0
      %2806 = vmatprep.subr.mxu0 0.0
      %2807 = vmatpush1.msra.mxu0 0.0
      %2808 = vmatprep.subr.mxu0 0.0
      %2809 = vmatpush1.msra.mxu0 0.0
      %2810 = vmatprep.subr.mxu0 0.0
      %2811 = vmatpush1.msra.mxu0 0.0
      %2812 = vmatprep.subr.mxu0 0.0
      %2813 = vmatpush1.msra.mxu0 0.0
      %2814 = vmatprep.subr.mxu0 0.0
      %2815 = vmatpush1.msra.mxu0 0.0
      %2816 = vmatprep.subr.mxu0 0.0
      %2817 = vmatpush1.msra.mxu0 0.0
      %2818 = vmatprep.subr.mxu0 0.0
      %2819 = vmatpush1.msra.mxu0 0.0
      %2820 = vmatprep.subr.mxu0 0.0
      %2821 = vmatpush1.msra.mxu0 0.0
      %2822 = vmatprep.subr.mxu0 0.0
      %2823 = vmatpush1.msra.mxu0 0.0
      %2824 = vmatprep.subr.mxu0 0.0
      %2825 = vmatpush1.msra.mxu0 0.0
      %2826 = vmatprep.subr.mxu0 0.0
      %2827 = vmatpush1.msra.mxu0 0.0
      %2828 = vmatprep.subr.mxu0 0.0
      %2829 = vmatpush1.msra.mxu0 0.0
      %2830 = vmatprep.subr.mxu0 0.0
      %2831 = vmatpush1.msra.mxu0 0.0
      %2832 = vmatprep.subr.mxu0 0.0
      %2833 = vmatpush1.msra.mxu0 0.0
      %2834 = vmatprep.subr.mxu0 0.0
      %2835 = vmatpush1.msra.mxu0 0.0
      %2836 = vmatprep.subr.mxu0 0.0
      %2837 = vmatpush1.msra.mxu0 0.0
      %2838 = vmatprep.subr.mxu0 0.0
      %2839 = vmatpush1.msra.mxu0 0.0
      %2840 = vmatprep.subr.mxu0 0.0
      %2841 = vmatpush1.msra.mxu0 0.0
      %2842 = vmatprep.subr.mxu0 0.0
      %2843 = vmatpush1.msra.mxu0 0.0
      %2844 = vmatprep.mubr.f32.mxu0 0.0
      %v2845 = vand.u32 %v2492, 4294901760
      %v2846 = vsub.f32 %v2492, %v2845
      %v2847 = vand.u32 %v2846, 4294901760
      %2848 = vmatmul.mubr.f32.gmra.mrb[0].mxu0 %v2847
      %v2849 = vpop.f32.mrb[0].mxu0
      %v2850 = vadd.f32 %v2764, %v2849
      %v2851 = vpop.f32.mrb[0].mxu0
      %v2852 = vadd.f32 %v2766, %v2851
      %2853 = vmatprep.mubr.f32.mxu0 0.0
      %v2854 = vand.u32 %v2495, 4294901760
      %v2855 = vsub.f32 %v2495, %v2854
      %v2856 = vand.u32 %v2855, 4294901760
      %2857 = vmatmul.mubr.f32.gmra.mrb[0].mxu0 %v2856
      %v2858 = vpop.f32.mrb[0].mxu0
      %v2859 = vadd.f32 %v2772, %v2858
      %v2860 = vpop.f32.mrb[0].mxu0
      %v2861 = vadd.f32 %v2774, %v2860
      %2862 = vdwg.mxu0
      %v2863 = vand.u32 %v2462, 4294901760
      %v2864 = vsub.f32 %v2462, %v2863
      %v2865 = vand.u32 %v2864, 4294901760
      %2866 = vmatprep.subr.mxu0 %v2865
      %v2867 = vand.u32 %v2461, 4294901760
      %v2868 = vsub.f32 %v2461, %v2867
      %v2869 = vand.u32 %v2868, 4294901760
      %2870 = vmatpush1.msra.mxu0 %v2869
      %v2871 = vand.u32 %v2470, 4294901760
      %v2872 = vsub.f32 %v2470, %v2871
      %v2873 = vand.u32 %v2872, 4294901760
      %2874 = vmatprep.subr.mxu0 %v2873
      %v2875 = vand.u32 %v2469, 4294901760
      %v2876 = vsub.f32 %v2469, %v2875
      %v2877 = vand.u32 %v2876, 4294901760
      %2878 = vmatpush1.msra.mxu0 %v2877
      %2879 = vmatprep.subr.mxu0 0.0
      %2880 = vmatpush1.msra.mxu0 0.0
      %2881 = vmatprep.subr.mxu0 0.0
      %2882 = vmatpush1.msra.mxu0 0.0
      %2883 = vmatprep.subr.mxu0 0.0
      %2884 = vmatpush1.msra.mxu0 0.0
      %2885 = vmatprep.subr.mxu0 0.0
      %2886 = vmatpush1.msra.mxu0 0.0
      %2887 = vmatprep.subr.mxu0 0.0
      %2888 = vmatpush1.msra.mxu0 0.0
      %2889 = vmatprep.subr.mxu0 0.0
      %2890 = vmatpush1.msra.mxu0 0.0
      %2891 = vmatprep.subr.mxu0 0.0
      %2892 = vmatpush1.msra.mxu0 0.0
      %2893 = vmatprep.subr.mxu0 0.0
      %2894 = vmatpush1.msra.mxu0 0.0
      %2895 = vmatprep.subr.mxu0 0.0
      %2896 = vmatpush1.msra.mxu0 0.0
      %2897 = vmatprep.subr.mxu0 0.0
      %2898 = vmatpush1.msra.mxu0 0.0
      %2899 = vmatprep.subr.mxu0 0.0
      %2900 = vmatpush1.msra.mxu0 0.0
      %2901 = vmatprep.subr.mxu0 0.0
      %2902 = vmatpush1.msra.mxu0 0.0
      %2903 = vmatprep.subr.mxu0 0.0
      %2904 = vmatpush1.msra.mxu0 0.0
      %2905 = vmatprep.subr.mxu0 0.0
      %2906 = vmatpush1.msra.mxu0 0.0
      %2907 = vmatprep.subr.mxu0 0.0
      %2908 = vmatpush1.msra.mxu0 0.0
      %2909 = vmatprep.subr.mxu0 0.0
      %2910 = vmatpush1.msra.mxu0 0.0
      %2911 = vmatprep.subr.mxu0 0.0
      %2912 = vmatpush1.msra.mxu0 0.0
      %2913 = vmatprep.subr.mxu0 0.0
      %2914 = vmatpush1.msra.mxu0 0.0
      %2915 = vmatprep.subr.mxu0 0.0
      %2916 = vmatpush1.msra.mxu0 0.0
      %2917 = vmatprep.subr.mxu0 0.0
      %2918 = vmatpush1.msra.mxu0 0.0
      %2919 = vmatprep.subr.mxu0 0.0
      %2920 = vmatpush1.msra.mxu0 0.0
      %2921 = vmatprep.subr.mxu0 0.0
      %2922 = vmatpush1.msra.mxu0 0.0
      %2923 = vmatprep.subr.mxu0 0.0
      %2924 = vmatpush1.msra.mxu0 0.0
      %2925 = vmatprep.subr.mxu0 0.0
      %2926 = vmatpush1.msra.mxu0 0.0
      %2927 = vmatprep.subr.mxu0 0.0
      %2928 = vmatpush1.msra.mxu0 0.0
      %2929 = vmatprep.subr.mxu0 0.0
      %2930 = vmatpush1.msra.mxu0 0.0
      %2931 = vmatprep.subr.mxu0 0.0
      %2932 = vmatpush1.msra.mxu0 0.0
      %2933 = vmatprep.subr.mxu0 0.0
      %2934 = vmatpush1.msra.mxu0 0.0
      %2935 = vmatprep.subr.mxu0 0.0
      %2936 = vmatpush1.msra.mxu0 0.0
      %2937 = vmatprep.subr.mxu0 0.0
      %2938 = vmatpush1.msra.mxu0 0.0
      %2939 = vmatprep.mubr.f32.mxu0 0.0
      %v2940 = vand.u32 %v2492, 4294901760
      %2941 = vmatmul.mubr.f32.gmra.mrb[0].mxu0 %v2940
      %v2942 = vpop.f32.mrb[0].mxu0
      %v2943 = vadd.f32 %v2850, %v2942
      %v2944 = vpop.f32.mrb[0].mxu0
      %v2945 = vadd.f32 %v2852, %v2944
      %2946 = vmatprep.mubr.f32.mxu0 0.0
      %v2947 = vand.u32 %v2495, 4294901760
      %2948 = vmatmul.mubr.f32.gmra.mrb[0].mxu0 %v2947
      %v2949 = vpop.f32.mrb[0].mxu0
      %v2950 = vadd.f32 %v2859, %v2949
      %v2951 = vpop.f32.mrb[0].mxu0
      %v2952 = vadd.f32 %v2861, %v2951
      %2953 = vdwg.mxu0
      %v2954 = vand.u32 %v2462, 4294901760
      %2955 = vmatprep.subr.mxu0 %v2954
      %v2956 = vand.u32 %v2461, 4294901760
      %2957 = vmatpush1.msra.mxu0 %v2956
      %v2958 = vand.u32 %v2470, 4294901760
      %2959 = vmatprep.subr.mxu0 %v2958
      %v2960 = vand.u32 %v2469, 4294901760
      %2961 = vmatpush1.msra.mxu0 %v2960
      %2962 = vmatprep.subr.mxu0 0.0
      %2963 = vmatpush1.msra.mxu0 0.0
      %2964 = vmatprep.subr.mxu0 0.0
      %2965 = vmatpush1.msra.mxu0 0.0
      %2966 = vmatprep.subr.mxu0 0.0
      %2967 = vmatpush1.msra.mxu0 0.0
      %2968 = vmatprep.subr.mxu0 0.0
      %2969 = vmatpush1.msra.mxu0 0.0
      %2970 = vmatprep.subr.mxu0 0.0
      %2971 = vmatpush1.msra.mxu0 0.0
      %2972 = vmatprep.subr.mxu0 0.0
      %2973 = vmatpush1.msra.mxu0 0.0
      %2974 = vmatprep.subr.mxu0 0.0
      %2975 = vmatpush1.msra.mxu0 0.0
      %2976 = vmatprep.subr.mxu0 0.0
      %2977 = vmatpush1.msra.mxu0 0.0
      %2978 = vmatprep.subr.mxu0 0.0
      %2979 = vmatpush1.msra.mxu0 0.0
      %2980 = vmatprep.subr.mxu0 0.0
      %2981 = vmatpush1.msra.mxu0 0.0
      %2982 = vmatprep.subr.mxu0 0.0
      %2983 = vmatpush1.msra.mxu0 0.0
      %2984 = vmatprep.subr.mxu0 0.0
      %2985 = vmatpush1.msra.mxu0 0.0
      %2986 = vmatprep.subr.mxu0 0.0
      %2987 = vmatpush1.msra.mxu0 0.0
      %2988 = vmatprep.subr.mxu0 0.0
      %2989 = vmatpush1.msra.mxu0 0.0
      %2990 = vmatprep.subr.mxu0 0.0
      %2991 = vmatpush1.msra.mxu0 0.0
      %2992 = vmatprep.subr.mxu0 0.0
      %2993 = vmatpush1.msra.mxu0 0.0
      %2994 = vmatprep.subr.mxu0 0.0
      %2995 = vmatpush1.msra.mxu0 0.0
      %2996 = vmatprep.subr.mxu0 0.0
      %2997 = vmatpush1.msra.mxu0 0.0
      %2998 = vmatprep.subr.mxu0 0.0
      %2999 = vmatpush1.msra.mxu0 0.0
      %3000 = vmatprep.subr.mxu0 0.0
      %3001 = vmatpush1.msra.mxu0 0.0
      %3002 = vmatprep.subr.mxu0 0.0
      %3003 = vmatpush1.msra.mxu0 0.0
      %3004 = vmatprep.subr.mxu0 0.0
      %3005 = vmatpush1.msra.mxu0 0.0
      %3006 = vmatprep.subr.mxu0 0.0
      %3007 = vmatpush1.msra.mxu0 0.0
      %3008 = vmatprep.subr.mxu0 0.0
      %3009 = vmatpush1.msra.mxu0 0.0
      %3010 = vmatprep.subr.mxu0 0.0
      %3011 = vmatpush1.msra.mxu0 0.0
      %3012 = vmatprep.subr.mxu0 0.0
      %3013 = vmatpush1.msra.mxu0 0.0
      %3014 = vmatprep.subr.mxu0 0.0
      %3015 = vmatpush1.msra.mxu0 0.0
      %3016 = vmatprep.subr.mxu0 0.0
      %3017 = vmatpush1.msra.mxu0 0.0
      %3018 = vmatprep.subr.mxu0 0.0
      %3019 = vmatpush1.msra.mxu0 0.0
      %3020 = vmatprep.subr.mxu0 0.0
      %3021 = vmatpush1.msra.mxu0 0.0
      %3022 = vmatprep.mubr.f32.mxu0 0.0
      %v3023 = vand.u32 %v2492, 4294901760
      %3024 = vmatmul.mubr.f32.gmra.mrb[0].mxu0 %v3023
      %v3025 = vpop.f32.mrb[0].mxu0
      %v3026 = vadd.f32 %v2943, %v3025
      %v3027 = vpop.f32.mrb[0].mxu0
      %v3028 = vadd.f32 %v2945, %v3027
      %3029 = vmatprep.mubr.f32.mxu0 0.0
      %v3030 = vand.u32 %v2495, 4294901760
      %3031 = vmatmul.mubr.f32.gmra.mrb[0].mxu0 %v3030
      %v3032 = vpop.f32.mrb[0].mxu0
      %v3033 = vadd.f32 %v2950, %v3032
      %v3034 = vpop.f32.mrb[0].mxu0
      %v3035 = vadd.f32 %v2952, %v3034
      %3036 = vdwg.mxu0
      %v3037 = vand.u32 %v2464, 4294901760
      %3038 = vmatprep.subr.mxu0 %v3037
      %v3039 = vand.u32 %v2463, 4294901760
      %3040 = vmatpush1.msra.mxu0 %v3039
      %v3041 = vand.u32 %v2472, 4294901760
      %3042 = vmatprep.subr.mxu0 %v3041
      %v3043 = vand.u32 %v2471, 4294901760
      %3044 = vmatpush1.msra.mxu0 %v3043
      %3045 = vmatprep.subr.mxu0 0.0
      %3046 = vmatpush1.msra.mxu0 0.0
      %3047 = vmatprep.subr.mxu0 0.0
      %3048 = vmatpush1.msra.mxu0 0.0
      %3049 = vmatprep.subr.mxu0 0.0
      %3050 = vmatpush1.msra.mxu0 0.0
      %3051 = vmatprep.subr.mxu0 0.0
      %3052 = vmatpush1.msra.mxu0 0.0
      %3053 = vmatprep.subr.mxu0 0.0
      %3054 = vmatpush1.msra.mxu0 0.0
      %3055 = vmatprep.subr.mxu0 0.0
      %3056 = vmatpush1.msra.mxu0 0.0
      %3057 = vmatprep.subr.mxu0 0.0
      %3058 = vmatpush1.msra.mxu0 0.0
      %3059 = vmatprep.subr.mxu0 0.0
      %3060 = vmatpush1.msra.mxu0 0.0
      %3061 = vmatprep.subr.mxu0 0.0
      %3062 = vmatpush1.msra.mxu0 0.0
      %3063 = vmatprep.subr.mxu0 0.0
      %3064 = vmatpush1.msra.mxu0 0.0
      %3065 = vmatprep.subr.mxu0 0.0
      %3066 = vmatpush1.msra.mxu0 0.0
      %3067 = vmatprep.subr.mxu0 0.0
      %3068 = vmatpush1.msra.mxu0 0.0
      %3069 = vmatprep.subr.mxu0 0.0
      %3070 = vmatpush1.msra.mxu0 0.0
      %3071 = vmatprep.subr.mxu0 0.0
      %3072 = vmatpush1.msra.mxu0 0.0
      %3073 = vmatprep.subr.mxu0 0.0
      %3074 = vmatpush1.msra.mxu0 0.0
      %3075 = vmatprep.subr.mxu0 0.0
      %3076 = vmatpush1.msra.mxu0 0.0
      %3077 = vmatprep.subr.mxu0 0.0
      %3078 = vmatpush1.msra.mxu0 0.0
      %3079 = vmatprep.subr.mxu0 0.0
      %3080 = vmatpush1.msra.mxu0 0.0
      %3081 = vmatprep.subr.mxu0 0.0
      %3082 = vmatpush1.msra.mxu0 0.0
      %3083 = vmatprep.subr.mxu0 0.0
      %3084 = vmatpush1.msra.mxu0 0.0
      %3085 = vmatprep.subr.mxu0 0.0
      %3086 = vmatpush1.msra.mxu0 0.0
      %3087 = vmatprep.subr.mxu0 0.0
      %3088 = vmatpush1.msra.mxu0 0.0
      %3089 = vmatprep.subr.mxu0 0.0
      %3090 = vmatpush1.msra.mxu0 0.0
      %3091 = vmatprep.subr.mxu0 0.0
      %3092 = vmatpush1.msra.mxu0 0.0
      %3093 = vmatprep.subr.mxu0 0.0
      %3094 = vmatpush1.msra.mxu0 0.0
      %3095 = vmatprep.subr.mxu0 0.0
      %3096 = vmatpush1.msra.mxu0 0.0
      %3097 = vmatprep.subr.mxu0 0.0
      %3098 = vmatpush1.msra.mxu0 0.0
      %3099 = vmatprep.subr.mxu0 0.0
      %3100 = vmatpush1.msra.mxu0 0.0
      %3101 = vmatprep.subr.mxu0 0.0
      %3102 = vmatpush1.msra.mxu0 0.0
      %3103 = vmatprep.subr.mxu0 0.0
      %3104 = vmatpush1.msra.mxu0 0.0
      %3105 = vmatprep.mubr.f32.mxu0 0.0
      %v3106 = vand.u32 %v2492, 4294901760
      %v3107 = vsub.f32 %v2492, %v3106
      %v3108 = vand.u32 %v3107, 4294901760
      %v3109 = vsub.f32 %v3107, %v3108
      %v3110 = vand.u32 %v3109, 4294901760
      %3111 = vmatmul.mubr.f32.gmra.mrb[0].mxu0 %v3110
      %v3112 = vpop.f32.mrb[0].mxu0
      %v3113 = vadd.f32 %v2484, %v3112
      %v3114 = vpop.f32.mrb[0].mxu0
      %v3115 = vadd.f32 %v2484, %v3114
      %3116 = vmatprep.mubr.f32.mxu0 0.0
      %v3117 = vand.u32 %v2495, 4294901760
      %v3118 = vsub.f32 %v2495, %v3117
      %v3119 = vand.u32 %v3118, 4294901760
      %v3120 = vsub.f32 %v3118, %v3119
      %v3121 = vand.u32 %v3120, 4294901760
      %3122 = vmatmul.mubr.f32.gmra.mrb[0].mxu0 %v3121
      %v3123 = vpop.f32.mrb[0].mxu0
      %v3124 = vadd.f32 %v2489, %v3123
      %v3125 = vpop.f32.mrb[0].mxu0
      %v3126 = vadd.f32 %v2489, %v3125
      %3127 = vdwg.mxu0
      %v3128 = vand.u32 %v2464, 4294901760
      %v3129 = vsub.f32 %v2464, %v3128
      %v3130 = vand.u32 %v3129, 4294901760
      %v3131 = vsub.f32 %v3129, %v3130
      %v3132 = vand.u32 %v3131, 4294901760
      %3133 = vmatprep.subr.mxu0 %v3132
      %v3134 = vand.u32 %v2463, 4294901760
      %v3135 = vsub.f32 %v2463, %v3134
      %v3136 = vand.u32 %v3135, 4294901760
      %v3137 = vsub.f32 %v3135, %v3136
      %v3138 = vand.u32 %v3137, 4294901760
      %3139 = vmatpush1.msra.mxu0 %v3138
      %v3140 = vand.u32 %v2472, 4294901760
      %v3141 = vsub.f32 %v2472, %v3140
      %v3142 = vand.u32 %v3141, 4294901760
      %v3143 = vsub.f32 %v3141, %v3142
      %v3144 = vand.u32 %v3143, 4294901760
      %3145 = vmatprep.subr.mxu0 %v3144
      %v3146 = vand.u32 %v2471, 4294901760
      %v3147 = vsub.f32 %v2471, %v3146
      %v3148 = vand.u32 %v3147, 4294901760
      %v3149 = vsub.f32 %v3147, %v3148
      %v3150 = vand.u32 %v3149, 4294901760
      %3151 = vmatpush1.msra.mxu0 %v3150
      %3152 = vmatprep.subr.mxu0 0.0
      %3153 = vmatpush1.msra.mxu0 0.0
      %3154 = vmatprep.subr.mxu0 0.0
      %3155 = vmatpush1.msra.mxu0 0.0
      %3156 = vmatprep.subr.mxu0 0.0
      %3157 = vmatpush1.msra.mxu0 0.0
      %3158 = vmatprep.subr.mxu0 0.0
      %3159 = vmatpush1.msra.mxu0 0.0
      %3160 = vmatprep.subr.mxu0 0.0
      %3161 = vmatpush1.msra.mxu0 0.0
      %3162 = vmatprep.subr.mxu0 0.0
      %3163 = vmatpush1.msra.mxu0 0.0
      %3164 = vmatprep.subr.mxu0 0.0
      %3165 = vmatpush1.msra.mxu0 0.0
      %3166 = vmatprep.subr.mxu0 0.0
      %3167 = vmatpush1.msra.mxu0 0.0
      %3168 = vmatprep.subr.mxu0 0.0
      %3169 = vmatpush1.msra.mxu0 0.0
      %3170 = vmatprep.subr.mxu0 0.0
      %3171 = vmatpush1.msra.mxu0 0.0
      %3172 = vmatprep.subr.mxu0 0.0
      %3173 = vmatpush1.msra.mxu0 0.0
      %3174 = vmatprep.subr.mxu0 0.0
      %3175 = vmatpush1.msra.mxu0 0.0
      %3176 = vmatprep.subr.mxu0 0.0
      %3177 = vmatpush1.msra.mxu0 0.0
      %3178 = vmatprep.subr.mxu0 0.0
      %3179 = vmatpush1.msra.mxu0 0.0
      %3180 = vmatprep.subr.mxu0 0.0
      %3181 = vmatpush1.msra.mxu0 0.0
      %3182 = vmatprep.subr.mxu0 0.0
      %3183 = vmatpush1.msra.mxu0 0.0
      %3184 = vmatprep.subr.mxu0 0.0
      %3185 = vmatpush1.msra.mxu0 0.0
      %3186 = vmatprep.subr.mxu0 0.0
      %3187 = vmatpush1.msra.mxu0 0.0
      %3188 = vmatprep.subr.mxu0 0.0
      %3189 = vmatpush1.msra.mxu0 0.0
      %3190 = vmatprep.subr.mxu0 0.0
      %3191 = vmatpush1.msra.mxu0 0.0
      %3192 = vmatprep.subr.mxu0 0.0
      %3193 = vmatpush1.msra.mxu0 0.0
      %3194 = vmatprep.subr.mxu0 0.0
      %3195 = vmatpush1.msra.mxu0 0.0
      %3196 = vmatprep.subr.mxu0 0.0
      %3197 = vmatpush1.msra.mxu0 0.0
      %3198 = vmatprep.subr.mxu0 0.0
      %3199 = vmatpush1.msra.mxu0 0.0
      %3200 = vmatprep.subr.mxu0 0.0
      %3201 = vmatpush1.msra.mxu0 0.0
      %3202 = vmatprep.subr.mxu0 0.0
      %3203 = vmatpush1.msra.mxu0 0.0
      %3204 = vmatprep.subr.mxu0 0.0
      %3205 = vmatpush1.msra.mxu0 0.0
      %3206 = vmatprep.subr.mxu0 0.0
      %3207 = vmatpush1.msra.mxu0 0.0
      %3208 = vmatprep.subr.mxu0 0.0
      %3209 = vmatpush1.msra.mxu0 0.0
      %3210 = vmatprep.subr.mxu0 0.0
      %3211 = vmatpush1.msra.mxu0 0.0
      %3212 = vmatprep.mubr.f32.mxu0 0.0
      %v3213 = vand.u32 %v2492, 4294901760
      %3214 = vmatmul.mubr.f32.gmra.mrb[0].mxu0 %v3213
      %v3215 = vpop.f32.mrb[0].mxu0
      %v3216 = vadd.f32 %v3113, %v3215
      %v3217 = vpop.f32.mrb[0].mxu0
      %v3218 = vadd.f32 %v3115, %v3217
      %3219 = vmatprep.mubr.f32.mxu0 0.0
      %v3220 = vand.u32 %v2495, 4294901760
      %3221 = vmatmul.mubr.f32.gmra.mrb[0].mxu0 %v3220
      %v3222 = vpop.f32.mrb[0].mxu0
      %v3223 = vadd.f32 %v3124, %v3222
      %v3224 = vpop.f32.mrb[0].mxu0
      %v3225 = vadd.f32 %v3126, %v3224
      %3226 = vdwg.mxu0
      %v3227 = vand.u32 %v2464, 4294901760
      %v3228 = vsub.f32 %v2464, %v3227
      %3229 = vmatprep.subr.mxu0 %v3228
      %v3230 = vand.u32 %v2463, 4294901760
      %v3231 = vsub.f32 %v2463, %v3230
      %3232 = vmatpush1.msra.mxu0 %v3231
      %v3233 = vand.u32 %v2472, 4294901760
      %v3234 = vsub.f32 %v2472, %v3233
      %3235 = vmatprep.subr.mxu0 %v3234
      %v3236 = vand.u32 %v2471, 4294901760
      %v3237 = vsub.f32 %v2471, %v3236
      %3238 = vmatpush1.msra.mxu0 %v3237
      %3239 = vmatprep.subr.mxu0 0.0
      %3240 = vmatpush1.msra.mxu0 0.0
      %3241 = vmatprep.subr.mxu0 0.0
      %3242 = vmatpush1.msra.mxu0 0.0
      %3243 = vmatprep.subr.mxu0 0.0
      %3244 = vmatpush1.msra.mxu0 0.0
      %3245 = vmatprep.subr.mxu0 0.0
      %3246 = vmatpush1.msra.mxu0 0.0
      %3247 = vmatprep.subr.mxu0 0.0
      %3248 = vmatpush1.msra.mxu0 0.0
      %3249 = vmatprep.subr.mxu0 0.0
      %3250 = vmatpush1.msra.mxu0 0.0
      %3251 = vmatprep.subr.mxu0 0.0
      %3252 = vmatpush1.msra.mxu0 0.0
      %3253 = vmatprep.subr.mxu0 0.0
      %3254 = vmatpush1.msra.mxu0 0.0
      %3255 = vmatprep.subr.mxu0 0.0
      %3256 = vmatpush1.msra.mxu0 0.0
      %3257 = vmatprep.subr.mxu0 0.0
      %3258 = vmatpush1.msra.mxu0 0.0
      %3259 = vmatprep.subr.mxu0 0.0
      %3260 = vmatpush1.msra.mxu0 0.0
      %3261 = vmatprep.subr.mxu0 0.0
      %3262 = vmatpush1.msra.mxu0 0.0
      %3263 = vmatprep.subr.mxu0 0.0
      %3264 = vmatpush1.msra.mxu0 0.0
      %3265 = vmatprep.subr.mxu0 0.0
      %3266 = vmatpush1.msra.mxu0 0.0
      %3267 = vmatprep.subr.mxu0 0.0
      %3268 = vmatpush1.msra.mxu0 0.0
      %3269 = vmatprep.subr.mxu0 0.0
      %3270 = vmatpush1.msra.mxu0 0.0
      %3271 = vmatprep.subr.mxu0 0.0
      %3272 = vmatpush1.msra.mxu0 0.0
      %3273 = vmatprep.subr.mxu0 0.0
      %3274 = vmatpush1.msra.mxu0 0.0
      %3275 = vmatprep.subr.mxu0 0.0
      %3276 = vmatpush1.msra.mxu0 0.0
      %3277 = vmatprep.subr.mxu0 0.0
      %3278 = vmatpush1.msra.mxu0 0.0
      %3279 = vmatprep.subr.mxu0 0.0
      %3280 = vmatpush1.msra.mxu0 0.0
      %3281 = vmatprep.subr.mxu0 0.0
      %3282 = vmatpush1.msra.mxu0 0.0
      %3283 = vmatprep.subr.mxu0 0.0
      %3284 = vmatpush1.msra.mxu0 0.0
      %3285 = vmatprep.subr.mxu0 0.0
      %3286 = vmatpush1.msra.mxu0 0.0
      %3287 = vmatprep.subr.mxu0 0.0
      %3288 = vmatpush1.msra.mxu0 0.0
      %3289 = vmatprep.subr.mxu0 0.0
      %3290 = vmatpush1.msra.mxu0 0.0
      %3291 = vmatprep.subr.mxu0 0.0
      %3292 = vmatpush1.msra.mxu0 0.0
      %3293 = vmatprep.subr.mxu0 0.0
      %3294 = vmatpush1.msra.mxu0 0.0
      %3295 = vmatprep.subr.mxu0 0.0
      %3296 = vmatpush1.msra.mxu0 0.0
      %3297 = vmatprep.subr.mxu0 0.0
      %3298 = vmatpush1.msra.mxu0 0.0
      %3299 = vmatprep.mubr.f32.mxu0 0.0
      %v3300 = vand.u32 %v2492, 4294901760
      %v3301 = vsub.f32 %v2492, %v3300
      %3302 = vmatmul.mubr.f32.gmra.mrb[0].mxu0 %v3301
      %v3303 = vpop.f32.mrb[0].mxu0
      %v3304 = vadd.f32 %v3216, %v3303
      %v3305 = vpop.f32.mrb[0].mxu0
      %v3306 = vadd.f32 %v3218, %v3305
      %3307 = vmatprep.mubr.f32.mxu0 0.0
      %v3308 = vand.u32 %v2495, 4294901760
      %v3309 = vsub.f32 %v2495, %v3308
      %3310 = vmatmul.mubr.f32.gmra.mrb[0].mxu0 %v3309
      %v3311 = vpop.f32.mrb[0].mxu0
      %v3312 = vadd.f32 %v3223, %v3311
      %v3313 = vpop.f32.mrb[0].mxu0
      %v3314 = vadd.f32 %v3225, %v3313
      %3315 = vdwg.mxu0
      %v3316 = vand.u32 %v2464, 4294901760
      %3317 = vmatprep.subr.mxu0 %v3316
      %v3318 = vand.u32 %v2463, 4294901760
      %3319 = vmatpush1.msra.mxu0 %v3318
      %v3320 = vand.u32 %v2472, 4294901760
      %3321 = vmatprep.subr.mxu0 %v3320
      %v3322 = vand.u32 %v2471, 4294901760
      %3323 = vmatpush1.msra.mxu0 %v3322
      %3324 = vmatprep.subr.mxu0 0.0
      %3325 = vmatpush1.msra.mxu0 0.0
      %3326 = vmatprep.subr.mxu0 0.0
      %3327 = vmatpush1.msra.mxu0 0.0
      %3328 = vmatprep.subr.mxu0 0.0
      %3329 = vmatpush1.msra.mxu0 0.0
      %3330 = vmatprep.subr.mxu0 0.0
      %3331 = vmatpush1.msra.mxu0 0.0
      %3332 = vmatprep.subr.mxu0 0.0
      %3333 = vmatpush1.msra.mxu0 0.0
      %3334 = vmatprep.subr.mxu0 0.0
      %3335 = vmatpush1.msra.mxu0 0.0
      %3336 = vmatprep.subr.mxu0 0.0
      %3337 = vmatpush1.msra.mxu0 0.0
      %3338 = vmatprep.subr.mxu0 0.0
      %3339 = vmatpush1.msra.mxu0 0.0
      %3340 = vmatprep.subr.mxu0 0.0
      %3341 = vmatpush1.msra.mxu0 0.0
      %3342 = vmatprep.subr.mxu0 0.0
      %3343 = vmatpush1.msra.mxu0 0.0
      %3344 = vmatprep.subr.mxu0 0.0
      %3345 = vmatpush1.msra.mxu0 0.0
      %3346 = vmatprep.subr.mxu0 0.0
      %3347 = vmatpush1.msra.mxu0 0.0
      %3348 = vmatprep.subr.mxu0 0.0
      %3349 = vmatpush1.msra.mxu0 0.0
      %3350 = vmatprep.subr.mxu0 0.0
      %3351 = vmatpush1.msra.mxu0 0.0
      %3352 = vmatprep.subr.mxu0 0.0
      %3353 = vmatpush1.msra.mxu0 0.0
      %3354 = vmatprep.subr.mxu0 0.0
      %3355 = vmatpush1.msra.mxu0 0.0
      %3356 = vmatprep.subr.mxu0 0.0
      %3357 = vmatpush1.msra.mxu0 0.0
      %3358 = vmatprep.subr.mxu0 0.0
      %3359 = vmatpush1.msra.mxu0 0.0
      %3360 = vmatprep.subr.mxu0 0.0
      %3361 = vmatpush1.msra.mxu0 0.0
      %3362 = vmatprep.subr.mxu0 0.0
      %3363 = vmatpush1.msra.mxu0 0.0
      %3364 = vmatprep.subr.mxu0 0.0
      %3365 = vmatpush1.msra.mxu0 0.0
      %3366 = vmatprep.subr.mxu0 0.0
      %3367 = vmatpush1.msra.mxu0 0.0
      %3368 = vmatprep.subr.mxu0 0.0
      %3369 = vmatpush1.msra.mxu0 0.0
      %3370 = vmatprep.subr.mxu0 0.0
      %3371 = vmatpush1.msra.mxu0 0.0
      %3372 = vmatprep.subr.mxu0 0.0
      %3373 = vmatpush1.msra.mxu0 0.0
      %3374 = vmatprep.subr.mxu0 0.0
      %3375 = vmatpush1.msra.mxu0 0.0
      %3376 = vmatprep.subr.mxu0 0.0
      %3377 = vmatpush1.msra.mxu0 0.0
      %3378 = vmatprep.subr.mxu0 0.0
      %3379 = vmatpush1.msra.mxu0 0.0
      %3380 = vmatprep.subr.mxu0 0.0
      %3381 = vmatpush1.msra.mxu0 0.0
      %3382 = vmatprep.subr.mxu0 0.0
      %3383 = vmatpush1.msra.mxu0 0.0
      %3384 = vmatprep.mubr.f32.mxu0 0.0
      %v3385 = vand.u32 %v2492, 4294901760
      %v3386 = vsub.f32 %v2492, %v3385
      %v3387 = vand.u32 %v3386, 4294901760
      %3388 = vmatmul.mubr.f32.gmra.mrb[0].mxu0 %v3387
      %v3389 = vpop.f32.mrb[0].mxu0
      %v3390 = vadd.f32 %v3304, %v3389
      %v3391 = vpop.f32.mrb[0].mxu0
      %v3392 = vadd.f32 %v3306, %v3391
      %3393 = vmatprep.mubr.f32.mxu0 0.0
      %v3394 = vand.u32 %v2495, 4294901760
      %v3395 = vsub.f32 %v2495, %v3394
      %v3396 = vand.u32 %v3395, 4294901760
      %3397 = vmatmul.mubr.f32.gmra.mrb[0].mxu0 %v3396
      %v3398 = vpop.f32.mrb[0].mxu0
      %v3399 = vadd.f32 %v3312, %v3398
      %v3400 = vpop.f32.mrb[0].mxu0
      %v3401 = vadd.f32 %v3314, %v3400
      %3402 = vdwg.mxu0
      %v3403 = vand.u32 %v2464, 4294901760
      %v3404 = vsub.f32 %v2464, %v3403
      %v3405 = vand.u32 %v3404, 4294901760
      %3406 = vmatprep.subr.mxu0 %v3405
      %v3407 = vand.u32 %v2463, 4294901760
      %v3408 = vsub.f32 %v2463, %v3407
      %v3409 = vand.u32 %v3408, 4294901760
      %3410 = vmatpush1.msra.mxu0 %v3409
      %v3411 = vand.u32 %v2472, 4294901760
      %v3412 = vsub.f32 %v2472, %v3411
      %v3413 = vand.u32 %v3412, 4294901760
      %3414 = vmatprep.subr.mxu0 %v3413
      %v3415 = vand.u32 %v2471, 4294901760
      %v3416 = vsub.f32 %v2471, %v3415
      %v3417 = vand.u32 %v3416, 4294901760
      %3418 = vmatpush1.msra.mxu0 %v3417
      %3419 = vmatprep.subr.mxu0 0.0
      %3420 = vmatpush1.msra.mxu0 0.0
      %3421 = vmatprep.subr.mxu0 0.0
      %3422 = vmatpush1.msra.mxu0 0.0
      %3423 = vmatprep.subr.mxu0 0.0
      %3424 = vmatpush1.msra.mxu0 0.0
      %3425 = vmatprep.subr.mxu0 0.0
      %3426 = vmatpush1.msra.mxu0 0.0
      %3427 = vmatprep.subr.mxu0 0.0
      %3428 = vmatpush1.msra.mxu0 0.0
      %3429 = vmatprep.subr.mxu0 0.0
      %3430 = vmatpush1.msra.mxu0 0.0
      %3431 = vmatprep.subr.mxu0 0.0
      %3432 = vmatpush1.msra.mxu0 0.0
      %3433 = vmatprep.subr.mxu0 0.0
      %3434 = vmatpush1.msra.mxu0 0.0
      %3435 = vmatprep.subr.mxu0 0.0
      %3436 = vmatpush1.msra.mxu0 0.0
      %3437 = vmatprep.subr.mxu0 0.0
      %3438 = vmatpush1.msra.mxu0 0.0
      %3439 = vmatprep.subr.mxu0 0.0
      %3440 = vmatpush1.msra.mxu0 0.0
      %3441 = vmatprep.subr.mxu0 0.0
      %3442 = vmatpush1.msra.mxu0 0.0
      %3443 = vmatprep.subr.mxu0 0.0
      %3444 = vmatpush1.msra.mxu0 0.0
      %3445 = vmatprep.subr.mxu0 0.0
      %3446 = vmatpush1.msra.mxu0 0.0
      %3447 = vmatprep.subr.mxu0 0.0
      %3448 = vmatpush1.msra.mxu0 0.0
      %3449 = vmatprep.subr.mxu0 0.0
      %3450 = vmatpush1.msra.mxu0 0.0
      %3451 = vmatprep.subr.mxu0 0.0
      %3452 = vmatpush1.msra.mxu0 0.0
      %3453 = vmatprep.subr.mxu0 0.0
      %3454 = vmatpush1.msra.mxu0 0.0
      %3455 = vmatprep.subr.mxu0 0.0
      %3456 = vmatpush1.msra.mxu0 0.0
      %3457 = vmatprep.subr.mxu0 0.0
      %3458 = vmatpush1.msra.mxu0 0.0
      %3459 = vmatprep.subr.mxu0 0.0
      %3460 = vmatpush1.msra.mxu0 0.0
      %3461 = vmatprep.subr.mxu0 0.0
      %3462 = vmatpush1.msra.mxu0 0.0
      %3463 = vmatprep.subr.mxu0 0.0
      %3464 = vmatpush1.msra.mxu0 0.0
      %3465 = vmatprep.subr.mxu0 0.0
      %3466 = vmatpush1.msra.mxu0 0.0
      %3467 = vmatprep.subr.mxu0 0.0
      %3468 = vmatpush1.msra.mxu0 0.0
      %3469 = vmatprep.subr.mxu0 0.0
      %3470 = vmatpush1.msra.mxu0 0.0
      %3471 = vmatprep.subr.mxu0 0.0
      %3472 = vmatpush1.msra.mxu0 0.0
      %3473 = vmatprep.subr.mxu0 0.0
      %3474 = vmatpush1.msra.mxu0 0.0
      %3475 = vmatprep.subr.mxu0 0.0
      %3476 = vmatpush1.msra.mxu0 0.0
      %3477 = vmatprep.subr.mxu0 0.0
      %3478 = vmatpush1.msra.mxu0 0.0
      %3479 = vmatprep.mubr.f32.mxu0 0.0
      %v3480 = vand.u32 %v2492, 4294901760
      %3481 = vmatmul.mubr.f32.gmra.mrb[0].mxu0 %v3480
      %v3482 = vpop.f32.mrb[0].mxu0
      %v3483 = vadd.f32 %v3390, %v3482
      %v3484 = vpop.f32.mrb[0].mxu0
      %v3485 = vadd.f32 %v3392, %v3484
      %3486 = vmatprep.mubr.f32.mxu0 0.0
      %v3487 = vand.u32 %v2495, 4294901760
      %3488 = vmatmul.mubr.f32.gmra.mrb[0].mxu0 %v3487
      %v3489 = vpop.f32.mrb[0].mxu0
      %v3490 = vadd.f32 %v3399, %v3489
      %v3491 = vpop.f32.mrb[0].mxu0
      %v3492 = vadd.f32 %v3401, %v3491
      %3493 = vdwg.mxu0
      %v3494 = vand.u32 %v2464, 4294901760
      %3495 = vmatprep.subr.mxu0 %v3494
      %v3496 = vand.u32 %v2463, 4294901760
      %3497 = vmatpush1.msra.mxu0 %v3496
      %v3498 = vand.u32 %v2472, 4294901760
      %3499 = vmatprep.subr.mxu0 %v3498
      %v3500 = vand.u32 %v2471, 4294901760
      %3501 = vmatpush1.msra.mxu0 %v3500
      %3502 = vmatprep.subr.mxu0 0.0
      %3503 = vmatpush1.msra.mxu0 0.0
      %3504 = vmatprep.subr.mxu0 0.0
      %3505 = vmatpush1.msra.mxu0 0.0
      %3506 = vmatprep.subr.mxu0 0.0
      %3507 = vmatpush1.msra.mxu0 0.0
      %3508 = vmatprep.subr.mxu0 0.0
      %3509 = vmatpush1.msra.mxu0 0.0
      %3510 = vmatprep.subr.mxu0 0.0
      %3511 = vmatpush1.msra.mxu0 0.0
      %3512 = vmatprep.subr.mxu0 0.0
      %3513 = vmatpush1.msra.mxu0 0.0
      %3514 = vmatprep.subr.mxu0 0.0
      %3515 = vmatpush1.msra.mxu0 0.0
      %3516 = vmatprep.subr.mxu0 0.0
      %3517 = vmatpush1.msra.mxu0 0.0
      %3518 = vmatprep.subr.mxu0 0.0
      %3519 = vmatpush1.msra.mxu0 0.0
      %3520 = vmatprep.subr.mxu0 0.0
      %3521 = vmatpush1.msra.mxu0 0.0
      %3522 = vmatprep.subr.mxu0 0.0
      %3523 = vmatpush1.msra.mxu0 0.0
      %3524 = vmatprep.subr.mxu0 0.0
      %3525 = vmatpush1.msra.mxu0 0.0
      %3526 = vmatprep.subr.mxu0 0.0
      %3527 = vmatpush1.msra.mxu0 0.0
      %3528 = vmatprep.subr.mxu0 0.0
      %3529 = vmatpush1.msra.mxu0 0.0
      %3530 = vmatprep.subr.mxu0 0.0
      %3531 = vmatpush1.msra.mxu0 0.0
      %3532 = vmatprep.subr.mxu0 0.0
      %3533 = vmatpush1.msra.mxu0 0.0
      %3534 = vmatprep.subr.mxu0 0.0
      %3535 = vmatpush1.msra.mxu0 0.0
      %3536 = vmatprep.subr.mxu0 0.0
      %3537 = vmatpush1.msra.mxu0 0.0
      %3538 = vmatprep.subr.mxu0 0.0
      %3539 = vmatpush1.msra.mxu0 0.0
      %3540 = vmatprep.subr.mxu0 0.0
      %3541 = vmatpush1.msra.mxu0 0.0
      %3542 = vmatprep.subr.mxu0 0.0
      %3543 = vmatpush1.msra.mxu0 0.0
      %3544 = vmatprep.subr.mxu0 0.0
      %3545 = vmatpush1.msra.mxu0 0.0
      %3546 = vmatprep.subr.mxu0 0.0
      %3547 = vmatpush1.msra.mxu0 0.0
      %3548 = vmatprep.subr.mxu0 0.0
      %3549 = vmatpush1.msra.mxu0 0.0
      %3550 = vmatprep.subr.mxu0 0.0
      %3551 = vmatpush1.msra.mxu0 0.0
      %3552 = vmatprep.subr.mxu0 0.0
      %3553 = vmatpush1.msra.mxu0 0.0
      %3554 = vmatprep.subr.mxu0 0.0
      %3555 = vmatpush1.msra.mxu0 0.0
      %3556 = vmatprep.subr.mxu0 0.0
      %3557 = vmatpush1.msra.mxu0 0.0
      %3558 = vmatprep.subr.mxu0 0.0
      %3559 = vmatpush1.msra.mxu0 0.0
      %3560 = vmatprep.subr.mxu0 0.0
      %3561 = vmatpush1.msra.mxu0 0.0
      %3562 = vmatprep.mubr.f32.mxu0 0.0
      %v3563 = vand.u32 %v2492, 4294901760
      %3564 = vmatmul.mubr.f32.gmra.mrb[0].mxu0 %v3563
      %v3565 = vpop.f32.mrb[0].mxu0
      %v3566 = vadd.f32 %v3483, %v3565
      %v3567 = vpop.f32.mrb[0].mxu0
      %v3568 = vadd.f32 %v3485, %v3567
      %3569 = vmatprep.mubr.f32.mxu0 0.0
      %v3570 = vand.u32 %v2495, 4294901760
      %3571 = vmatmul.mubr.f32.gmra.mrb[0].mxu0 %v3570
      %v3572 = vpop.f32.mrb[0].mxu0
      %v3573 = vadd.f32 %v3490, %v3572
      %v3574 = vpop.f32.mrb[0].mxu0
      %v3575 = vadd.f32 %v3492, %v3574
      %3576 = vdwg.mxu0
      %v3577 = vand.u32 %v2466, 4294901760
      %3578 = vmatprep.subr.mxu0 %v3577
      %v3579 = vand.u32 %v2465, 4294901760
      %3580 = vmatpush1.msra.mxu0 %v3579
      %v3581 = vand.u32 %v2474, 4294901760
      %3582 = vmatprep.subr.mxu0 %v3581
      %v3583 = vand.u32 %v2473, 4294901760
      %3584 = vmatpush1.msra.mxu0 %v3583
      %3585 = vmatprep.subr.mxu0 0.0
      %3586 = vmatpush1.msra.mxu0 0.0
      %3587 = vmatprep.subr.mxu0 0.0
      %3588 = vmatpush1.msra.mxu0 0.0
      %3589 = vmatprep.subr.mxu0 0.0
      %3590 = vmatpush1.msra.mxu0 0.0
      %3591 = vmatprep.subr.mxu0 0.0
      %3592 = vmatpush1.msra.mxu0 0.0
      %3593 = vmatprep.subr.mxu0 0.0
      %3594 = vmatpush1.msra.mxu0 0.0
      %3595 = vmatprep.subr.mxu0 0.0
      %3596 = vmatpush1.msra.mxu0 0.0
      %3597 = vmatprep.subr.mxu0 0.0
      %3598 = vmatpush1.msra.mxu0 0.0
      %3599 = vmatprep.subr.mxu0 0.0
      %3600 = vmatpush1.msra.mxu0 0.0
      %3601 = vmatprep.subr.mxu0 0.0
      %3602 = vmatpush1.msra.mxu0 0.0
      %3603 = vmatprep.subr.mxu0 0.0
      %3604 = vmatpush1.msra.mxu0 0.0
      %3605 = vmatprep.subr.mxu0 0.0
      %3606 = vmatpush1.msra.mxu0 0.0
      %3607 = vmatprep.subr.mxu0 0.0
      %3608 = vmatpush1.msra.mxu0 0.0
      %3609 = vmatprep.subr.mxu0 0.0
      %3610 = vmatpush1.msra.mxu0 0.0
      %3611 = vmatprep.subr.mxu0 0.0
      %3612 = vmatpush1.msra.mxu0 0.0
      %3613 = vmatprep.subr.mxu0 0.0
      %3614 = vmatpush1.msra.mxu0 0.0
      %3615 = vmatprep.subr.mxu0 0.0
      %3616 = vmatpush1.msra.mxu0 0.0
      %3617 = vmatprep.subr.mxu0 0.0
      %3618 = vmatpush1.msra.mxu0 0.0
      %3619 = vmatprep.subr.mxu0 0.0
      %3620 = vmatpush1.msra.mxu0 0.0
      %3621 = vmatprep.subr.mxu0 0.0
      %3622 = vmatpush1.msra.mxu0 0.0
      %3623 = vmatprep.subr.mxu0 0.0
      %3624 = vmatpush1.msra.mxu0 0.0
      %3625 = vmatprep.subr.mxu0 0.0
      %3626 = vmatpush1.msra.mxu0 0.0
      %3627 = vmatprep.subr.mxu0 0.0
      %3628 = vmatpush1.msra.mxu0 0.0
      %3629 = vmatprep.subr.mxu0 0.0
      %3630 = vmatpush1.msra.mxu0 0.0
      %3631 = vmatprep.subr.mxu0 0.0
      %3632 = vmatpush1.msra.mxu0 0.0
      %3633 = vmatprep.subr.mxu0 0.0
      %3634 = vmatpush1.msra.mxu0 0.0
      %3635 = vmatprep.subr.mxu0 0.0
      %3636 = vmatpush1.msra.mxu0 0.0
      %3637 = vmatprep.subr.mxu0 0.0
      %3638 = vmatpush1.msra.mxu0 0.0
      %3639 = vmatprep.subr.mxu0 0.0
      %3640 = vmatpush1.msra.mxu0 0.0
      %3641 = vmatprep.subr.mxu0 0.0
      %3642 = vmatpush1.msra.mxu0 0.0
      %3643 = vmatprep.subr.mxu0 0.0
      %3644 = vmatpush1.msra.mxu0 0.0
      %3645 = vmatprep.mubr.f32.mxu0 0.0
      %v3646 = vand.u32 %v2492, 4294901760
      %v3647 = vsub.f32 %v2492, %v3646
      %v3648 = vand.u32 %v3647, 4294901760
      %v3649 = vsub.f32 %v3647, %v3648
      %v3650 = vand.u32 %v3649, 4294901760
      %3651 = vmatmul.mubr.f32.gmra.mrb[0].mxu0 %v3650
      %v3652 = vpop.f32.mrb[0].mxu0
      %v3653 = vadd.f32 %v2484, %v3652
      %v3654 = vpop.f32.mrb[0].mxu0
      %v3655 = vadd.f32 %v2484, %v3654
      %3656 = vmatprep.mubr.f32.mxu0 0.0
      %v3657 = vand.u32 %v2495, 4294901760
      %v3658 = vsub.f32 %v2495, %v3657
      %v3659 = vand.u32 %v3658, 4294901760
      %v3660 = vsub.f32 %v3658, %v3659
      %v3661 = vand.u32 %v3660, 4294901760
      %3662 = vmatmul.mubr.f32.gmra.mrb[0].mxu0 %v3661
      %v3663 = vpop.f32.mrb[0].mxu0
      %v3664 = vadd.f32 %v2489, %v3663
      %v3665 = vpop.f32.mrb[0].mxu0
      %v3666 = vadd.f32 %v2489, %v3665
      %3667 = vdwg.mxu0
      %v3668 = vand.u32 %v2466, 4294901760
      %v3669 = vsub.f32 %v2466, %v3668
      %v3670 = vand.u32 %v3669, 4294901760
      %v3671 = vsub.f32 %v3669, %v3670
      %v3672 = vand.u32 %v3671, 4294901760
      %3673 = vmatprep.subr.mxu0 %v3672
      %v3674 = vand.u32 %v2465, 4294901760
      %v3675 = vsub.f32 %v2465, %v3674
      %v3676 = vand.u32 %v3675, 4294901760
      %v3677 = vsub.f32 %v3675, %v3676
      %v3678 = vand.u32 %v3677, 4294901760
      %3679 = vmatpush1.msra.mxu0 %v3678
      %v3680 = vand.u32 %v2474, 4294901760
      %v3681 = vsub.f32 %v2474, %v3680
      %v3682 = vand.u32 %v3681, 4294901760
      %v3683 = vsub.f32 %v3681, %v3682
      %v3684 = vand.u32 %v3683, 4294901760
      %3685 = vmatprep.subr.mxu0 %v3684
      %v3686 = vand.u32 %v2473, 4294901760
      %v3687 = vsub.f32 %v2473, %v3686
      %v3688 = vand.u32 %v3687, 4294901760
      %v3689 = vsub.f32 %v3687, %v3688
      %v3690 = vand.u32 %v3689, 4294901760
      %3691 = vmatpush1.msra.mxu0 %v3690
      %3692 = vmatprep.subr.mxu0 0.0
      %3693 = vmatpush1.msra.mxu0 0.0
      %3694 = vmatprep.subr.mxu0 0.0
      %3695 = vmatpush1.msra.mxu0 0.0
      %3696 = vmatprep.subr.mxu0 0.0
      %3697 = vmatpush1.msra.mxu0 0.0
      %3698 = vmatprep.subr.mxu0 0.0
      %3699 = vmatpush1.msra.mxu0 0.0
      %3700 = vmatprep.subr.mxu0 0.0
      %3701 = vmatpush1.msra.mxu0 0.0
      %3702 = vmatprep.subr.mxu0 0.0
      %3703 = vmatpush1.msra.mxu0 0.0
      %3704 = vmatprep.subr.mxu0 0.0
      %3705 = vmatpush1.msra.mxu0 0.0
      %3706 = vmatprep.subr.mxu0 0.0
      %3707 = vmatpush1.msra.mxu0 0.0
      %3708 = vmatprep.subr.mxu0 0.0
      %3709 = vmatpush1.msra.mxu0 0.0
      %3710 = vmatprep.subr.mxu0 0.0
      %3711 = vmatpush1.msra.mxu0 0.0
      %3712 = vmatprep.subr.mxu0 0.0
      %3713 = vmatpush1.msra.mxu0 0.0
      %3714 = vmatprep.subr.mxu0 0.0
      %3715 = vmatpush1.msra.mxu0 0.0
      %3716 = vmatprep.subr.mxu0 0.0
      %3717 = vmatpush1.msra.mxu0 0.0
      %3718 = vmatprep.subr.mxu0 0.0
      %3719 = vmatpush1.msra.mxu0 0.0
      %3720 = vmatprep.subr.mxu0 0.0
      %3721 = vmatpush1.msra.mxu0 0.0
      %3722 = vmatprep.subr.mxu0 0.0
      %3723 = vmatpush1.msra.mxu0 0.0
      %3724 = vmatprep.subr.mxu0 0.0
      %3725 = vmatpush1.msra.mxu0 0.0
      %3726 = vmatprep.subr.mxu0 0.0
      %3727 = vmatpush1.msra.mxu0 0.0
      %3728 = vmatprep.subr.mxu0 0.0
      %3729 = vmatpush1.msra.mxu0 0.0
      %3730 = vmatprep.subr.mxu0 0.0
      %3731 = vmatpush1.msra.mxu0 0.0
      %3732 = vmatprep.subr.mxu0 0.0
      %3733 = vmatpush1.msra.mxu0 0.0
      %3734 = vmatprep.subr.mxu0 0.0
      %3735 = vmatpush1.msra.mxu0 0.0
      %3736 = vmatprep.subr.mxu0 0.0
      %3737 = vmatpush1.msra.mxu0 0.0
      %3738 = vmatprep.subr.mxu0 0.0
      %3739 = vmatpush1.msra.mxu0 0.0
      %3740 = vmatprep.subr.mxu0 0.0
      %3741 = vmatpush1.msra.mxu0 0.0
      %3742 = vmatprep.subr.mxu0 0.0
      %3743 = vmatpush1.msra.mxu0 0.0
      %3744 = vmatprep.subr.mxu0 0.0
      %3745 = vmatpush1.msra.mxu0 0.0
      %3746 = vmatprep.subr.mxu0 0.0
      %3747 = vmatpush1.msra.mxu0 0.0
      %3748 = vmatprep.subr.mxu0 0.0
      %3749 = vmatpush1.msra.mxu0 0.0
      %3750 = vmatprep.subr.mxu0 0.0
      %3751 = vmatpush1.msra.mxu0 0.0
      %3752 = vmatprep.mubr.f32.mxu0 0.0
      %v3753 = vand.u32 %v2492, 4294901760
      %3754 = vmatmul.mubr.f32.gmra.mrb[0].mxu0 %v3753
      %v3755 = vpop.f32.mrb[0].mxu0
      %v3756 = vadd.f32 %v3653, %v3755
      %v3757 = vpop.f32.mrb[0].mxu0
      %v3758 = vadd.f32 %v3655, %v3757
      %3759 = vmatprep.mubr.f32.mxu0 0.0
      %v3760 = vand.u32 %v2495, 4294901760
      %3761 = vmatmul.mubr.f32.gmra.mrb[0].mxu0 %v3760
      %v3762 = vpop.f32.mrb[0].mxu0
      %v3763 = vadd.f32 %v3664, %v3762
      %v3764 = vpop.f32.mrb[0].mxu0
      %v3765 = vadd.f32 %v3666, %v3764
      %3766 = vdwg.mxu0
      %v3767 = vand.u32 %v2466, 4294901760
      %v3768 = vsub.f32 %v2466, %v3767
      %3769 = vmatprep.subr.mxu0 %v3768
      %v3770 = vand.u32 %v2465, 4294901760
      %v3771 = vsub.f32 %v2465, %v3770
      %3772 = vmatpush1.msra.mxu0 %v3771
      %v3773 = vand.u32 %v2474, 4294901760
      %v3774 = vsub.f32 %v2474, %v3773
      %3775 = vmatprep.subr.mxu0 %v3774
      %v3776 = vand.u32 %v2473, 4294901760
      %v3777 = vsub.f32 %v2473, %v3776
      %3778 = vmatpush1.msra.mxu0 %v3777
      %3779 = vmatprep.subr.mxu0 0.0
      %3780 = vmatpush1.msra.mxu0 0.0
      %3781 = vmatprep.subr.mxu0 0.0
      %3782 = vmatpush1.msra.mxu0 0.0
      %3783 = vmatprep.subr.mxu0 0.0
      %3784 = vmatpush1.msra.mxu0 0.0
      %3785 = vmatprep.subr.mxu0 0.0
      %3786 = vmatpush1.msra.mxu0 0.0
      %3787 = vmatprep.subr.mxu0 0.0
      %3788 = vmatpush1.msra.mxu0 0.0
      %3789 = vmatprep.subr.mxu0 0.0
      %3790 = vmatpush1.msra.mxu0 0.0
      %3791 = vmatprep.subr.mxu0 0.0
      %3792 = vmatpush1.msra.mxu0 0.0
      %3793 = vmatprep.subr.mxu0 0.0
      %3794 = vmatpush1.msra.mxu0 0.0
      %3795 = vmatprep.subr.mxu0 0.0
      %3796 = vmatpush1.msra.mxu0 0.0
      %3797 = vmatprep.subr.mxu0 0.0
      %3798 = vmatpush1.msra.mxu0 0.0
      %3799 = vmatprep.subr.mxu0 0.0
      %3800 = vmatpush1.msra.mxu0 0.0
      %3801 = vmatprep.subr.mxu0 0.0
      %3802 = vmatpush1.msra.mxu0 0.0
      %3803 = vmatprep.subr.mxu0 0.0
      %3804 = vmatpush1.msra.mxu0 0.0
      %3805 = vmatprep.subr.mxu0 0.0
      %3806 = vmatpush1.msra.mxu0 0.0
      %3807 = vmatprep.subr.mxu0 0.0
      %3808 = vmatpush1.msra.mxu0 0.0
      %3809 = vmatprep.subr.mxu0 0.0
      %3810 = vmatpush1.msra.mxu0 0.0
      %3811 = vmatprep.subr.mxu0 0.0
      %3812 = vmatpush1.msra.mxu0 0.0
      %3813 = vmatprep.subr.mxu0 0.0
      %3814 = vmatpush1.msra.mxu0 0.0
      %3815 = vmatprep.subr.mxu0 0.0
      %3816 = vmatpush1.msra.mxu0 0.0
      %3817 = vmatprep.subr.mxu0 0.0
      %3818 = vmatpush1.msra.mxu0 0.0
      %3819 = vmatprep.subr.mxu0 0.0
      %3820 = vmatpush1.msra.mxu0 0.0
      %3821 = vmatprep.subr.mxu0 0.0
      %3822 = vmatpush1.msra.mxu0 0.0
      %3823 = vmatprep.subr.mxu0 0.0
      %3824 = vmatpush1.msra.mxu0 0.0
      %3825 = vmatprep.subr.mxu0 0.0
      %3826 = vmatpush1.msra.mxu0 0.0
      %3827 = vmatprep.subr.mxu0 0.0
      %3828 = vmatpush1.msra.mxu0 0.0
      %3829 = vmatprep.subr.mxu0 0.0
      %3830 = vmatpush1.msra.mxu0 0.0
      %3831 = vmatprep.subr.mxu0 0.0
      %3832 = vmatpush1.msra.mxu0 0.0
      %3833 = vmatprep.subr.mxu0 0.0
      %3834 = vmatpush1.msra.mxu0 0.0
      %3835 = vmatprep.subr.mxu0 0.0
      %3836 = vmatpush1.msra.mxu0 0.0
      %3837 = vmatprep.subr.mxu0 0.0
      %3838 = vmatpush1.msra.mxu0 0.0
      %3839 = vmatprep.mubr.f32.mxu0 0.0
      %v3840 = vand.u32 %v2492, 4294901760
      %v3841 = vsub.f32 %v2492, %v3840
      %3842 = vmatmul.mubr.f32.gmra.mrb[0].mxu0 %v3841
      %v3843 = vpop.f32.mrb[0].mxu0
      %v3844 = vadd.f32 %v3756, %v3843
      %v3845 = vpop.f32.mrb[0].mxu0
      %v3846 = vadd.f32 %v3758, %v3845
      %3847 = vmatprep.mubr.f32.mxu0 0.0
      %v3848 = vand.u32 %v2495, 4294901760
      %v3849 = vsub.f32 %v2495, %v3848
      %3850 = vmatmul.mubr.f32.gmra.mrb[0].mxu0 %v3849
      %v3851 = vpop.f32.mrb[0].mxu0
      %v3852 = vadd.f32 %v3763, %v3851
      %v3853 = vpop.f32.mrb[0].mxu0
      %v3854 = vadd.f32 %v3765, %v3853
      %3855 = vdwg.mxu0
      %v3856 = vand.u32 %v2466, 4294901760
      %3857 = vmatprep.subr.mxu0 %v3856
      %v3858 = vand.u32 %v2465, 4294901760
      %3859 = vmatpush1.msra.mxu0 %v3858
      %v3860 = vand.u32 %v2474, 4294901760
      %3861 = vmatprep.subr.mxu0 %v3860
      %v3862 = vand.u32 %v2473, 4294901760
      %3863 = vmatpush1.msra.mxu0 %v3862
      %3864 = vmatprep.subr.mxu0 0.0
      %3865 = vmatpush1.msra.mxu0 0.0
      %3866 = vmatprep.subr.mxu0 0.0
      %3867 = vmatpush1.msra.mxu0 0.0
      %3868 = vmatprep.subr.mxu0 0.0
      %3869 = vmatpush1.msra.mxu0 0.0
      %3870 = vmatprep.subr.mxu0 0.0
      %3871 = vmatpush1.msra.mxu0 0.0
      %3872 = vmatprep.subr.mxu0 0.0
      %3873 = vmatpush1.msra.mxu0 0.0
      %3874 = vmatprep.subr.mxu0 0.0
      %3875 = vmatpush1.msra.mxu0 0.0
      %3876 = vmatprep.subr.mxu0 0.0
      %3877 = vmatpush1.msra.mxu0 0.0
      %3878 = vmatprep.subr.mxu0 0.0
      %3879 = vmatpush1.msra.mxu0 0.0
      %3880 = vmatprep.subr.mxu0 0.0
      %3881 = vmatpush1.msra.mxu0 0.0
      %3882 = vmatprep.subr.mxu0 0.0
      %3883 = vmatpush1.msra.mxu0 0.0
      %3884 = vmatprep.subr.mxu0 0.0
      %3885 = vmatpush1.msra.mxu0 0.0
      %3886 = vmatprep.subr.mxu0 0.0
      %3887 = vmatpush1.msra.mxu0 0.0
      %3888 = vmatprep.subr.mxu0 0.0
      %3889 = vmatpush1.msra.mxu0 0.0
      %3890 = vmatprep.subr.mxu0 0.0
      %3891 = vmatpush1.msra.mxu0 0.0
      %3892 = vmatprep.subr.mxu0 0.0
      %3893 = vmatpush1.msra.mxu0 0.0
      %3894 = vmatprep.subr.mxu0 0.0
      %3895 = vmatpush1.msra.mxu0 0.0
      %3896 = vmatprep.subr.mxu0 0.0
      %3897 = vmatpush1.msra.mxu0 0.0
      %3898 = vmatprep.subr.mxu0 0.0
      %3899 = vmatpush1.msra.mxu0 0.0
      %3900 = vmatprep.subr.mxu0 0.0
      %3901 = vmatpush1.msra.mxu0 0.0
      %3902 = vmatprep.subr.mxu0 0.0
      %3903 = vmatpush1.msra.mxu0 0.0
      %3904 = vmatprep.subr.mxu0 0.0
      %3905 = vmatpush1.msra.mxu0 0.0
      %3906 = vmatprep.subr.mxu0 0.0
      %3907 = vmatpush1.msra.mxu0 0.0
      %3908 = vmatprep.subr.mxu0 0.0
      %3909 = vmatpush1.msra.mxu0 0.0
      %3910 = vmatprep.subr.mxu0 0.0
      %3911 = vmatpush1.msra.mxu0 0.0
      %3912 = vmatprep.subr.mxu0 0.0
      %3913 = vmatpush1.msra.mxu0 0.0
      %3914 = vmatprep.subr.mxu0 0.0
      %3915 = vmatpush1.msra.mxu0 0.0
      %3916 = vmatprep.subr.mxu0 0.0
      %3917 = vmatpush1.msra.mxu0 0.0
      %3918 = vmatprep.subr.mxu0 0.0
      %3919 = vmatpush1.msra.mxu0 0.0
      %3920 = vmatprep.subr.mxu0 0.0
      %3921 = vmatpush1.msra.mxu0 0.0
      %3922 = vmatprep.subr.mxu0 0.0
      %3923 = vmatpush1.msra.mxu0 0.0
      %3924 = vmatprep.mubr.f32.mxu0 0.0
      %v3925 = vand.u32 %v2492, 4294901760
      %v3926 = vsub.f32 %v2492, %v3925
      %v3927 = vand.u32 %v3926, 4294901760
      %3928 = vmatmul.mubr.f32.gmra.mrb[0].mxu0 %v3927
      %v3929 = vpop.f32.mrb[0].mxu0
      %v3930 = vadd.f32 %v3844, %v3929
      %v3931 = vpop.f32.mrb[0].mxu0
      %v3932 = vadd.f32 %v3846, %v3931
      %3933 = vmatprep.mubr.f32.mxu0 0.0
      %v3934 = vand.u32 %v2495, 4294901760
      %v3935 = vsub.f32 %v2495, %v3934
      %v3936 = vand.u32 %v3935, 4294901760
      %3937 = vmatmul.mubr.f32.gmra.mrb[0].mxu0 %v3936
      %v3938 = vpop.f32.mrb[0].mxu0
      %v3939 = vadd.f32 %v3852, %v3938
      %v3940 = vpop.f32.mrb[0].mxu0
      %v3941 = vadd.f32 %v3854, %v3940
      %3942 = vdwg.mxu0
      %v3943 = vand.u32 %v2466, 4294901760
      %v3944 = vsub.f32 %v2466, %v3943
      %v3945 = vand.u32 %v3944, 4294901760
      %3946 = vmatprep.subr.mxu0 %v3945
      %v3947 = vand.u32 %v2465, 4294901760
      %v3948 = vsub.f32 %v2465, %v3947
      %v3949 = vand.u32 %v3948, 4294901760
      %3950 = vmatpush1.msra.mxu0 %v3949
      %v3951 = vand.u32 %v2474, 4294901760
      %v3952 = vsub.f32 %v2474, %v3951
      %v3953 = vand.u32 %v3952, 4294901760
      %3954 = vmatprep.subr.mxu0 %v3953
      %v3955 = vand.u32 %v2473, 4294901760
      %v3956 = vsub.f32 %v2473, %v3955
      %v3957 = vand.u32 %v3956, 4294901760
      %3958 = vmatpush1.msra.mxu0 %v3957
      %3959 = vmatprep.subr.mxu0 0.0
      %3960 = vmatpush1.msra.mxu0 0.0
      %3961 = vmatprep.subr.mxu0 0.0
      %3962 = vmatpush1.msra.mxu0 0.0
      %3963 = vmatprep.subr.mxu0 0.0
      %3964 = vmatpush1.msra.mxu0 0.0
      %3965 = vmatprep.subr.mxu0 0.0
      %3966 = vmatpush1.msra.mxu0 0.0
      %3967 = vmatprep.subr.mxu0 0.0
      %3968 = vmatpush1.msra.mxu0 0.0
      %3969 = vmatprep.subr.mxu0 0.0
      %3970 = vmatpush1.msra.mxu0 0.0
      %3971 = vmatprep.subr.mxu0 0.0
      %3972 = vmatpush1.msra.mxu0 0.0
      %3973 = vmatprep.subr.mxu0 0.0
      %3974 = vmatpush1.msra.mxu0 0.0
      %3975 = vmatprep.subr.mxu0 0.0
      %3976 = vmatpush1.msra.mxu0 0.0
      %3977 = vmatprep.subr.mxu0 0.0
      %3978 = vmatpush1.msra.mxu0 0.0
      %3979 = vmatprep.subr.mxu0 0.0
      %3980 = vmatpush1.msra.mxu0 0.0
      %3981 = vmatprep.subr.mxu0 0.0
      %3982 = vmatpush1.msra.mxu0 0.0
      %3983 = vmatprep.subr.mxu0 0.0
      %3984 = vmatpush1.msra.mxu0 0.0
      %3985 = vmatprep.subr.mxu0 0.0
      %3986 = vmatpush1.msra.mxu0 0.0
      %3987 = vmatprep.subr.mxu0 0.0
      %3988 = vmatpush1.msra.mxu0 0.0
      %3989 = vmatprep.subr.mxu0 0.0
      %3990 = vmatpush1.msra.mxu0 0.0
      %3991 = vmatprep.subr.mxu0 0.0
      %3992 = vmatpush1.msra.mxu0 0.0
      %3993 = vmatprep.subr.mxu0 0.0
      %3994 = vmatpush1.msra.mxu0 0.0
      %3995 = vmatprep.subr.mxu0 0.0
      %3996 = vmatpush1.msra.mxu0 0.0
      %3997 = vmatprep.subr.mxu0 0.0
      %3998 = vmatpush1.msra.mxu0 0.0
      %3999 = vmatprep.subr.mxu0 0.0
      %4000 = vmatpush1.msra.mxu0 0.0
      %4001 = vmatprep.subr.mxu0 0.0
      %4002 = vmatpush1.msra.mxu0 0.0
      %4003 = vmatprep.subr.mxu0 0.0
      %4004 = vmatpush1.msra.mxu0 0.0
      %4005 = vmatprep.subr.mxu0 0.0
      %4006 = vmatpush1.msra.mxu0 0.0
      %4007 = vmatprep.subr.mxu0 0.0
      %4008 = vmatpush1.msra.mxu0 0.0
      %4009 = vmatprep.subr.mxu0 0.0
      %4010 = vmatpush1.msra.mxu0 0.0
      %4011 = vmatprep.subr.mxu0 0.0
      %4012 = vmatpush1.msra.mxu0 0.0
      %4013 = vmatprep.subr.mxu0 0.0
      %4014 = vmatpush1.msra.mxu0 0.0
      %4015 = vmatprep.subr.mxu0 0.0
      %4016 = vmatpush1.msra.mxu0 0.0
      %4017 = vmatprep.subr.mxu0 0.0
      %4018 = vmatpush1.msra.mxu0 0.0
      %4019 = vmatprep.mubr.f32.mxu0 0.0
      %v4020 = vand.u32 %v2492, 4294901760
      %4021 = vmatmul.mubr.f32.gmra.mrb[0].mxu0 %v4020
      %v4022 = vpop.f32.mrb[0].mxu0
      %v4023 = vadd.f32 %v3930, %v4022
      %v4024 = vpop.f32.mrb[0].mxu0
      %v4025 = vadd.f32 %v3932, %v4024
      %4026 = vmatprep.mubr.f32.mxu0 0.0
      %v4027 = vand.u32 %v2495, 4294901760
      %4028 = vmatmul.mubr.f32.gmra.mrb[0].mxu0 %v4027
      %v4029 = vpop.f32.mrb[0].mxu0
      %v4030 = vadd.f32 %v3939, %v4029
      %v4031 = vpop.f32.mrb[0].mxu0
      %v4032 = vadd.f32 %v3941, %v4031
      %4033 = vdwg.mxu0
      %v4034 = vand.u32 %v2466, 4294901760
      %4035 = vmatprep.subr.mxu0 %v4034
      %v4036 = vand.u32 %v2465, 4294901760
      %4037 = vmatpush1.msra.mxu0 %v4036
      %v4038 = vand.u32 %v2474, 4294901760
      %4039 = vmatprep.subr.mxu0 %v4038
      %v4040 = vand.u32 %v2473, 4294901760
      %4041 = vmatpush1.msra.mxu0 %v4040
      %4042 = vmatprep.subr.mxu0 0.0
      %4043 = vmatpush1.msra.mxu0 0.0
      %4044 = vmatprep.subr.mxu0 0.0
      %4045 = vmatpush1.msra.mxu0 0.0
      %4046 = vmatprep.subr.mxu0 0.0
      %4047 = vmatpush1.msra.mxu0 0.0
      %4048 = vmatprep.subr.mxu0 0.0
      %4049 = vmatpush1.msra.mxu0 0.0
      %4050 = vmatprep.subr.mxu0 0.0
      %4051 = vmatpush1.msra.mxu0 0.0
      %4052 = vmatprep.subr.mxu0 0.0
      %4053 = vmatpush1.msra.mxu0 0.0
      %4054 = vmatprep.subr.mxu0 0.0
      %4055 = vmatpush1.msra.mxu0 0.0
      %4056 = vmatprep.subr.mxu0 0.0
      %4057 = vmatpush1.msra.mxu0 0.0
      %4058 = vmatprep.subr.mxu0 0.0
      %4059 = vmatpush1.msra.mxu0 0.0
      %4060 = vmatprep.subr.mxu0 0.0
      %4061 = vmatpush1.msra.mxu0 0.0
      %4062 = vmatprep.subr.mxu0 0.0
      %4063 = vmatpush1.msra.mxu0 0.0
      %4064 = vmatprep.subr.mxu0 0.0
      %4065 = vmatpush1.msra.mxu0 0.0
      %4066 = vmatprep.subr.mxu0 0.0
      %4067 = vmatpush1.msra.mxu0 0.0
      %4068 = vmatprep.subr.mxu0 0.0
      %4069 = vmatpush1.msra.mxu0 0.0
      %4070 = vmatprep.subr.mxu0 0.0
      %4071 = vmatpush1.msra.mxu0 0.0
      %4072 = vmatprep.subr.mxu0 0.0
      %4073 = vmatpush1.msra.mxu0 0.0
      %4074 = vmatprep.subr.mxu0 0.0
      %4075 = vmatpush1.msra.mxu0 0.0
      %4076 = vmatprep.subr.mxu0 0.0
      %4077 = vmatpush1.msra.mxu0 0.0
      %4078 = vmatprep.subr.mxu0 0.0
      %4079 = vmatpush1.msra.mxu0 0.0
      %4080 = vmatprep.subr.mxu0 0.0
      %4081 = vmatpush1.msra.mxu0 0.0
      %4082 = vmatprep.subr.mxu0 0.0
      %4083 = vmatpush1.msra.mxu0 0.0
      %4084 = vmatprep.subr.mxu0 0.0
      %4085 = vmatpush1.msra.mxu0 0.0
      %4086 = vmatprep.subr.mxu0 0.0
      %4087 = vmatpush1.msra.mxu0 0.0
      %4088 = vmatprep.subr.mxu0 0.0
      %4089 = vmatpush1.msra.mxu0 0.0
      %4090 = vmatprep.subr.mxu0 0.0
      %4091 = vmatpush1.msra.mxu0 0.0
      %4092 = vmatprep.subr.mxu0 0.0
      %4093 = vmatpush1.msra.mxu0 0.0
      %4094 = vmatprep.subr.mxu0 0.0
      %4095 = vmatpush1.msra.mxu0 0.0
      %4096 = vmatprep.subr.mxu0 0.0
      %4097 = vmatpush1.msra.mxu0 0.0
      %4098 = vmatprep.subr.mxu0 0.0
      %4099 = vmatpush1.msra.mxu0 0.0
      %4100 = vmatprep.subr.mxu0 0.0
      %4101 = vmatpush1.msra.mxu0 0.0
      %4102 = vmatprep.mubr.f32.mxu0 0.0
      %v4103 = vand.u32 %v2492, 4294901760
      %4104 = vmatmul.mubr.f32.gmra.mrb[0].mxu0 %v4103
      %v4105 = vpop.f32.mrb[0].mxu0
      %v4106 = vadd.f32 %v4023, %v4105
      %v4107 = vpop.f32.mrb[0].mxu0
      %v4108 = vadd.f32 %v4025, %v4107
      %4109 = vmatprep.mubr.f32.mxu0 0.0
      %v4110 = vand.u32 %v2495, 4294901760
      %4111 = vmatmul.mubr.f32.gmra.mrb[0].mxu0 %v4110
      %v4112 = vpop.f32.mrb[0].mxu0
      %v4113 = vadd.f32 %v4030, %v4112
      %v4114 = vpop.f32.mrb[0].mxu0
      %v4115 = vadd.f32 %v4032, %v4114
      %4116 = vdwg.mxu0
      %v4117 = vand.u32 %v2468, 4294901760
      %4118 = vmatprep.subr.mxu0 %v4117
      %v4119 = vand.u32 %v2467, 4294901760
      %4120 = vmatpush1.msra.mxu0 %v4119
      %v4121 = vand.u32 %v2476, 4294901760
      %4122 = vmatprep.subr.mxu0 %v4121
      %v4123 = vand.u32 %v2475, 4294901760
      %4124 = vmatpush1.msra.mxu0 %v4123
      %4125 = vmatprep.subr.mxu0 0.0
      %4126 = vmatpush1.msra.mxu0 0.0
      %4127 = vmatprep.subr.mxu0 0.0
      %4128 = vmatpush1.msra.mxu0 0.0
      %4129 = vmatprep.subr.mxu0 0.0
      %4130 = vmatpush1.msra.mxu0 0.0
      %4131 = vmatprep.subr.mxu0 0.0
      %4132 = vmatpush1.msra.mxu0 0.0
      %4133 = vmatprep.subr.mxu0 0.0
      %4134 = vmatpush1.msra.mxu0 0.0
      %4135 = vmatprep.subr.mxu0 0.0
      %4136 = vmatpush1.msra.mxu0 0.0
      %4137 = vmatprep.subr.mxu0 0.0
      %4138 = vmatpush1.msra.mxu0 0.0
      %4139 = vmatprep.subr.mxu0 0.0
      %4140 = vmatpush1.msra.mxu0 0.0
      %4141 = vmatprep.subr.mxu0 0.0
      %4142 = vmatpush1.msra.mxu0 0.0
      %4143 = vmatprep.subr.mxu0 0.0
      %4144 = vmatpush1.msra.mxu0 0.0
      %4145 = vmatprep.subr.mxu0 0.0
      %4146 = vmatpush1.msra.mxu0 0.0
      %4147 = vmatprep.subr.mxu0 0.0
      %4148 = vmatpush1.msra.mxu0 0.0
      %4149 = vmatprep.subr.mxu0 0.0
      %4150 = vmatpush1.msra.mxu0 0.0
      %4151 = vmatprep.subr.mxu0 0.0
      %4152 = vmatpush1.msra.mxu0 0.0
      %4153 = vmatprep.subr.mxu0 0.0
      %4154 = vmatpush1.msra.mxu0 0.0
      %4155 = vmatprep.subr.mxu0 0.0
      %4156 = vmatpush1.msra.mxu0 0.0
      %4157 = vmatprep.subr.mxu0 0.0
      %4158 = vmatpush1.msra.mxu0 0.0
      %4159 = vmatprep.subr.mxu0 0.0
      %4160 = vmatpush1.msra.mxu0 0.0
      %4161 = vmatprep.subr.mxu0 0.0
      %4162 = vmatpush1.msra.mxu0 0.0
      %4163 = vmatprep.subr.mxu0 0.0
      %4164 = vmatpush1.msra.mxu0 0.0
      %4165 = vmatprep.subr.mxu0 0.0
      %4166 = vmatpush1.msra.mxu0 0.0
      %4167 = vmatprep.subr.mxu0 0.0
      %4168 = vmatpush1.msra.mxu0 0.0
      %4169 = vmatprep.subr.mxu0 0.0
      %4170 = vmatpush1.msra.mxu0 0.0
      %4171 = vmatprep.subr.mxu0 0.0
      %4172 = vmatpush1.msra.mxu0 0.0
      %4173 = vmatprep.subr.mxu0 0.0
      %4174 = vmatpush1.msra.mxu0 0.0
      %4175 = vmatprep.subr.mxu0 0.0
      %4176 = vmatpush1.msra.mxu0 0.0
      %4177 = vmatprep.subr.mxu0 0.0
      %4178 = vmatpush1.msra.mxu0 0.0
      %4179 = vmatprep.subr.mxu0 0.0
      %4180 = vmatpush1.msra.mxu0 0.0
      %4181 = vmatprep.subr.mxu0 0.0
      %4182 = vmatpush1.msra.mxu0 0.0
      %4183 = vmatprep.subr.mxu0 0.0
      %4184 = vmatpush1.msra.mxu0 0.0
      %4185 = vmatprep.mubr.f32.mxu0 0.0
      %v4186 = vand.u32 %v2492, 4294901760
      %v4187 = vsub.f32 %v2492, %v4186
      %v4188 = vand.u32 %v4187, 4294901760
      %v4189 = vsub.f32 %v4187, %v4188
      %v4190 = vand.u32 %v4189, 4294901760
      %4191 = vmatmul.mubr.f32.gmra.mrb[0].mxu0 %v4190
      %v4192 = vpop.f32.mrb[0].mxu0
      %v4193 = vadd.f32 %v2484, %v4192
      %v4194 = vpop.f32.mrb[0].mxu0
      %v4195 = vadd.f32 %v2484, %v4194
      %4196 = vmatprep.mubr.f32.mxu0 0.0
      %v4197 = vand.u32 %v2495, 4294901760
      %v4198 = vsub.f32 %v2495, %v4197
      %v4199 = vand.u32 %v4198, 4294901760
      %v4200 = vsub.f32 %v4198, %v4199
      %v4201 = vand.u32 %v4200, 4294901760
      %4202 = vmatmul.mubr.f32.gmra.mrb[0].mxu0 %v4201
      %v4203 = vpop.f32.mrb[0].mxu0
      %v4204 = vadd.f32 %v2489, %v4203
      %v4205 = vpop.f32.mrb[0].mxu0
      %v4206 = vadd.f32 %v2489, %v4205
      %4207 = vdwg.mxu0
      %v4208 = vand.u32 %v2468, 4294901760
      %v4209 = vsub.f32 %v2468, %v4208
      %v4210 = vand.u32 %v4209, 4294901760
      %v4211 = vsub.f32 %v4209, %v4210
      %v4212 = vand.u32 %v4211, 4294901760
      %4213 = vmatprep.subr.mxu0 %v4212
      %v4214 = vand.u32 %v2467, 4294901760
      %v4215 = vsub.f32 %v2467, %v4214
      %v4216 = vand.u32 %v4215, 4294901760
      %v4217 = vsub.f32 %v4215, %v4216
      %v4218 = vand.u32 %v4217, 4294901760
      %4219 = vmatpush1.msra.mxu0 %v4218
      %v4220 = vand.u32 %v2476, 4294901760
      %v4221 = vsub.f32 %v2476, %v4220
      %v4222 = vand.u32 %v4221, 4294901760
      %v4223 = vsub.f32 %v4221, %v4222
      %v4224 = vand.u32 %v4223, 4294901760
      %4225 = vmatprep.subr.mxu0 %v4224
      %v4226 = vand.u32 %v2475, 4294901760
      %v4227 = vsub.f32 %v2475, %v4226
      %v4228 = vand.u32 %v4227, 4294901760
      %v4229 = vsub.f32 %v4227, %v4228
      %v4230 = vand.u32 %v4229, 4294901760
      %4231 = vmatpush1.msra.mxu0 %v4230
      %4232 = vmatprep.subr.mxu0 0.0
      %4233 = vmatpush1.msra.mxu0 0.0
      %4234 = vmatprep.subr.mxu0 0.0
      %4235 = vmatpush1.msra.mxu0 0.0
      %4236 = vmatprep.subr.mxu0 0.0
      %4237 = vmatpush1.msra.mxu0 0.0
      %4238 = vmatprep.subr.mxu0 0.0
      %4239 = vmatpush1.msra.mxu0 0.0
      %4240 = vmatprep.subr.mxu0 0.0
      %4241 = vmatpush1.msra.mxu0 0.0
      %4242 = vmatprep.subr.mxu0 0.0
      %4243 = vmatpush1.msra.mxu0 0.0
      %4244 = vmatprep.subr.mxu0 0.0
      %4245 = vmatpush1.msra.mxu0 0.0
      %4246 = vmatprep.subr.mxu0 0.0
      %4247 = vmatpush1.msra.mxu0 0.0
      %4248 = vmatprep.subr.mxu0 0.0
      %4249 = vmatpush1.msra.mxu0 0.0
      %4250 = vmatprep.subr.mxu0 0.0
      %4251 = vmatpush1.msra.mxu0 0.0
      %4252 = vmatprep.subr.mxu0 0.0
      %4253 = vmatpush1.msra.mxu0 0.0
      %4254 = vmatprep.subr.mxu0 0.0
      %4255 = vmatpush1.msra.mxu0 0.0
      %4256 = vmatprep.subr.mxu0 0.0
      %4257 = vmatpush1.msra.mxu0 0.0
      %4258 = vmatprep.subr.mxu0 0.0
      %4259 = vmatpush1.msra.mxu0 0.0
      %4260 = vmatprep.subr.mxu0 0.0
      %4261 = vmatpush1.msra.mxu0 0.0
      %4262 = vmatprep.subr.mxu0 0.0
      %4263 = vmatpush1.msra.mxu0 0.0
      %4264 = vmatprep.subr.mxu0 0.0
      %4265 = vmatpush1.msra.mxu0 0.0
      %4266 = vmatprep.subr.mxu0 0.0
      %4267 = vmatpush1.msra.mxu0 0.0
      %4268 = vmatprep.subr.mxu0 0.0
      %4269 = vmatpush1.msra.mxu0 0.0
      %4270 = vmatprep.subr.mxu0 0.0
      %4271 = vmatpush1.msra.mxu0 0.0
      %4272 = vmatprep.subr.mxu0 0.0
      %4273 = vmatpush1.msra.mxu0 0.0
      %4274 = vmatprep.subr.mxu0 0.0
      %4275 = vmatpush1.msra.mxu0 0.0
      %4276 = vmatprep.subr.mxu0 0.0
      %4277 = vmatpush1.msra.mxu0 0.0
      %4278 = vmatprep.subr.mxu0 0.0
      %4279 = vmatpush1.msra.mxu0 0.0
      %4280 = vmatprep.subr.mxu0 0.0
      %4281 = vmatpush1.msra.mxu0 0.0
      %4282 = vmatprep.subr.mxu0 0.0
      %4283 = vmatpush1.msra.mxu0 0.0
      %4284 = vmatprep.subr.mxu0 0.0
      %4285 = vmatpush1.msra.mxu0 0.0
      %4286 = vmatprep.subr.mxu0 0.0
      %4287 = vmatpush1.msra.mxu0 0.0
      %4288 = vmatprep.subr.mxu0 0.0
      %4289 = vmatpush1.msra.mxu0 0.0
      %4290 = vmatprep.subr.mxu0 0.0
      %4291 = vmatpush1.msra.mxu0 0.0
      %4292 = vmatprep.mubr.f32.mxu0 0.0
      %v4293 = vand.u32 %v2492, 4294901760
      %4294 = vmatmul.mubr.f32.gmra.mrb[0].mxu0 %v4293
      %v4295 = vpop.f32.mrb[0].mxu0
      %v4296 = vadd.f32 %v4193, %v4295
      %v4297 = vpop.f32.mrb[0].mxu0
      %v4298 = vadd.f32 %v4195, %v4297
      %4299 = vmatprep.mubr.f32.mxu0 0.0
      %v4300 = vand.u32 %v2495, 4294901760
      %4301 = vmatmul.mubr.f32.gmra.mrb[0].mxu0 %v4300
      %v4302 = vpop.f32.mrb[0].mxu0
      %v4303 = vadd.f32 %v4204, %v4302
      %v4304 = vpop.f32.mrb[0].mxu0
      %v4305 = vadd.f32 %v4206, %v4304
      %4306 = vdwg.mxu0
      %v4307 = vand.u32 %v2468, 4294901760
      %v4308 = vsub.f32 %v2468, %v4307
      %4309 = vmatprep.subr.mxu0 %v4308
      %v4310 = vand.u32 %v2467, 4294901760
      %v4311 = vsub.f32 %v2467, %v4310
      %4312 = vmatpush1.msra.mxu0 %v4311
      %v4313 = vand.u32 %v2476, 4294901760
      %v4314 = vsub.f32 %v2476, %v4313
      %4315 = vmatprep.subr.mxu0 %v4314
      %v4316 = vand.u32 %v2475, 4294901760
      %v4317 = vsub.f32 %v2475, %v4316
      %4318 = vmatpush1.msra.mxu0 %v4317
      %4319 = vmatprep.subr.mxu0 0.0
      %4320 = vmatpush1.msra.mxu0 0.0
      %4321 = vmatprep.subr.mxu0 0.0
      %4322 = vmatpush1.msra.mxu0 0.0
      %4323 = vmatprep.subr.mxu0 0.0
      %4324 = vmatpush1.msra.mxu0 0.0
      %4325 = vmatprep.subr.mxu0 0.0
      %4326 = vmatpush1.msra.mxu0 0.0
      %4327 = vmatprep.subr.mxu0 0.0
      %4328 = vmatpush1.msra.mxu0 0.0
      %4329 = vmatprep.subr.mxu0 0.0
      %4330 = vmatpush1.msra.mxu0 0.0
      %4331 = vmatprep.subr.mxu0 0.0
      %4332 = vmatpush1.msra.mxu0 0.0
      %4333 = vmatprep.subr.mxu0 0.0
      %4334 = vmatpush1.msra.mxu0 0.0
      %4335 = vmatprep.subr.mxu0 0.0
      %4336 = vmatpush1.msra.mxu0 0.0
      %4337 = vmatprep.subr.mxu0 0.0
      %4338 = vmatpush1.msra.mxu0 0.0
      %4339 = vmatprep.subr.mxu0 0.0
      %4340 = vmatpush1.msra.mxu0 0.0
      %4341 = vmatprep.subr.mxu0 0.0
      %4342 = vmatpush1.msra.mxu0 0.0
      %4343 = vmatprep.subr.mxu0 0.0
      %4344 = vmatpush1.msra.mxu0 0.0
      %4345 = vmatprep.subr.mxu0 0.0
      %4346 = vmatpush1.msra.mxu0 0.0
      %4347 = vmatprep.subr.mxu0 0.0
      %4348 = vmatpush1.msra.mxu0 0.0
      %4349 = vmatprep.subr.mxu0 0.0
      %4350 = vmatpush1.msra.mxu0 0.0
      %4351 = vmatprep.subr.mxu0 0.0
      %4352 = vmatpush1.msra.mxu0 0.0
      %4353 = vmatprep.subr.mxu0 0.0
      %4354 = vmatpush1.msra.mxu0 0.0
      %4355 = vmatprep.subr.mxu0 0.0
      %4356 = vmatpush1.msra.mxu0 0.0
      %4357 = vmatprep.subr.mxu0 0.0
      %4358 = vmatpush1.msra.mxu0 0.0
      %4359 = vmatprep.subr.mxu0 0.0
      %4360 = vmatpush1.msra.mxu0 0.0
      %4361 = vmatprep.subr.mxu0 0.0
      %4362 = vmatpush1.msra.mxu0 0.0
      %4363 = vmatprep.subr.mxu0 0.0
      %4364 = vmatpush1.msra.mxu0 0.0
      %4365 = vmatprep.subr.mxu0 0.0
      %4366 = vmatpush1.msra.mxu0 0.0
      %4367 = vmatprep.subr.mxu0 0.0
      %4368 = vmatpush1.msra.mxu0 0.0
      %4369 = vmatprep.subr.mxu0 0.0
      %4370 = vmatpush1.msra.mxu0 0.0
      %4371 = vmatprep.subr.mxu0 0.0
      %4372 = vmatpush1.msra.mxu0 0.0
      %4373 = vmatprep.subr.mxu0 0.0
      %4374 = vmatpush1.msra.mxu0 0.0
      %4375 = vmatprep.subr.mxu0 0.0
      %4376 = vmatpush1.msra.mxu0 0.0
      %4377 = vmatprep.subr.mxu0 0.0
      %4378 = vmatpush1.msra.mxu0 0.0
      %4379 = vmatprep.mubr.f32.mxu0 0.0
      %v4380 = vand.u32 %v2492, 4294901760
      %v4381 = vsub.f32 %v2492, %v4380
      %4382 = vmatmul.mubr.f32.gmra.mrb[0].mxu0 %v4381
      %v4383 = vpop.f32.mrb[0].mxu0
      %v4384 = vadd.f32 %v4296, %v4383
      %v4385 = vpop.f32.mrb[0].mxu0
      %v4386 = vadd.f32 %v4298, %v4385
      %4387 = vmatprep.mubr.f32.mxu0 0.0
      %v4388 = vand.u32 %v2495, 4294901760
      %v4389 = vsub.f32 %v2495, %v4388
      %4390 = vmatmul.mubr.f32.gmra.mrb[0].mxu0 %v4389
      %v4391 = vpop.f32.mrb[0].mxu0
      %v4392 = vadd.f32 %v4303, %v4391
      %v4393 = vpop.f32.mrb[0].mxu0
      %v4394 = vadd.f32 %v4305, %v4393
      %4395 = vdwg.mxu0
      %v4396 = vand.u32 %v2468, 4294901760
      %4397 = vmatprep.subr.mxu0 %v4396
      %v4398 = vand.u32 %v2467, 4294901760
      %4399 = vmatpush1.msra.mxu0 %v4398
      %v4400 = vand.u32 %v2476, 4294901760
      %4401 = vmatprep.subr.mxu0 %v4400
      %v4402 = vand.u32 %v2475, 4294901760
      %4403 = vmatpush1.msra.mxu0 %v4402
      %4404 = vmatprep.subr.mxu0 0.0
      %4405 = vmatpush1.msra.mxu0 0.0
      %4406 = vmatprep.subr.mxu0 0.0
      %4407 = vmatpush1.msra.mxu0 0.0
      %4408 = vmatprep.subr.mxu0 0.0
      %4409 = vmatpush1.msra.mxu0 0.0
      %4410 = vmatprep.subr.mxu0 0.0
      %4411 = vmatpush1.msra.mxu0 0.0
      %4412 = vmatprep.subr.mxu0 0.0
      %4413 = vmatpush1.msra.mxu0 0.0
      %4414 = vmatprep.subr.mxu0 0.0
      %4415 = vmatpush1.msra.mxu0 0.0
      %4416 = vmatprep.subr.mxu0 0.0
      %4417 = vmatpush1.msra.mxu0 0.0
      %4418 = vmatprep.subr.mxu0 0.0
      %4419 = vmatpush1.msra.mxu0 0.0
      %4420 = vmatprep.subr.mxu0 0.0
      %4421 = vmatpush1.msra.mxu0 0.0
      %4422 = vmatprep.subr.mxu0 0.0
      %4423 = vmatpush1.msra.mxu0 0.0
      %4424 = vmatprep.subr.mxu0 0.0
      %4425 = vmatpush1.msra.mxu0 0.0
      %4426 = vmatprep.subr.mxu0 0.0
      %4427 = vmatpush1.msra.mxu0 0.0
      %4428 = vmatprep.subr.mxu0 0.0
      %4429 = vmatpush1.msra.mxu0 0.0
      %4430 = vmatprep.subr.mxu0 0.0
      %4431 = vmatpush1.msra.mxu0 0.0
      %4432 = vmatprep.subr.mxu0 0.0
      %4433 = vmatpush1.msra.mxu0 0.0
      %4434 = vmatprep.subr.mxu0 0.0
      %4435 = vmatpush1.msra.mxu0 0.0
      %4436 = vmatprep.subr.mxu0 0.0
      %4437 = vmatpush1.msra.mxu0 0.0
      %4438 = vmatprep.subr.mxu0 0.0
      %4439 = vmatpush1.msra.mxu0 0.0
      %4440 = vmatprep.subr.mxu0 0.0
      %4441 = vmatpush1.msra.mxu0 0.0
      %4442 = vmatprep.subr.mxu0 0.0
      %4443 = vmatpush1.msra.mxu0 0.0
      %4444 = vmatprep.subr.mxu0 0.0
      %4445 = vmatpush1.msra.mxu0 0.0
      %4446 = vmatprep.subr.mxu0 0.0
      %4447 = vmatpush1.msra.mxu0 0.0
      %4448 = vmatprep.subr.mxu0 0.0
      %4449 = vmatpush1.msra.mxu0 0.0
      %4450 = vmatprep.subr.mxu0 0.0
      %4451 = vmatpush1.msra.mxu0 0.0
      %4452 = vmatprep.subr.mxu0 0.0
      %4453 = vmatpush1.msra.mxu0 0.0
      %4454 = vmatprep.subr.mxu0 0.0
      %4455 = vmatpush1.msra.mxu0 0.0
      %4456 = vmatprep.subr.mxu0 0.0
      %4457 = vmatpush1.msra.mxu0 0.0
      %4458 = vmatprep.subr.mxu0 0.0
      %4459 = vmatpush1.msra.mxu0 0.0
      %4460 = vmatprep.subr.mxu0 0.0
      %4461 = vmatpush1.msra.mxu0 0.0
      %4462 = vmatprep.subr.mxu0 0.0
      %4463 = vmatpush1.msra.mxu0 0.0
      %4464 = vmatprep.mubr.f32.mxu0 0.0
      %v4465 = vand.u32 %v2492, 4294901760
      %v4466 = vsub.f32 %v2492, %v4465
      %v4467 = vand.u32 %v4466, 4294901760
      %4468 = vmatmul.mubr.f32.gmra.mrb[0].mxu0 %v4467
      %v4469 = vpop.f32.mrb[0].mxu0
      %v4470 = vadd.f32 %v4384, %v4469
      %v4471 = vpop.f32.mrb[0].mxu0
      %v4472 = vadd.f32 %v4386, %v4471
      %4473 = vmatprep.mubr.f32.mxu0 0.0
      %v4474 = vand.u32 %v2495, 4294901760
      %v4475 = vsub.f32 %v2495, %v4474
      %v4476 = vand.u32 %v4475, 4294901760
      %4477 = vmatmul.mubr.f32.gmra.mrb[0].mxu0 %v4476
      %v4478 = vpop.f32.mrb[0].mxu0
      %v4479 = vadd.f32 %v4392, %v4478
      %v4480 = vpop.f32.mrb[0].mxu0
      %v4481 = vadd.f32 %v4394, %v4480
      %4482 = vdwg.mxu0
      %v4483 = vand.u32 %v2468, 4294901760
      %v4484 = vsub.f32 %v2468, %v4483
      %v4485 = vand.u32 %v4484, 4294901760
      %4486 = vmatprep.subr.mxu0 %v4485
      %v4487 = vand.u32 %v2467, 4294901760
      %v4488 = vsub.f32 %v2467, %v4487
      %v4489 = vand.u32 %v4488, 4294901760
      %4490 = vmatpush1.msra.mxu0 %v4489
      %v4491 = vand.u32 %v2476, 4294901760
      %v4492 = vsub.f32 %v2476, %v4491
      %v4493 = vand.u32 %v4492, 4294901760
      %4494 = vmatprep.subr.mxu0 %v4493
      %v4495 = vand.u32 %v2475, 4294901760
      %v4496 = vsub.f32 %v2475, %v4495
      %v4497 = vand.u32 %v4496, 4294901760
      %4498 = vmatpush1.msra.mxu0 %v4497
      %4499 = vmatprep.subr.mxu0 0.0
      %4500 = vmatpush1.msra.mxu0 0.0
      %4501 = vmatprep.subr.mxu0 0.0
      %4502 = vmatpush1.msra.mxu0 0.0
      %4503 = vmatprep.subr.mxu0 0.0
      %4504 = vmatpush1.msra.mxu0 0.0
      %4505 = vmatprep.subr.mxu0 0.0
      %4506 = vmatpush1.msra.mxu0 0.0
      %4507 = vmatprep.subr.mxu0 0.0
      %4508 = vmatpush1.msra.mxu0 0.0
      %4509 = vmatprep.subr.mxu0 0.0
      %4510 = vmatpush1.msra.mxu0 0.0
      %4511 = vmatprep.subr.mxu0 0.0
      %4512 = vmatpush1.msra.mxu0 0.0
      %4513 = vmatprep.subr.mxu0 0.0
      %4514 = vmatpush1.msra.mxu0 0.0
      %4515 = vmatprep.subr.mxu0 0.0
      %4516 = vmatpush1.msra.mxu0 0.0
      %4517 = vmatprep.subr.mxu0 0.0
      %4518 = vmatpush1.msra.mxu0 0.0
      %4519 = vmatprep.subr.mxu0 0.0
      %4520 = vmatpush1.msra.mxu0 0.0
      %4521 = vmatprep.subr.mxu0 0.0
      %4522 = vmatpush1.msra.mxu0 0.0
      %4523 = vmatprep.subr.mxu0 0.0
      %4524 = vmatpush1.msra.mxu0 0.0
      %4525 = vmatprep.subr.mxu0 0.0
      %4526 = vmatpush1.msra.mxu0 0.0
      %4527 = vmatprep.subr.mxu0 0.0
      %4528 = vmatpush1.msra.mxu0 0.0
      %4529 = vmatprep.subr.mxu0 0.0
      %4530 = vmatpush1.msra.mxu0 0.0
      %4531 = vmatprep.subr.mxu0 0.0
      %4532 = vmatpush1.msra.mxu0 0.0
      %4533 = vmatprep.subr.mxu0 0.0
      %4534 = vmatpush1.msra.mxu0 0.0
      %4535 = vmatprep.subr.mxu0 0.0
      %4536 = vmatpush1.msra.mxu0 0.0
      %4537 = vmatprep.subr.mxu0 0.0
      %4538 = vmatpush1.msra.mxu0 0.0
      %4539 = vmatprep.subr.mxu0 0.0
      %4540 = vmatpush1.msra.mxu0 0.0
      %4541 = vmatprep.subr.mxu0 0.0
      %4542 = vmatpush1.msra.mxu0 0.0
      %4543 = vmatprep.subr.mxu0 0.0
      %4544 = vmatpush1.msra.mxu0 0.0
      %4545 = vmatprep.subr.mxu0 0.0
      %4546 = vmatpush1.msra.mxu0 0.0
      %4547 = vmatprep.subr.mxu0 0.0
      %4548 = vmatpush1.msra.mxu0 0.0
      %4549 = vmatprep.subr.mxu0 0.0
      %4550 = vmatpush1.msra.mxu0 0.0
      %4551 = vmatprep.subr.mxu0 0.0
      %4552 = vmatpush1.msra.mxu0 0.0
      %4553 = vmatprep.subr.mxu0 0.0
      %4554 = vmatpush1.msra.mxu0 0.0
      %4555 = vmatprep.subr.mxu0 0.0
      %4556 = vmatpush1.msra.mxu0 0.0
      %4557 = vmatprep.subr.mxu0 0.0
      %4558 = vmatpush1.msra.mxu0 0.0
      %4559 = vmatprep.mubr.f32.mxu0 0.0
      %v4560 = vand.u32 %v2492, 4294901760
      %4561 = vmatmul.mubr.f32.gmra.mrb[0].mxu0 %v4560
      %v4562 = vpop.f32.mrb[0].mxu0
      %v4563 = vadd.f32 %v4470, %v4562
      %v4564 = vpop.f32.mrb[0].mxu0
      %v4565 = vadd.f32 %v4472, %v4564
      %4566 = vmatprep.mubr.f32.mxu0 0.0
      %v4567 = vand.u32 %v2495, 4294901760
      %4568 = vmatmul.mubr.f32.gmra.mrb[0].mxu0 %v4567
      %v4569 = vpop.f32.mrb[0].mxu0
      %v4570 = vadd.f32 %v4479, %v4569
      %v4571 = vpop.f32.mrb[0].mxu0
      %v4572 = vadd.f32 %v4481, %v4571
      %4573 = vdwg.mxu0
      %v4574 = vand.u32 %v2468, 4294901760
      %4575 = vmatprep.subr.mxu0 %v4574
      %v4576 = vand.u32 %v2467, 4294901760
      %4577 = vmatpush1.msra.mxu0 %v4576
      %v4578 = vand.u32 %v2476, 4294901760
      %4579 = vmatprep.subr.mxu0 %v4578
      %v4580 = vand.u32 %v2475, 4294901760
      %4581 = vmatpush1.msra.mxu0 %v4580
      %4582 = vmatprep.subr.mxu0 0.0
      %4583 = vmatpush1.msra.mxu0 0.0
      %4584 = vmatprep.subr.mxu0 0.0
      %4585 = vmatpush1.msra.mxu0 0.0
      %4586 = vmatprep.subr.mxu0 0.0
      %4587 = vmatpush1.msra.mxu0 0.0
      %4588 = vmatprep.subr.mxu0 0.0
      %4589 = vmatpush1.msra.mxu0 0.0
      %4590 = vmatprep.subr.mxu0 0.0
      %4591 = vmatpush1.msra.mxu0 0.0
      %4592 = vmatprep.subr.mxu0 0.0
      %4593 = vmatpush1.msra.mxu0 0.0
      %4594 = vmatprep.subr.mxu0 0.0
      %4595 = vmatpush1.msra.mxu0 0.0
      %4596 = vmatprep.subr.mxu0 0.0
      %4597 = vmatpush1.msra.mxu0 0.0
      %4598 = vmatprep.subr.mxu0 0.0
      %4599 = vmatpush1.msra.mxu0 0.0
      %4600 = vmatprep.subr.mxu0 0.0
      %4601 = vmatpush1.msra.mxu0 0.0
      %4602 = vmatprep.subr.mxu0 0.0
      %4603 = vmatpush1.msra.mxu0 0.0
      %4604 = vmatprep.subr.mxu0 0.0
      %4605 = vmatpush1.msra.mxu0 0.0
      %4606 = vmatprep.subr.mxu0 0.0
      %4607 = vmatpush1.msra.mxu0 0.0
      %4608 = vmatprep.subr.mxu0 0.0
      %4609 = vmatpush1.msra.mxu0 0.0
      %4610 = vmatprep.subr.mxu0 0.0
      %4611 = vmatpush1.msra.mxu0 0.0
      %4612 = vmatprep.subr.mxu0 0.0
      %4613 = vmatpush1.msra.mxu0 0.0
      %4614 = vmatprep.subr.mxu0 0.0
      %4615 = vmatpush1.msra.mxu0 0.0
      %4616 = vmatprep.subr.mxu0 0.0
      %4617 = vmatpush1.msra.mxu0 0.0
      %4618 = vmatprep.subr.mxu0 0.0
      %4619 = vmatpush1.msra.mxu0 0.0
      %4620 = vmatprep.subr.mxu0 0.0
      %4621 = vmatpush1.msra.mxu0 0.0
      %4622 = vmatprep.subr.mxu0 0.0
      %4623 = vmatpush1.msra.mxu0 0.0
      %4624 = vmatprep.subr.mxu0 0.0
      %4625 = vmatpush1.msra.mxu0 0.0
      %4626 = vmatprep.subr.mxu0 0.0
      %4627 = vmatpush1.msra.mxu0 0.0
      %4628 = vmatprep.subr.mxu0 0.0
      %4629 = vmatpush1.msra.mxu0 0.0
      %4630 = vmatprep.subr.mxu0 0.0
      %4631 = vmatpush1.msra.mxu0 0.0
      %4632 = vmatprep.subr.mxu0 0.0
      %4633 = vmatpush1.msra.mxu0 0.0
      %4634 = vmatprep.subr.mxu0 0.0
      %4635 = vmatpush1.msra.mxu0 0.0
      %4636 = vmatprep.subr.mxu0 0.0
      %4637 = vmatpush1.msra.mxu0 0.0
      %4638 = vmatprep.subr.mxu0 0.0
      %4639 = vmatpush1.msra.mxu0 0.0
      %4640 = vmatprep.subr.mxu0 0.0
      %4641 = vmatpush1.msra.mxu0 0.0
      %4642 = vmatprep.mubr.f32.mxu0 0.0
      %v4643 = vand.u32 %v2492, 4294901760
      %4644 = vmatmul.mubr.f32.gmra.mrb[0].mxu0 %v4643
      %v4645 = vpop.f32.mrb[0].mxu0
      %v4646 = vadd.f32 %v4563, %v4645
      %v4647 = vpop.f32.mrb[0].mxu0
      %v4648 = vadd.f32 %v4565, %v4647
      %4649 = vmatprep.mubr.f32.mxu0 0.0
      %v4650 = vand.u32 %v2495, 4294901760
      %4651 = vmatmul.mubr.f32.gmra.mrb[0].mxu0 %v4650
      %v4652 = vpop.f32.mrb[0].mxu0
      %v4653 = vadd.f32 %v4570, %v4652
      %v4654 = vpop.f32.mrb[0].mxu0
      %v4655 = vadd.f32 %v4572, %v4654
      %4656 = vdwg.mxu0
      %4657 = vst [vmem:[%s262] sm:$0xff] %v3026
      %4658 = vst [vmem:[%s262 + $0x8] sm:$0xff] %v3028
      %4659 = vst [vmem:[%s262 + $0x10] sm:$0xff] %v3566
      %4660 = vst [vmem:[%s262 + $0x18] sm:$0xff] %v3568
      %4661 = vst [vmem:[%s262 + $0x20] sm:$0xff] %v4106
      %4662 = vst [vmem:[%s262 + $0x28] sm:$0xff] %v4108
      %4663 = vst [vmem:[%s262 + $0x30] sm:$0xff] %v4646
      %4664 = vst [vmem:[%s262 + $0x38] sm:$0xff] %v4648
      %4665 = vst [vmem:[%s262 + $0x40] sm:$0xff] %v3033
      %4666 = vst [vmem:[%s262 + $0x48] sm:$0xff] %v3035
      %4667 = vst [vmem:[%s262 + $0x50] sm:$0xff] %v3573
      %4668 = vst [vmem:[%s262 + $0x58] sm:$0xff] %v3575
      %4669 = vst [vmem:[%s262 + $0x60] sm:$0xff] %v4113
      %4670 = vst [vmem:[%s262 + $0x68] sm:$0xff] %v4115
      %4671 = vst [vmem:[%s262 + $0x70] sm:$0xff] %v4653
      %4672 = vst [vmem:[%s262 + $0x78] sm:$0xff] %v4655
      %s4673 = smul.u32 8, %s21
      %p4674 = scmp.lt.s32.totalorder %s20, 1
      %s4675 = scalar_select %p4674, %s20, 1
      %p4676 = scmp.lt.s32.totalorder %s4673, 7
      %s4677 = scalar_select %p4676, %s4673, 7
      %s4678 = smul.addr %s4675, 16
      %s4679 = sadd.s32 %s4677, %s4678
      %s4680 = smul.addr %s4679, 8
      %s4681 = scalar_lea.vmem %s5, %s4680
      // Predicated region
      $region41: #{positionwise_feed_forward.1} parent=39 // pred_check
        %p4682 = pneg %p160
      $region42: #{positionwise_feed_forward.1} parent=39 // pred_check_branch
        %4684 = sbr.rel (%p4682) target = $region44
      $region43: #{positionwise_feed_forward.1} parent=39 // pred_region
        %s4685 = smul.u32 8, %s21
      $region44: #{positionwise_feed_forward.1} parent=39 // pred_fallthru
        _
    $region40: #{positionwise_feed_forward.1} parent=5 // pred_fallthru
      _
    %p4686 = scmp.le.s32.totalorder 2, %s11
    // Predicated region
    $region45: #{positionwise_feed_forward.1} parent=5 // pred_check
      %p4687 = pneg %p4686
    $region46: #{positionwise_feed_forward.1} parent=5 // pred_check_branch
      %4689 = sbr.rel (%p4687) target = $region48
    $region47: #{positionwise_feed_forward.1} parent=5 // pred_region
      %s4690 = ssub.s32 %s11, 2
      // Predicated region
      $region49: #{positionwise_feed_forward.1} parent=47 // pred_check
        %p4691 = pneg %p166
      $region50: #{positionwise_feed_forward.1} parent=47 // pred_check_branch
        %4693 = sbr.rel (%p4691) target = $region52
      $region51: #{positionwise_feed_forward.1} parent=47 // pred_region
        %s4694 = smul.u32 8, %s23
        %p4695 = scmp.lt.s32.totalorder %s22, 1
        %s4696 = scalar_select %p4695, %s22, 1
        %p4697 = scmp.lt.s32.totalorder %s4694, 7
        %s4698 = scalar_select %p4697, %s4694, 7
        %s4699 = smul.addr %s4696, 16
        %s4700 = sadd.s32 %s4698, %s4699
        %s4701 = smul.addr %s4700, 8
        %s4702 = scalar_lea.vmem %s5, %s4701
      $region52: #{positionwise_feed_forward.1} parent=47 // pred_fallthru
        _
    $region48: #{positionwise_feed_forward.1} parent=5 // pred_fallthru
      _
  $region6: #{positionwise_feed_forward.1} parent=0 // loop_footer
    %s15 = sadd.s32 1, %s11
  $region7: #{positionwise_feed_forward.1} parent=0 // loop_footer_branch
    %10 = sbr.rel target = $region3
  $region8: #{positionwise_feed_forward.1} parent=0 // loop_exit
    _

</llo_original>
